<compile_context>
chip_gen: v6e
topology: v6e:2x2x1
jax: 0.10.0
libtpu: 0.0.40
codegen_flags: <defaults>
</compile_context>

<pallas_src>
import functools

import jax
import jax.numpy as jnp
from jax.experimental import pallas as pl
from jax.experimental.pallas import tpu as pltpu


# ----------------------------------------------------------------------------
# Fused transformer layer kernel: one grid step per batch element, all heads
# handled inside a single step (no per-head grid overhead, mask loaded once).
# ----------------------------------------------------------------------------
def _layer_kernel(x_ref, m_ref, wqkv_ref, bqkv_ref, wo_ref, bo_ref,
                  ln1g_ref, ln1b_ref, w1_ref, b1_ref, w2_ref, b2_ref,
                  ln2g_ref, ln2b_ref, o_ref, *, num_heads, eps):
    x = x_ref[0].astype(jnp.float32)          # (S, D)
    mask = m_ref[0].astype(jnp.float32)       # (S, S) additive attention mask
    S, D = x.shape
    Dh = D // num_heads
    scale = 1.0 / float(Dh) ** 0.5

    def layer_norm(z, g, b):
        mu = jnp.mean(z, axis=-1, keepdims=True)
        var = jnp.mean((z - mu) * (z - mu), axis=-1, keepdims=True)
        return (z - mu) * jax.lax.rsqrt(var + eps) * g + b

    # ---- fused QKV projection: single (S, 3D) lane-dense matmul ----
    qkv = jnp.dot(x, wqkv_ref[...].astype(jnp.float32),
                  preferred_element_type=jnp.float32) + bqkv_ref[...]
    q = qkv[:, 0:D]
    k = qkv[:, D:2 * D]
    v = qkv[:, 2 * D:3 * D]

    # ---- multi-head attention (static unroll over heads) ----
    # Per-head outputs are accumulated straight through the Wo projection
    # (o_h @ Wo[h*Dh:(h+1)*Dh, :]), so the head concat never materializes and
    # the running result stays lane-dense at width D.
    wo = wo_ref[...].astype(jnp.float32)
    proj = jnp.broadcast_to(bo_ref[...].astype(jnp.float32), (S, D))
    for h in range(num_heads):
        lo = h * Dh
        hi = lo + Dh
        qh = q[:, lo:hi]
        kh = k[:, lo:hi]
        vh = v[:, lo:hi]
        s = jax.lax.dot_general(qh, kh, (((1,), (1,)), ((), ())),
                                preferred_element_type=jnp.float32)
        s = s * scale + mask
        s = s - jnp.max(s, axis=-1, keepdims=True)
        p = jnp.exp(s)
        denom = jnp.maximum(jnp.sum(p, axis=-1, keepdims=True), 1e-30)
        p = p * pl.reciprocal(denom, approx=True)        # EUP slot, ~free
        oh = jnp.dot(p, vh, preferred_element_type=jnp.float32)      # (S, Dh)
        proj = proj + jnp.dot(oh, wo[lo:hi, :],
                              preferred_element_type=jnp.float32)

    h1 = layer_norm(x + proj, ln1g_ref[...], ln1b_ref[...])

    # ---- feed-forward + residual + LN2, fused in the same kernel ----
    ff = jnp.dot(h1, w1_ref[...].astype(jnp.float32),
                 preferred_element_type=jnp.float32) + b1_ref[...]
    ff = jnp.maximum(ff, 0.0)
    ff = jnp.dot(ff, w2_ref[...].astype(jnp.float32),
                 preferred_element_type=jnp.float32) + b2_ref[...]

    o_ref[0] = layer_norm(h1 + ff, ln2g_ref[...],
                          ln2b_ref[...]).astype(o_ref.dtype)


def transformer_layer(x, mask, layer, num_heads, eps=1e-5):
    B, S, D = x.shape
    F = layer["w1"].shape[1]
    row = lambda a: a.reshape(1, -1)
    return pl.pallas_call(
        functools.partial(_layer_kernel, num_heads=num_heads, eps=eps),
        out_shape=jax.ShapeDtypeStruct((B, S, D), x.dtype),
        grid=(B,),
        in_specs=[
            pl.BlockSpec((1, S, D), lambda b: (b, 0, 0)),     # x
            pl.BlockSpec((1, S, S), lambda b: (b, 0, 0)),     # mask
            pl.BlockSpec((D, 3 * D), lambda b: (0, 0)),       # wqkv (fused)
            pl.BlockSpec((1, 3 * D), lambda b: (0, 0)),       # bqkv
            pl.BlockSpec((D, D), lambda b: (0, 0)),           # wo
            pl.BlockSpec((1, D), lambda b: (0, 0)),           # bo
            pl.BlockSpec((1, D), lambda b: (0, 0)),           # ln1_g
            pl.BlockSpec((1, D), lambda b: (0, 0)),           # ln1_b
            pl.BlockSpec((D, F), lambda b: (0, 0)),           # w1
            pl.BlockSpec((1, F), lambda b: (0, 0)),           # b1
            pl.BlockSpec((F, D), lambda b: (0, 0)),           # w2
            pl.BlockSpec((1, D), lambda b: (0, 0)),           # b2
            pl.BlockSpec((1, D), lambda b: (0, 0)),           # ln2_g
            pl.BlockSpec((1, D), lambda b: (0, 0)),           # ln2_b
        ],
        out_specs=pl.BlockSpec((1, S, D), lambda b: (b, 0, 0)),
        compiler_params=pltpu.CompilerParams(
            dimension_semantics=("parallel",)),               # v7x: 2 TCs
    )(x, mask,
      layer["wqkv"], row(layer["bqkv"]), layer["wo"], row(layer["bo"]),
      row(layer["ln1_g"]), row(layer["ln1_b"]),
      layer["w1"], row(layer["b1"]), layer["w2"], row(layer["b2"]),
      row(layer["ln2_g"]), row(layer["ln2_b"]))


# ----------------------------------------------------------------------------
# Tiled dense (final vocab projection): M/N parallel, K reduction with an
# f32 VMEM accumulator.  Scales to large vocab / d_ff without blowing VMEM.
# ----------------------------------------------------------------------------
def _dense_kernel(x_ref, w_ref, b_ref, o_ref, acc_ref):
    @pl.when(pl.program_id(2) == 0)
    def _():
        acc_ref[...] = jnp.broadcast_to(b_ref[...].astype(jnp.float32),
                                        acc_ref.shape)

    acc_ref[...] += jnp.dot(x_ref[...].astype(jnp.float32),
                            w_ref[...].astype(jnp.float32),
                            preferred_element_type=jnp.float32)

    @pl.when(pl.program_id(2) == pl.num_programs(2) - 1)
    def _():
        o_ref[...] = acc_ref[...].astype(o_ref.dtype)


def dense(x, w, b, *, bm=128, bn=512, bk=512):
    M, K = x.shape
    N = w.shape[1]
    bm = min(bm, M)
    bn = min(bn, N)
    bk = min(bk, K)
    # Keep >= 2 M-blocks when possible so both v7x TensorCores get work.
    if M % 16 == 0 and bm > M // 2:
        bm = M // 2
    grid = (pl.cdiv(M, bm), pl.cdiv(N, bn), pl.cdiv(K, bk))
    return pl.pallas_call(
        _dense_kernel,
        out_shape=jax.ShapeDtypeStruct((M, N), x.dtype),
        grid=grid,
        in_specs=[
            pl.BlockSpec((bm, bk), lambda i, j, k: (i, k)),
            pl.BlockSpec((bk, bn), lambda i, j, k: (k, j)),
            pl.BlockSpec((1, bn), lambda i, j, k: (0, j)),
        ],
        out_specs=pl.BlockSpec((bm, bn), lambda i, j, k: (i, j)),
        scratch_shapes=[pltpu.VMEM((bm, bn), jnp.float32)],
        compiler_params=pltpu.CompilerParams(
            dimension_semantics=("parallel", "parallel", "arbitrary")),
    )(x, w, b.reshape(1, N))


# ----------------------------------------------------------------------------
# Model (embedding gathers in glue, everything else in Pallas kernels).
# ----------------------------------------------------------------------------
def init_params(key, vocab_size, d_model, d_ff, num_layers, num_heads, max_pos):
    keys = jax.random.split(key, 4 + num_layers)

    def normal(k, shape, scale=0.02):
        return (scale * jax.random.normal(k, shape)).astype(jnp.float32)

    params = {
        "embedding": normal(keys[0], (vocab_size, d_model)),
        "pos_embedding": normal(keys[1], (max_pos, d_model)),
        "fc_w": normal(keys[2], (d_model, vocab_size)),
        "fc_b": jnp.zeros((vocab_size,), jnp.float32),
        "layers": [],
    }
    for li in range(num_layers):
        lk = jax.random.split(keys[4 + li], 4)
        layer = {
            "wqkv": normal(lk[0], (d_model, 3 * d_model)),   # fused q|k|v
            "bqkv": jnp.zeros((3 * d_model,), jnp.float32),
            "wo": normal(lk[1], (d_model, d_model)),
            "bo": jnp.zeros((d_model,), jnp.float32),
            "w1": normal(lk[2], (d_model, d_ff)),
            "b1": jnp.zeros((d_ff,), jnp.float32),
            "w2": normal(lk[3], (d_ff, d_model)),
            "b2": jnp.zeros((d_model,), jnp.float32),
            "ln1_g": jnp.ones((d_model,), jnp.float32),
            "ln1_b": jnp.zeros((d_model,), jnp.float32),
            "ln2_g": jnp.ones((d_model,), jnp.float32),
            "ln2_b": jnp.zeros((d_model,), jnp.float32),
        }
        params["layers"].append(layer)
    return params


def transformer_xl_forward(params, inputs, input_positions, input_masks,
                           num_heads):
    B, S = inputs.shape
    D = params["embedding"].shape[1]
    max_pos = params["pos_embedding"].shape[0]

    # Embedding + learned positional embedding gather (glue).
    pos = jnp.clip(input_positions, 0, max_pos - 1)
    x = jnp.take(params["embedding"], inputs, axis=0)                 # (B,S,D)
    x = x + jnp.take(params["pos_embedding"], pos, axis=0)
    x = x.astype(jnp.float32)

    mask = input_masks.astype(jnp.float32)
    for layer in params["layers"]:
        x = transformer_layer(x, mask, layer, num_heads)

    logits = dense(x.reshape(B * S, D), params["fc_w"], params["fc_b"])
    return logits.reshape(B, S, -1)


# ----------------------------------------------------------------------------
if __name__ == "__main__":
    # Small, TPU-friendly shapes consistent with the module's forward.
    # d_model is kept a multiple of 128 so every stored last dim is lane-dense.
    vocab_size = 128
    embedding_dim = 128
    hidden_dim = 128
    num_heads = 4
    num_layers = 2
    batch = 2
    seq_len = 16
    max_pos = 64

    key = jax.random.PRNGKey(0)
    pkey, ikey = jax.random.split(key)

    params = init_params(pkey, vocab_size, embedding_dim, hidden_dim,
                         num_layers, num_heads, max_pos)

    inputs = jax.random.randint(ikey, (batch, seq_len), 0, vocab_size,
                                dtype=jnp.int32)
    input_positions = jnp.broadcast_to(
        jnp.arange(seq_len, dtype=jnp.int32)[None, :], (batch, seq_len))
    # Additive causal attention mask, (B, S, S): 0 where attended, -1e9 else.
    causal = jnp.tril(jnp.ones((seq_len, seq_len), jnp.float32))
    input_masks = jnp.broadcast_to(
        jnp.where(causal > 0, 0.0, -1e9)[None, :, :],
        (batch, seq_len, seq_len)).astype(jnp.float32)

    fwd = jax.jit(functools.partial(transformer_xl_forward,
                                    num_heads=num_heads))
    out = fwd(params, inputs, input_positions, input_masks)
    out = jax.block_until_ready(out)

    assert out.shape == (batch, seq_len, vocab_size), out.shape
    assert jnp.all(jnp.isfinite(out))
    print("KERNEL_OK")
</pallas_src>

<mosaic_0001>
module attributes {stable_mosaic.version = 11 : i64} {
  func.func @_dense_kernel(%arg0: i32, %arg1: i32, %arg2: i32, %arg3: memref<16x128xf32, #tpu.memory_space<vmem>>, %arg4: memref<128x128xf32, #tpu.memory_space<vmem>>, %arg5: memref<1x128xf32, #tpu.memory_space<vmem>>, %arg6: memref<16x128xf32, #tpu.memory_space<vmem>>, %arg7: memref<16x128xf32, #tpu.memory_space<vmem>>) attributes {dimension_semantics = [#tpu.dimension_semantics<parallel>, #tpu.dimension_semantics<parallel>, #tpu.dimension_semantics<arbitrary>], iteration_bounds = array<i64: 2, 1, 1>, scalar_prefetch = 0 : i64, scratch_operands = 1 : i64, tpu.core_type = #tpu.core_type<tc>, window_params = [{transform_indices = @transform_0, window_bounds = array<i64: 16, 128>}, {transform_indices = @transform_1, window_bounds = array<i64: 128, 128>}, {transform_indices = @transform_2, window_bounds = array<i64: 1, 128>}, {transform_indices = @transform_3, window_bounds = array<i64: 16, 128>}]} {
    %c0_i32 = arith.constant 0 : i32
    %0 = arith.cmpi eq, %arg2, %c0_i32 : i32
    %1 = arith.extui %0 : i1 to i32
    %c0_i32_0 = arith.constant 0 : i32
    %2 = arith.cmpi ne, %1, %c0_i32_0 : i32
    scf.if %2 {
      %c0_10 = arith.constant 0 : index
      %c0_11 = arith.constant 0 : index
      %12 = vector.load %arg5[%c0_10, %c0_11] : memref<1x128xf32, #tpu.memory_space<vmem>>, vector<1x128xf32>
      %13 = vector.shape_cast %12 : vector<1x128xf32> to vector<1x128xf32>
      %14 = vector.broadcast %13 : vector<1x128xf32> to vector<16x128xf32>
      %c0_12 = arith.constant 0 : index
      %c0_13 = arith.constant 0 : index
      %15 = vector.load %arg7[%c0_12, %c0_13] : memref<16x128xf32, #tpu.memory_space<vmem>>, vector<16x128xf32>
      tpu.vector_store %arg7[%c0_12, %c0_13], %14 {strides = array<i32>} : memref<16x128xf32, #tpu.memory_space<vmem>>, vector<16x128xf32>,
    } else {
    }
    %c0 = arith.constant 0 : index
    %c0_1 = arith.constant 0 : index
    %3 = vector.load %arg7[%c0, %c0_1] : memref<16x128xf32, #tpu.memory_space<vmem>>, vector<16x128xf32>
    %c0_2 = arith.constant 0 : index
    %c0_3 = arith.constant 0 : index
    %4 = vector.load %arg3[%c0_2, %c0_3] : memref<16x128xf32, #tpu.memory_space<vmem>>, vector<16x128xf32>
    %c0_4 = arith.constant 0 : index
    %c0_5 = arith.constant 0 : index
    %5 = vector.load %arg4[%c0_4, %c0_5] : memref<128x128xf32, #tpu.memory_space<vmem>>, vector<128x128xf32>
    %cst = arith.constant dense<0.000000e+00> : vector<16x128xf32>
    %6 = tpu.matmul %4, %5, %cst {dimension_numbers = #tpu.dot_dimension_numbers<[1], [0], [0], [1], [0, 0, 1, 1], [], []>} : vector<16x128xf32>, vector<128x128xf32>, vector<16x128xf32> -> vector<16x128xf32>
    %7 = arith.addf %3, %6 : vector<16x128xf32>
    %c0_6 = arith.constant 0 : index
    %c0_7 = arith.constant 0 : index
    %8 = vector.load %arg7[%c0_6, %c0_7] : memref<16x128xf32, #tpu.memory_space<vmem>>, vector<16x128xf32>
    tpu.vector_store %arg7[%c0_6, %c0_7], %7 {strides = array<i32>} : memref<16x128xf32, #tpu.memory_space<vmem>>, vector<16x128xf32>,
    %c0_i32_8 = arith.constant 0 : i32
    %9 = arith.cmpi eq, %arg2, %c0_i32_8 : i32
    %10 = arith.extui %9 : i1 to i32
    %c0_i32_9 = arith.constant 0 : i32
    %11 = arith.cmpi ne, %10, %c0_i32_9 : i32
    scf.if %11 {
      %c0_10 = arith.constant 0 : index
      %c0_11 = arith.constant 0 : index
      %12 = vector.load %arg7[%c0_10, %c0_11] : memref<16x128xf32, #tpu.memory_space<vmem>>, vector<16x128xf32>
      %c0_12 = arith.constant 0 : index
      %c0_13 = arith.constant 0 : index
      %13 = vector.load %arg6[%c0_12, %c0_13] : memref<16x128xf32, #tpu.memory_space<vmem>>, vector<16x128xf32>
      tpu.vector_store %arg6[%c0_12, %c0_13], %12 {strides = array<i32>} : memref<16x128xf32, #tpu.memory_space<vmem>>, vector<16x128xf32>,
    } else {
    }
    return
  }
  func.func @transform_0(%arg0: i32, %arg1: i32, %arg2: i32) -> (i32, i32) {
    %c0_i32 = arith.constant 0 : i32
    return %arg0, %arg2 : i32, i32
  }
  func.func @transform_1(%arg0: i32, %arg1: i32, %arg2: i32) -> (i32, i32) {
    %c0_i32 = arith.constant 0 : i32
    return %arg2, %arg1 : i32, i32
  }
  func.func @transform_2(%arg0: i32, %arg1: i32, %arg2: i32) -> (i32, i32) {
    %c0_i32 = arith.constant 0 : i32
    %c0_i32_0 = arith.constant 0 : i32
    return %c0_i32, %arg1 : i32, i32
  }
  func.func @transform_3(%arg0: i32, %arg1: i32, %arg2: i32) -> (i32, i32) {
    %c0_i32 = arith.constant 0 : i32
    return %arg0, %arg1 : i32, i32
  }
}

module attributes {stable_mosaic.version = 11 : i64} {
  func.func @_layer_kernel(%arg0: i32, %arg1: memref<1x16x128xf32, #tpu.memory_space<vmem>>, %arg2: memref<1x16x16xf32, #tpu.memory_space<vmem>>, %arg3: memref<128x384xf32, #tpu.memory_space<vmem>>, %arg4: memref<1x384xf32, #tpu.memory_space<vmem>>, %arg5: memref<128x128xf32, #tpu.memory_space<vmem>>, %arg6: memref<1x128xf32, #tpu.memory_space<vmem>>, %arg7: memref<1x128xf32, #tpu.memory_space<vmem>>, %arg8: memref<1x128xf32, #tpu.memory_space<vmem>>, %arg9: memref<128x128xf32, #tpu.memory_space<vmem>>, %arg10: memref<1x128xf32, #tpu.memory_space<vmem>>, %arg11: memref<128x128xf32, #tpu.memory_space<vmem>>, %arg12: memref<1x128xf32, #tpu.memory_space<vmem>>, %arg13: memref<1x128xf32, #tpu.memory_space<vmem>>, %arg14: memref<1x128xf32, #tpu.memory_space<vmem>>, %arg15: memref<1x16x128xf32, #tpu.memory_space<vmem>>) attributes {dimension_semantics = [#tpu.dimension_semantics<parallel>], iteration_bounds = array<i64: 2>, scalar_prefetch = 0 : i64, scratch_operands = 0 : i64, tpu.core_type = #tpu.core_type<tc>, window_params = [{transform_indices = @transform_0, window_bounds = array<i64: 1, 16, 128>}, {transform_indices = @transform_1, window_bounds = array<i64: 1, 16, 16>}, {pipeline_mode = #tpu.pipeline_mode<synchronous>, transform_indices = @transform_2, window_bounds = array<i64: 128, 384>}, {pipeline_mode = #tpu.pipeline_mode<synchronous>, transform_indices = @transform_3, window_bounds = array<i64: 1, 384>}, {pipeline_mode = #tpu.pipeline_mode<synchronous>, transform_indices = @transform_4, window_bounds = array<i64: 128, 128>}, {pipeline_mode = #tpu.pipeline_mode<synchronous>, transform_indices = @transform_5, window_bounds = array<i64: 1, 128>}, {pipeline_mode = #tpu.pipeline_mode<synchronous>, transform_indices = @transform_6, window_bounds = array<i64: 1, 128>}, {pipeline_mode = #tpu.pipeline_mode<synchronous>, transform_indices = @transform_7, window_bounds = array<i64: 1, 128>}, {pipeline_mode = #tpu.pipeline_mode<synchronous>, transform_indices = @transform_8, window_bounds = array<i64: 128, 128>}, {pipeline_mode = #tpu.pipeline_mode<synchronous>, transform_indices = @transform_9, window_bounds = array<i64: 1, 128>}, {pipeline_mode = #tpu.pipeline_mode<synchronous>, transform_indices = @transform_10, window_bounds = array<i64: 128, 128>}, {pipeline_mode = #tpu.pipeline_mode<synchronous>, transform_indices = @transform_11, window_bounds = array<i64: 1, 128>}, {pipeline_mode = #tpu.pipeline_mode<synchronous>, transform_indices = @transform_12, window_bounds = array<i64: 1, 128>}, {pipeline_mode = #tpu.pipeline_mode<synchronous>, transform_indices = @transform_13, window_bounds = array<i64: 1, 128>}, {transform_indices = @transform_14, window_bounds = array<i64: 1, 16, 128>}]} {
    %c0 = arith.constant 0 : index
    %c0_0 = arith.constant 0 : index
    %c0_1 = arith.constant 0 : index
    %0 = vector.load %arg1[%c0, %c0_0, %c0_1] : memref<1x16x128xf32, #tpu.memory_space<vmem>>, vector<1x16x128xf32>
    %1 = vector.shape_cast %0 : vector<1x16x128xf32> to vector<16x128xf32>
    %c0_2 = arith.constant 0 : index
    %c0_3 = arith.constant 0 : index
    %c0_4 = arith.constant 0 : index
    %2 = vector.load %arg2[%c0_2, %c0_3, %c0_4] : memref<1x16x16xf32, #tpu.memory_space<vmem>>, vector<1x16x16xf32>
    %3 = vector.shape_cast %2 : vector<1x16x16xf32> to vector<16x16xf32>
    %c0_5 = arith.constant 0 : index
    %c0_6 = arith.constant 0 : index
    %4 = vector.load %arg3[%c0_5, %c0_6] : memref<128x384xf32, #tpu.memory_space<vmem>>, vector<128x384xf32>
    %cst = arith.constant dense<0.000000e+00> : vector<16x384xf32>
    %5 = tpu.matmul %1, %4, %cst {dimension_numbers = #tpu.dot_dimension_numbers<[1], [0], [0], [1], [0, 0, 1, 1], [], []>} : vector<16x128xf32>, vector<128x384xf32>, vector<16x384xf32> -> vector<16x384xf32>
    %c0_7 = arith.constant 0 : index
    %c0_8 = arith.constant 0 : index
    %6 = vector.load %arg4[%c0_7, %c0_8] : memref<1x384xf32, #tpu.memory_space<vmem>>, vector<1x384xf32>
    %7 = vector.broadcast %6 : vector<1x384xf32> to vector<16x384xf32>
    %8 = arith.addf %5, %7 : vector<16x384xf32>
    %9 = vector.extract_strided_slice %8 {offsets = [0, 0], sizes = [16, 128], strides = [1, 1]} : vector<16x384xf32> to vector<16x128xf32>
    %10 = vector.extract_strided_slice %8 {offsets = [0, 128], sizes = [16, 128], strides = [1, 1]} : vector<16x384xf32> to vector<16x128xf32>
    %11 = vector.extract_strided_slice %8 {offsets = [0, 256], sizes = [16, 128], strides = [1, 1]} : vector<16x384xf32> to vector<16x128xf32>
    %c0_9 = arith.constant 0 : index
    %c0_10 = arith.constant 0 : index
    %12 = vector.load %arg5[%c0_9, %c0_10] : memref<128x128xf32, #tpu.memory_space<vmem>>, vector<128x128xf32>
    %c0_11 = arith.constant 0 : index
    %c0_12 = arith.constant 0 : index
    %13 = vector.load %arg6[%c0_11, %c0_12] : memref<1x128xf32, #tpu.memory_space<vmem>>, vector<1x128xf32>
    %14 = vector.shape_cast %13 : vector<1x128xf32> to vector<1x128xf32>
    %15 = vector.broadcast %14 : vector<1x128xf32> to vector<16x128xf32>
    %16 = vector.extract_strided_slice %9 {offsets = [0, 0], sizes = [16, 32], strides = [1, 1]} : vector<16x128xf32> to vector<16x32xf32>
    %17 = vector.extract_strided_slice %10 {offsets = [0, 0], sizes = [16, 32], strides = [1, 1]} : vector<16x128xf32> to vector<16x32xf32>
    %18 = vector.extract_strided_slice %11 {offsets = [0, 0], sizes = [16, 32], strides = [1, 1]} : vector<16x128xf32> to vector<16x32xf32>
    %cst_13 = arith.constant dense<0.000000e+00> : vector<16x16xf32>
    %19 = tpu.matmul %16, %17, %cst_13 {dimension_numbers = #tpu.dot_dimension_numbers<[1], [1], [0], [0], [0, 0, 1, 0], [], []>} : vector<16x32xf32>, vector<16x32xf32>, vector<16x16xf32> -> vector<16x16xf32>
    %cst_14 = arith.constant 0.176776692 : f32
    %20 = vector.broadcast %cst_14 : f32 to vector<16x16xf32>
    %21 = arith.mulf %19, %20 : vector<16x16xf32>
    %22 = arith.addf %21, %3 : vector<16x16xf32>
    %cst_15 = arith.constant dense<0xFF800000> : vector<16xf32>
    %23 = vector.multi_reduction <maximumf>, %22, %cst_15 [1] : vector<16x16xf32> to vector<16xf32>
    %24 = vector.shape_cast %23 : vector<16xf32> to vector<16x1xf32>
    %25 = vector.broadcast %24 : vector<16x1xf32> to vector<16x16xf32>
    %26 = arith.subf %22, %25 : vector<16x16xf32>
    %27 = math.exp %26 : vector<16x16xf32>
    %cst_16 = arith.constant dense<0.000000e+00> : vector<16xf32>
    %28 = vector.multi_reduction <add>, %27, %cst_16 [1] : vector<16x16xf32> to vector<16xf32>
    %29 = vector.shape_cast %28 : vector<16xf32> to vector<16x1xf32>
    %cst_17 = arith.constant 1.000000e-30 : f32
    %30 = vector.broadcast %cst_17 : f32 to vector<16x1xf32>
    %31 = arith.maximumf %29, %30 : vector<16x1xf32>
    %32 = tpu.reciprocal %31 {approx = true} : vector<16x1xf32> -> vector<16x1xf32>
    %33 = vector.broadcast %32 : vector<16x1xf32> to vector<16x16xf32>
    %34 = arith.mulf %27, %33 : vector<16x16xf32>
    %cst_18 = arith.constant dense<0.000000e+00> : vector<16x32xf32>
    %35 = tpu.matmul %34, %18, %cst_18 {dimension_numbers = #tpu.dot_dimension_numbers<[1], [0], [0], [1], [0, 0, 1, 1], [], []>} : vector<16x16xf32>, vector<16x32xf32>, vector<16x32xf32> -> vector<16x32xf32>
    %36 = vector.extract_strided_slice %12 {offsets = [0, 0], sizes = [32, 128], strides = [1, 1]} : vector<128x128xf32> to vector<32x128xf32>
    %cst_19 = arith.constant dense<0.000000e+00> : vector<16x128xf32>
    %37 = tpu.matmul %35, %36, %cst_19 {dimension_numbers = #tpu.dot_dimension_numbers<[1], [0], [0], [1], [0, 0, 1, 1], [], []>} : vector<16x32xf32>, vector<32x128xf32>, vector<16x128xf32> -> vector<16x128xf32>
    %38 = arith.addf %15, %37 : vector<16x128xf32>
    %39 = vector.extract_strided_slice %9 {offsets = [0, 32], sizes = [16, 32], strides = [1, 1]} : vector<16x128xf32> to vector<16x32xf32>
    %40 = vector.extract_strided_slice %10 {offsets = [0, 32], sizes = [16, 32], strides = [1, 1]} : vector<16x128xf32> to vector<16x32xf32>
    %41 = vector.extract_strided_slice %11 {offsets = [0, 32], sizes = [16, 32], strides = [1, 1]} : vector<16x128xf32> to vector<16x32xf32>
    %cst_20 = arith.constant dense<0.000000e+00> : vector<16x16xf32>
    %42 = tpu.matmul %39, %40, %cst_20 {dimension_numbers = #tpu.dot_dimension_numbers<[1], [1], [0], [0], [0, 0, 1, 0], [], []>} : vector<16x32xf32>, vector<16x32xf32>, vector<16x16xf32> -> vector<16x16xf32>
    %cst_21 = arith.constant 0.176776692 : f32
    %43 = vector.broadcast %cst_21 : f32 to vector<16x16xf32>
    %44 = arith.mulf %42, %43 : vector<16x16xf32>
    %45 = arith.addf %44, %3 : vector<16x16xf32>
    %cst_22 = arith.constant dense<0xFF800000> : vector<16xf32>
    %46 = vector.multi_reduction <maximumf>, %45, %cst_22 [1] : vector<16x16xf32> to vector<16xf32>
    %47 = vector.shape_cast %46 : vector<16xf32> to vector<16x1xf32>
    %48 = vector.broadcast %47 : vector<16x1xf32> to vector<16x16xf32>
    %49 = arith.subf %45, %48 : vector<16x16xf32>
    %50 = math.exp %49 : vector<16x16xf32>
    %cst_23 = arith.constant dense<0.000000e+00> : vector<16xf32>
    %51 = vector.multi_reduction <add>, %50, %cst_23 [1] : vector<16x16xf32> to vector<16xf32>
    %52 = vector.shape_cast %51 : vector<16xf32> to vector<16x1xf32>
    %cst_24 = arith.constant 1.000000e-30 : f32
    %53 = vector.broadcast %cst_24 : f32 to vector<16x1xf32>
    %54 = arith.maximumf %52, %53 : vector<16x1xf32>
    %55 = tpu.reciprocal %54 {approx = true} : vector<16x1xf32> -> vector<16x1xf32>
    %56 = vector.broadcast %55 : vector<16x1xf32> to vector<16x16xf32>
    %57 = arith.mulf %50, %56 : vector<16x16xf32>
    %cst_25 = arith.constant dense<0.000000e+00> : vector<16x32xf32>
    %58 = tpu.matmul %57, %41, %cst_25 {dimension_numbers = #tpu.dot_dimension_numbers<[1], [0], [0], [1], [0, 0, 1, 1], [], []>} : vector<16x16xf32>, vector<16x32xf32>, vector<16x32xf32> -> vector<16x32xf32>
    %59 = vector.extract_strided_slice %12 {offsets = [32, 0], sizes = [32, 128], strides = [1, 1]} : vector<128x128xf32> to vector<32x128xf32>
    %cst_26 = arith.constant dense<0.000000e+00> : vector<16x128xf32>
    %60 = tpu.matmul %58, %59, %cst_26 {dimension_numbers = #tpu.dot_dimension_numbers<[1], [0], [0], [1], [0, 0, 1, 1], [], []>} : vector<16x32xf32>, vector<32x128xf32>, vector<16x128xf32> -> vector<16x128xf32>
    %61 = arith.addf %38, %60 : vector<16x128xf32>
    %62 = vector.extract_strided_slice %9 {offsets = [0, 64], sizes = [16, 32], strides = [1, 1]} : vector<16x128xf32> to vector<16x32xf32>
    %63 = vector.extract_strided_slice %10 {offsets = [0, 64], sizes = [16, 32], strides = [1, 1]} : vector<16x128xf32> to vector<16x32xf32>
    %64 = vector.extract_strided_slice %11 {offsets = [0, 64], sizes = [16, 32], strides = [1, 1]} : vector<16x128xf32> to vector<16x32xf32>
    %cst_27 = arith.constant dense<0.000000e+00> : vector<16x16xf32>
    %65 = tpu.matmul %62, %63, %cst_27 {dimension_numbers = #tpu.dot_dimension_numbers<[1], [1], [0], [0], [0, 0, 1, 0], [], []>} : vector<16x32xf32>, vector<16x32xf32>, vector<16x16xf32> -> vector<16x16xf32>
    %cst_28 = arith.constant 0.176776692 : f32
    %66 = vector.broadcast %cst_28 : f32 to vector<16x16xf32>
    %67 = arith.mulf %65, %66 : vector<16x16xf32>
    %68 = arith.addf %67, %3 : vector<16x16xf32>
    %cst_29 = arith.constant dense<0xFF800000> : vector<16xf32>
    %69 = vector.multi_reduction <maximumf>, %68, %cst_29 [1] : vector<16x16xf32> to vector<16xf32>
    %70 = vector.shape_cast %69 : vector<16xf32> to vector<16x1xf32>
    %71 = vector.broadcast %70 : vector<16x1xf32> to vector<16x16xf32>
    %72 = arith.subf %68, %71 : vector<16x16xf32>
    %73 = math.exp %72 : vector<16x16xf32>
    %cst_30 = arith.constant dense<0.000000e+00> : vector<16xf32>
    %74 = vector.multi_reduction <add>, %73, %cst_30 [1] : vector<16x16xf32> to vector<16xf32>
    %75 = vector.shape_cast %74 : vector<16xf32> to vector<16x1xf32>
    %cst_31 = arith.constant 1.000000e-30 : f32
    %76 = vector.broadcast %cst_31 : f32 to vector<16x1xf32>
    %77 = arith.maximumf %75, %76 : vector<16x1xf32>
    %78 = tpu.reciprocal %77 {approx = true} : vector<16x1xf32> -> vector<16x1xf32>
    %79 = vector.broadcast %78 : vector<16x1xf32> to vector<16x16xf32>
    %80 = arith.mulf %73, %79 : vector<16x16xf32>
    %cst_32 = arith.constant dense<0.000000e+00> : vector<16x32xf32>
    %81 = tpu.matmul %80, %64, %cst_32 {dimension_numbers = #tpu.dot_dimension_numbers<[1], [0], [0], [1], [0, 0, 1, 1], [], []>} : vector<16x16xf32>, vector<16x32xf32>, vector<16x32xf32> -> vector<16x32xf32>
    %82 = vector.extract_strided_slice %12 {offsets = [64, 0], sizes = [32, 128], strides = [1, 1]} : vector<128x128xf32> to vector<32x128xf32>
    %cst_33 = arith.constant dense<0.000000e+00> : vector<16x128xf32>
    %83 = tpu.matmul %81, %82, %cst_33 {dimension_numbers = #tpu.dot_dimension_numbers<[1], [0], [0], [1], [0, 0, 1, 1], [], []>} : vector<16x32xf32>, vector<32x128xf32>, vector<16x128xf32> -> vector<16x128xf32>
    %84 = arith.addf %61, %83 : vector<16x128xf32>
    %85 = vector.extract_strided_slice %9 {offsets = [0, 96], sizes = [16, 32], strides = [1, 1]} : vector<16x128xf32> to vector<16x32xf32>
    %86 = vector.extract_strided_slice %10 {offsets = [0, 96], sizes = [16, 32], strides = [1, 1]} : vector<16x128xf32> to vector<16x32xf32>
    %87 = vector.extract_strided_slice %11 {offsets = [0, 96], sizes = [16, 32], strides = [1, 1]} : vector<16x128xf32> to vector<16x32xf32>
    %cst_34 = arith.constant dense<0.000000e+00> : vector<16x16xf32>
    %88 = tpu.matmul %85, %86, %cst_34 {dimension_numbers = #tpu.dot_dimension_numbers<[1], [1], [0], [0], [0, 0, 1, 0], [], []>} : vector<16x32xf32>, vector<16x32xf32>, vector<16x16xf32> -> vector<16x16xf32>
    %cst_35 = arith.constant 0.176776692 : f32
    %89 = vector.broadcast %cst_35 : f32 to vector<16x16xf32>
    %90 = arith.mulf %88, %89 : vector<16x16xf32>
    %91 = arith.addf %90, %3 : vector<16x16xf32>
    %cst_36 = arith.constant dense<0xFF800000> : vector<16xf32>
    %92 = vector.multi_reduction <maximumf>, %91, %cst_36 [1] : vector<16x16xf32> to vector<16xf32>
    %93 = vector.shape_cast %92 : vector<16xf32> to vector<16x1xf32>
    %94 = vector.broadcast %93 : vector<16x1xf32> to vector<16x16xf32>
    %95 = arith.subf %91, %94 : vector<16x16xf32>
    %96 = math.exp %95 : vector<16x16xf32>
    %cst_37 = arith.constant dense<0.000000e+00> : vector<16xf32>
    %97 = vector.multi_reduction <add>, %96, %cst_37 [1] : vector<16x16xf32> to vector<16xf32>
    %98 = vector.shape_cast %97 : vector<16xf32> to vector<16x1xf32>
    %cst_38 = arith.constant 1.000000e-30 : f32
    %99 = vector.broadcast %cst_38 : f32 to vector<16x1xf32>
    %100 = arith.maximumf %98, %99 : vector<16x1xf32>
    %101 = tpu.reciprocal %100 {approx = true} : vector<16x1xf32> -> vector<16x1xf32>
    %102 = vector.broadcast %101 : vector<16x1xf32> to vector<16x16xf32>
    %103 = arith.mulf %96, %102 : vector<16x16xf32>
    %cst_39 = arith.constant dense<0.000000e+00> : vector<16x32xf32>
    %104 = tpu.matmul %103, %87, %cst_39 {dimension_numbers = #tpu.dot_dimension_numbers<[1], [0], [0], [1], [0, 0, 1, 1], [], []>} : vector<16x16xf32>, vector<16x32xf32>, vector<16x32xf32> -> vector<16x32xf32>
    %105 = vector.extract_strided_slice %12 {offsets = [96, 0], sizes = [32, 128], strides = [1, 1]} : vector<128x128xf32> to vector<32x128xf32>
    %cst_40 = arith.constant dense<0.000000e+00> : vector<16x128xf32>
    %106 = tpu.matmul %104, %105, %cst_40 {dimension_numbers = #tpu.dot_dimension_numbers<[1], [0], [0], [1], [0, 0, 1, 1], [], []>} : vector<16x32xf32>, vector<32x128xf32>, vector<16x128xf32> -> vector<16x128xf32>
    %107 = arith.addf %84, %106 : vector<16x128xf32>
    %108 = arith.addf %1, %107 : vector<16x128xf32>
    %c0_41 = arith.constant 0 : index
    %c0_42 = arith.constant 0 : index
    %109 = vector.load %arg7[%c0_41, %c0_42] : memref<1x128xf32, #tpu.memory_space<vmem>>, vector<1x128xf32>
    %c0_43 = arith.constant 0 : index
    %c0_44 = arith.constant 0 : index
    %110 = vector.load %arg8[%c0_43, %c0_44] : memref<1x128xf32, #tpu.memory_space<vmem>>, vector<1x128xf32>
    %cst_45 = arith.constant dense<0.000000e+00> : vector<16xf32>
    %111 = vector.multi_reduction <add>, %108, %cst_45 [1] : vector<16x128xf32> to vector<16xf32>
    %112 = vector.shape_cast %111 : vector<16xf32> to vector<16x1xf32>
    %cst_46 = arith.constant 1.280000e+02 : f32
    %113 = vector.broadcast %cst_46 : f32 to vector<16x1xf32>
    %114 = arith.divf %112, %113 : vector<16x1xf32>
    %115 = vector.broadcast %114 : vector<16x1xf32> to vector<16x128xf32>
    %116 = arith.subf %108, %115 : vector<16x128xf32>
    %117 = vector.broadcast %114 : vector<16x1xf32> to vector<16x128xf32>
    %118 = arith.subf %108, %117 : vector<16x128xf32>
    %119 = arith.mulf %116, %118 : vector<16x128xf32>
    %cst_47 = arith.constant dense<0.000000e+00> : vector<16xf32>
    %120 = vector.multi_reduction <add>, %119, %cst_47 [1] : vector<16x128xf32> to vector<16xf32>
    %121 = vector.shape_cast %120 : vector<16xf32> to vector<16x1xf32>
    %cst_48 = arith.constant 1.280000e+02 : f32
    %122 = vector.broadcast %cst_48 : f32 to vector<16x1xf32>
    %123 = arith.divf %121, %122 : vector<16x1xf32>
    %124 = vector.broadcast %114 : vector<16x1xf32> to vector<16x128xf32>
    %125 = arith.subf %108, %124 : vector<16x128xf32>
    %cst_49 = arith.constant 9.99999974E-6 : f32
    %126 = vector.broadcast %cst_49 : f32 to vector<16x1xf32>
    %127 = arith.addf %123, %126 : vector<16x1xf32>
    %128 = math.rsqrt %127 : vector<16x1xf32>
    %129 = vector.broadcast %128 : vector<16x1xf32> to vector<16x128xf32>
    %130 = arith.mulf %125, %129 : vector<16x128xf32>
    %131 = vector.broadcast %109 : vector<1x128xf32> to vector<16x128xf32>
    %132 = arith.mulf %130, %131 : vector<16x128xf32>
    %133 = vector.broadcast %110 : vector<1x128xf32> to vector<16x128xf32>
    %134 = arith.addf %132, %133 : vector<16x128xf32>
    %c0_50 = arith.constant 0 : index
    %c0_51 = arith.constant 0 : index
    %135 = vector.load %arg9[%c0_50, %c0_51] : memref<128x128xf32, #tpu.memory_space<vmem>>, vector<128x128xf32>
    %cst_52 = arith.constant dense<0.000000e+00> : vector<16x128xf32>
    %136 = tpu.matmul %134, %135, %cst_52 {dimension_numbers = #tpu.dot_dimension_numbers<[1], [0], [0], [1], [0, 0, 1, 1], [], []>} : vector<16x128xf32>, vector<128x128xf32>, vector<16x128xf32> -> vector<16x128xf32>
    %c0_53 = arith.constant 0 : index
    %c0_54 = arith.constant 0 : index
    %137 = vector.load %arg10[%c0_53, %c0_54] : memref<1x128xf32, #tpu.memory_space<vmem>>, vector<1x128xf32>
    %138 = vector.broadcast %137 : vector<1x128xf32> to vector<16x128xf32>
    %139 = arith.addf %136, %138 : vector<16x128xf32>
    %cst_55 = arith.constant 0.000000e+00 : f32
    %140 = vector.broadcast %cst_55 : f32 to vector<16x128xf32>
    %141 = arith.maximumf %139, %140 : vector<16x128xf32>
    %c0_56 = arith.constant 0 : index
    %c0_57 = arith.constant 0 : index
    %142 = vector.load %arg11[%c0_56, %c0_57] : memref<128x128xf32, #tpu.memory_space<vmem>>, vector<128x128xf32>
    %cst_58 = arith.constant dense<0.000000e+00> : vector<16x128xf32>
    %143 = tpu.matmul %141, %142, %cst_58 {dimension_numbers = #tpu.dot_dimension_numbers<[1], [0], [0], [1], [0, 0, 1, 1], [], []>} : vector<16x128xf32>, vector<128x128xf32>, vector<16x128xf32> -> vector<16x128xf32>
    %c0_59 = arith.constant 0 : index
    %c0_60 = arith.constant 0 : index
    %144 = vector.load %arg12[%c0_59, %c0_60] : memref<1x128xf32, #tpu.memory_space<vmem>>, vector<1x128xf32>
    %145 = vector.broadcast %144 : vector<1x128xf32> to vector<16x128xf32>
    %146 = arith.addf %143, %145 : vector<16x128xf32>
    %147 = arith.addf %134, %146 : vector<16x128xf32>
    %c0_61 = arith.constant 0 : index
    %c0_62 = arith.constant 0 : index
    %148 = vector.load %arg13[%c0_61, %c0_62] : memref<1x128xf32, #tpu.memory_space<vmem>>, vector<1x128xf32>
    %c0_63 = arith.constant 0 : index
    %c0_64 = arith.constant 0 : index
    %149 = vector.load %arg14[%c0_63, %c0_64] : memref<1x128xf32, #tpu.memory_space<vmem>>, vector<1x128xf32>
    %cst_65 = arith.constant dense<0.000000e+00> : vector<16xf32>
    %150 = vector.multi_reduction <add>, %147, %cst_65 [1] : vector<16x128xf32> to vector<16xf32>
    %151 = vector.shape_cast %150 : vector<16xf32> to vector<16x1xf32>
    %cst_66 = arith.constant 1.280000e+02 : f32
    %152 = vector.broadcast %cst_66 : f32 to vector<16x1xf32>
    %153 = arith.divf %151, %152 : vector<16x1xf32>
    %154 = vector.broadcast %153 : vector<16x1xf32> to vector<16x128xf32>
    %155 = arith.subf %147, %154 : vector<16x128xf32>
    %156 = vector.broadcast %153 : vector<16x1xf32> to vector<16x128xf32>
    %157 = arith.subf %147, %156 : vector<16x128xf32>
    %158 = arith.mulf %155, %157 : vector<16x128xf32>
    %cst_67 = arith.constant dense<0.000000e+00> : vector<16xf32>
    %159 = vector.multi_reduction <add>, %158, %cst_67 [1] : vector<16x128xf32> to vector<16xf32>
    %160 = vector.shape_cast %159 : vector<16xf32> to vector<16x1xf32>
    %cst_68 = arith.constant 1.280000e+02 : f32
    %161 = vector.broadcast %cst_68 : f32 to vector<16x1xf32>
    %162 = arith.divf %160, %161 : vector<16x1xf32>
    %163 = vector.broadcast %153 : vector<16x1xf32> to vector<16x128xf32>
    %164 = arith.subf %147, %163 : vector<16x128xf32>
    %cst_69 = arith.constant 9.99999974E-6 : f32
    %165 = vector.broadcast %cst_69 : f32 to vector<16x1xf32>
    %166 = arith.addf %162, %165 : vector<16x1xf32>
    %167 = math.rsqrt %166 : vector<16x1xf32>
    %168 = vector.broadcast %167 : vector<16x1xf32> to vector<16x128xf32>
    %169 = arith.mulf %164, %168 : vector<16x128xf32>
    %170 = vector.broadcast %148 : vector<1x128xf32> to vector<16x128xf32>
    %171 = arith.mulf %169, %170 : vector<16x128xf32>
    %172 = vector.broadcast %149 : vector<1x128xf32> to vector<16x128xf32>
    %173 = arith.addf %171, %172 : vector<16x128xf32>
    %c0_70 = arith.constant 0 : index
    %c0_71 = arith.constant 0 : index
    %c0_72 = arith.constant 0 : index
    %174 = vector.load %arg15[%c0_70, %c0_71, %c0_72] : memref<1x16x128xf32, #tpu.memory_space<vmem>>, vector<1x16x128xf32>
    %175 = vector.shape_cast %174 : vector<1x16x128xf32> to vector<16x128xf32>
    %176 = vector.shape_cast %173 : vector<16x128xf32> to vector<1x16x128xf32>
    tpu.vector_store %arg15[%c0_70, %c0_71, %c0_72], %176 {strides = array<i32>} : memref<1x16x128xf32, #tpu.memory_space<vmem>>, vector<1x16x128xf32>,
    return
  }
  func.func @transform_0(%arg0: i32) -> (i32, i32, i32) {
    %c0_i32 = arith.constant 0 : i32
    %c0_i32_0 = arith.constant 0 : i32
    %c0_i32_1 = arith.constant 0 : i32
    return %arg0, %c0_i32, %c0_i32_0 : i32, i32, i32
  }
  func.func @transform_1(%arg0: i32) -> (i32, i32, i32) {
    %c0_i32 = arith.constant 0 : i32
    %c0_i32_0 = arith.constant 0 : i32
    %c0_i32_1 = arith.constant 0 : i32
    return %arg0, %c0_i32, %c0_i32_0 : i32, i32, i32
  }
  func.func @transform_2(%arg0: i32) -> (i32, i32) {
    %c0_i32 = arith.constant 0 : i32
    %c0_i32_0 = arith.constant 0 : i32
    %c0_i32_1 = arith.constant 0 : i32
    return %c0_i32, %c0_i32_0 : i32, i32
  }
  func.func @transform_3(%arg0: i32) -> (i32, i32) {
    %c0_i32 = arith.constant 0 : i32
    %c0_i32_0 = arith.constant 0 : i32
    %c0_i32_1 = arith.constant 0 : i32
    return %c0_i32, %c0_i32_0 : i32, i32
  }
  func.func @transform_4(%arg0: i32) -> (i32, i32) {
    %c0_i32 = arith.constant 0 : i32
    %c0_i32_0 = arith.constant 0 : i32
    %c0_i32_1 = arith.constant 0 : i32
    return %c0_i32, %c0_i32_0 : i32, i32
  }
  func.func @transform_5(%arg0: i32) -> (i32, i32) {
    %c0_i32 = arith.constant 0 : i32
    %c0_i32_0 = arith.constant 0 : i32
    %c0_i32_1 = arith.constant 0 : i32
    return %c0_i32, %c0_i32_0 : i32, i32
  }
  func.func @transform_6(%arg0: i32) -> (i32, i32) {
    %c0_i32 = arith.constant 0 : i32
    %c0_i32_0 = arith.constant 0 : i32
    %c0_i32_1 = arith.constant 0 : i32
    return %c0_i32, %c0_i32_0 : i32, i32
  }
  func.func @transform_7(%arg0: i32) -> (i32, i32) {
    %c0_i32 = arith.constant 0 : i32
    %c0_i32_0 = arith.constant 0 : i32
    %c0_i32_1 = arith.constant 0 : i32
    return %c0_i32, %c0_i32_0 : i32, i32
  }
  func.func @transform_8(%arg0: i32) -> (i32, i32) {
    %c0_i32 = arith.constant 0 : i32
    %c0_i32_0 = arith.constant 0 : i32
    %c0_i32_1 = arith.constant 0 : i32
    return %c0_i32, %c0_i32_0 : i32, i32
  }
  func.func @transform_9(%arg0: i32) -> (i32, i32) {
    %c0_i32 = arith.constant 0 : i32
    %c0_i32_0 = arith.constant 0 : i32
    %c0_i32_1 = arith.constant 0 : i32
    return %c0_i32, %c0_i32_0 : i32, i32
  }
  func.func @transform_10(%arg0: i32) -> (i32, i32) {
    %c0_i32 = arith.constant 0 : i32
    %c0_i32_0 = arith.constant 0 : i32
    %c0_i32_1 = arith.constant 0 : i32
    return %c0_i32, %c0_i32_0 : i32, i32
  }
  func.func @transform_11(%arg0: i32) -> (i32, i32) {
    %c0_i32 = arith.constant 0 : i32
    %c0_i32_0 = arith.constant 0 : i32
    %c0_i32_1 = arith.constant 0 : i32
    return %c0_i32, %c0_i32_0 : i32, i32
  }
  func.func @transform_12(%arg0: i32) -> (i32, i32) {
    %c0_i32 = arith.constant 0 : i32
    %c0_i32_0 = arith.constant 0 : i32
    %c0_i32_1 = arith.constant 0 : i32
    return %c0_i32, %c0_i32_0 : i32, i32
  }
  func.func @transform_13(%arg0: i32) -> (i32, i32) {
    %c0_i32 = arith.constant 0 : i32
    %c0_i32_0 = arith.constant 0 : i32
    %c0_i32_1 = arith.constant 0 : i32
    return %c0_i32, %c0_i32_0 : i32, i32
  }
  func.func @transform_14(%arg0: i32) -> (i32, i32, i32) {
    %c0_i32 = arith.constant 0 : i32
    %c0_i32_0 = arith.constant 0 : i32
    %c0_i32_1 = arith.constant 0 : i32
    return %arg0, %c0_i32, %c0_i32_0 : i32, i32, i32
  }
}

module attributes {stable_mosaic.version = 11 : i64} {
  func.func @_layer_kernel(%arg0: i32, %arg1: memref<1x16x128xf32, #tpu.memory_space<vmem>>, %arg2: memref<1x16x16xf32, #tpu.memory_space<vmem>>, %arg3: memref<128x384xf32, #tpu.memory_space<vmem>>, %arg4: memref<1x384xf32, #tpu.memory_space<vmem>>, %arg5: memref<128x128xf32, #tpu.memory_space<vmem>>, %arg6: memref<1x128xf32, #tpu.memory_space<vmem>>, %arg7: memref<1x128xf32, #tpu.memory_space<vmem>>, %arg8: memref<1x128xf32, #tpu.memory_space<vmem>>, %arg9: memref<128x128xf32, #tpu.memory_space<vmem>>, %arg10: memref<1x128xf32, #tpu.memory_space<vmem>>, %arg11: memref<128x128xf32, #tpu.memory_space<vmem>>, %arg12: memref<1x128xf32, #tpu.memory_space<vmem>>, %arg13: memref<1x128xf32, #tpu.memory_space<vmem>>, %arg14: memref<1x128xf32, #tpu.memory_space<vmem>>, %arg15: memref<1x16x128xf32, #tpu.memory_space<vmem>>) attributes {dimension_semantics = [#tpu.dimension_semantics<parallel>], iteration_bounds = array<i64: 2>, scalar_prefetch = 0 : i64, scratch_operands = 0 : i64, tpu.core_type = #tpu.core_type<tc>, window_params = [{transform_indices = @transform_0, window_bounds = array<i64: 1, 16, 128>}, {transform_indices = @transform_1, window_bounds = array<i64: 1, 16, 16>}, {pipeline_mode = #tpu.pipeline_mode<synchronous>, transform_indices = @transform_2, window_bounds = array<i64: 128, 384>}, {pipeline_mode = #tpu.pipeline_mode<synchronous>, transform_indices = @transform_3, window_bounds = array<i64: 1, 384>}, {pipeline_mode = #tpu.pipeline_mode<synchronous>, transform_indices = @transform_4, window_bounds = array<i64: 128, 128>}, {pipeline_mode = #tpu.pipeline_mode<synchronous>, transform_indices = @transform_5, window_bounds = array<i64: 1, 128>}, {pipeline_mode = #tpu.pipeline_mode<synchronous>, transform_indices = @transform_6, window_bounds = array<i64: 1, 128>}, {pipeline_mode = #tpu.pipeline_mode<synchronous>, transform_indices = @transform_7, window_bounds = array<i64: 1, 128>}, {pipeline_mode = #tpu.pipeline_mode<synchronous>, transform_indices = @transform_8, window_bounds = array<i64: 128, 128>}, {pipeline_mode = #tpu.pipeline_mode<synchronous>, transform_indices = @transform_9, window_bounds = array<i64: 1, 128>}, {pipeline_mode = #tpu.pipeline_mode<synchronous>, transform_indices = @transform_10, window_bounds = array<i64: 128, 128>}, {pipeline_mode = #tpu.pipeline_mode<synchronous>, transform_indices = @transform_11, window_bounds = array<i64: 1, 128>}, {pipeline_mode = #tpu.pipeline_mode<synchronous>, transform_indices = @transform_12, window_bounds = array<i64: 1, 128>}, {pipeline_mode = #tpu.pipeline_mode<synchronous>, transform_indices = @transform_13, window_bounds = array<i64: 1, 128>}, {transform_indices = @transform_14, window_bounds = array<i64: 1, 16, 128>}]} {
    %c0 = arith.constant 0 : index
    %c0_0 = arith.constant 0 : index
    %c0_1 = arith.constant 0 : index
    %0 = vector.load %arg1[%c0, %c0_0, %c0_1] : memref<1x16x128xf32, #tpu.memory_space<vmem>>, vector<1x16x128xf32>
    %1 = vector.shape_cast %0 : vector<1x16x128xf32> to vector<16x128xf32>
    %c0_2 = arith.constant 0 : index
    %c0_3 = arith.constant 0 : index
    %c0_4 = arith.constant 0 : index
    %2 = vector.load %arg2[%c0_2, %c0_3, %c0_4] : memref<1x16x16xf32, #tpu.memory_space<vmem>>, vector<1x16x16xf32>
    %3 = vector.shape_cast %2 : vector<1x16x16xf32> to vector<16x16xf32>
    %c0_5 = arith.constant 0 : index
    %c0_6 = arith.constant 0 : index
    %4 = vector.load %arg3[%c0_5, %c0_6] : memref<128x384xf32, #tpu.memory_space<vmem>>, vector<128x384xf32>
    %cst = arith.constant dense<0.000000e+00> : vector<16x384xf32>
    %5 = tpu.matmul %1, %4, %cst {dimension_numbers = #tpu.dot_dimension_numbers<[1], [0], [0], [1], [0, 0, 1, 1], [], []>} : vector<16x128xf32>, vector<128x384xf32>, vector<16x384xf32> -> vector<16x384xf32>
    %c0_7 = arith.constant 0 : index
    %c0_8 = arith.constant 0 : index
    %6 = vector.load %arg4[%c0_7, %c0_8] : memref<1x384xf32, #tpu.memory_space<vmem>>, vector<1x384xf32>
    %7 = vector.broadcast %6 : vector<1x384xf32> to vector<16x384xf32>
    %8 = arith.addf %5, %7 : vector<16x384xf32>
    %9 = vector.extract_strided_slice %8 {offsets = [0, 0], sizes = [16, 128], strides = [1, 1]} : vector<16x384xf32> to vector<16x128xf32>
    %10 = vector.extract_strided_slice %8 {offsets = [0, 128], sizes = [16, 128], strides = [1, 1]} : vector<16x384xf32> to vector<16x128xf32>
    %11 = vector.extract_strided_slice %8 {offsets = [0, 256], sizes = [16, 128], strides = [1, 1]} : vector<16x384xf32> to vector<16x128xf32>
    %c0_9 = arith.constant 0 : index
    %c0_10 = arith.constant 0 : index
    %12 = vector.load %arg5[%c0_9, %c0_10] : memref<128x128xf32, #tpu.memory_space<vmem>>, vector<128x128xf32>
    %c0_11 = arith.constant 0 : index
    %c0_12 = arith.constant 0 : index
    %13 = vector.load %arg6[%c0_11, %c0_12] : memref<1x128xf32, #tpu.memory_space<vmem>>, vector<1x128xf32>
    %14 = vector.shape_cast %13 : vector<1x128xf32> to vector<1x128xf32>
    %15 = vector.broadcast %14 : vector<1x128xf32> to vector<16x128xf32>
    %16 = vector.extract_strided_slice %9 {offsets = [0, 0], sizes = [16, 32], strides = [1, 1]} : vector<16x128xf32> to vector<16x32xf32>
    %17 = vector.extract_strided_slice %10 {offsets = [0, 0], sizes = [16, 32], strides = [1, 1]} : vector<16x128xf32> to vector<16x32xf32>
    %18 = vector.extract_strided_slice %11 {offsets = [0, 0], sizes = [16, 32], strides = [1, 1]} : vector<16x128xf32> to vector<16x32xf32>
    %cst_13 = arith.constant dense<0.000000e+00> : vector<16x16xf32>
    %19 = tpu.matmul %16, %17, %cst_13 {dimension_numbers = #tpu.dot_dimension_numbers<[1], [1], [0], [0], [0, 0, 1, 0], [], []>} : vector<16x32xf32>, vector<16x32xf32>, vector<16x16xf32> -> vector<16x16xf32>
    %cst_14 = arith.constant 0.176776692 : f32
    %20 = vector.broadcast %cst_14 : f32 to vector<16x16xf32>
    %21 = arith.mulf %19, %20 : vector<16x16xf32>
    %22 = arith.addf %21, %3 : vector<16x16xf32>
    %cst_15 = arith.constant dense<0xFF800000> : vector<16xf32>
    %23 = vector.multi_reduction <maximumf>, %22, %cst_15 [1] : vector<16x16xf32> to vector<16xf32>
    %24 = vector.shape_cast %23 : vector<16xf32> to vector<16x1xf32>
    %25 = vector.broadcast %24 : vector<16x1xf32> to vector<16x16xf32>
    %26 = arith.subf %22, %25 : vector<16x16xf32>
    %27 = math.exp %26 : vector<16x16xf32>
    %cst_16 = arith.constant dense<0.000000e+00> : vector<16xf32>
    %28 = vector.multi_reduction <add>, %27, %cst_16 [1] : vector<16x16xf32> to vector<16xf32>
    %29 = vector.shape_cast %28 : vector<16xf32> to vector<16x1xf32>
    %cst_17 = arith.constant 1.000000e-30 : f32
    %30 = vector.broadcast %cst_17 : f32 to vector<16x1xf32>
    %31 = arith.maximumf %29, %30 : vector<16x1xf32>
    %32 = tpu.reciprocal %31 {approx = true} : vector<16x1xf32> -> vector<16x1xf32>
    %33 = vector.broadcast %32 : vector<16x1xf32> to vector<16x16xf32>
    %34 = arith.mulf %27, %33 : vector<16x16xf32>
    %cst_18 = arith.constant dense<0.000000e+00> : vector<16x32xf32>
    %35 = tpu.matmul %34, %18, %cst_18 {dimension_numbers = #tpu.dot_dimension_numbers<[1], [0], [0], [1], [0, 0, 1, 1], [], []>} : vector<16x16xf32>, vector<16x32xf32>, vector<16x32xf32> -> vector<16x32xf32>
    %36 = vector.extract_strided_slice %12 {offsets = [0, 0], sizes = [32, 128], strides = [1, 1]} : vector<128x128xf32> to vector<32x128xf32>
    %cst_19 = arith.constant dense<0.000000e+00> : vector<16x128xf32>
    %37 = tpu.matmul %35, %36, %cst_19 {dimension_numbers = #tpu.dot_dimension_numbers<[1], [0], [0], [1], [0, 0, 1, 1], [], []>} : vector<16x32xf32>, vector<32x128xf32>, vector<16x128xf32> -> vector<16x128xf32>
    %38 = arith.addf %15, %37 : vector<16x128xf32>
    %39 = vector.extract_strided_slice %9 {offsets = [0, 32], sizes = [16, 32], strides = [1, 1]} : vector<16x128xf32> to vector<16x32xf32>
    %40 = vector.extract_strided_slice %10 {offsets = [0, 32], sizes = [16, 32], strides = [1, 1]} : vector<16x128xf32> to vector<16x32xf32>
    %41 = vector.extract_strided_slice %11 {offsets = [0, 32], sizes = [16, 32], strides = [1, 1]} : vector<16x128xf32> to vector<16x32xf32>
    %cst_20 = arith.constant dense<0.000000e+00> : vector<16x16xf32>
    %42 = tpu.matmul %39, %40, %cst_20 {dimension_numbers = #tpu.dot_dimension_numbers<[1], [1], [0], [0], [0, 0, 1, 0], [], []>} : vector<16x32xf32>, vector<16x32xf32>, vector<16x16xf32> -> vector<16x16xf32>
    %cst_21 = arith.constant 0.176776692 : f32
    %43 = vector.broadcast %cst_21 : f32 to vector<16x16xf32>
    %44 = arith.mulf %42, %43 : vector<16x16xf32>
    %45 = arith.addf %44, %3 : vector<16x16xf32>
    %cst_22 = arith.constant dense<0xFF800000> : vector<16xf32>
    %46 = vector.multi_reduction <maximumf>, %45, %cst_22 [1] : vector<16x16xf32> to vector<16xf32>
    %47 = vector.shape_cast %46 : vector<16xf32> to vector<16x1xf32>
    %48 = vector.broadcast %47 : vector<16x1xf32> to vector<16x16xf32>
    %49 = arith.subf %45, %48 : vector<16x16xf32>
    %50 = math.exp %49 : vector<16x16xf32>
    %cst_23 = arith.constant dense<0.000000e+00> : vector<16xf32>
    %51 = vector.multi_reduction <add>, %50, %cst_23 [1] : vector<16x16xf32> to vector<16xf32>
    %52 = vector.shape_cast %51 : vector<16xf32> to vector<16x1xf32>
    %cst_24 = arith.constant 1.000000e-30 : f32
    %53 = vector.broadcast %cst_24 : f32 to vector<16x1xf32>
    %54 = arith.maximumf %52, %53 : vector<16x1xf32>
    %55 = tpu.reciprocal %54 {approx = true} : vector<16x1xf32> -> vector<16x1xf32>
    %56 = vector.broadcast %55 : vector<16x1xf32> to vector<16x16xf32>
    %57 = arith.mulf %50, %56 : vector<16x16xf32>
    %cst_25 = arith.constant dense<0.000000e+00> : vector<16x32xf32>
    %58 = tpu.matmul %57, %41, %cst_25 {dimension_numbers = #tpu.dot_dimension_numbers<[1], [0], [0], [1], [0, 0, 1, 1], [], []>} : vector<16x16xf32>, vector<16x32xf32>, vector<16x32xf32> -> vector<16x32xf32>
    %59 = vector.extract_strided_slice %12 {offsets = [32, 0], sizes = [32, 128], strides = [1, 1]} : vector<128x128xf32> to vector<32x128xf32>
    %cst_26 = arith.constant dense<0.000000e+00> : vector<16x128xf32>
    %60 = tpu.matmul %58, %59, %cst_26 {dimension_numbers = #tpu.dot_dimension_numbers<[1], [0], [0], [1], [0, 0, 1, 1], [], []>} : vector<16x32xf32>, vector<32x128xf32>, vector<16x128xf32> -> vector<16x128xf32>
    %61 = arith.addf %38, %60 : vector<16x128xf32>
    %62 = vector.extract_strided_slice %9 {offsets = [0, 64], sizes = [16, 32], strides = [1, 1]} : vector<16x128xf32> to vector<16x32xf32>
    %63 = vector.extract_strided_slice %10 {offsets = [0, 64], sizes = [16, 32], strides = [1, 1]} : vector<16x128xf32> to vector<16x32xf32>
    %64 = vector.extract_strided_slice %11 {offsets = [0, 64], sizes = [16, 32], strides = [1, 1]} : vector<16x128xf32> to vector<16x32xf32>
    %cst_27 = arith.constant dense<0.000000e+00> : vector<16x16xf32>
    %65 = tpu.matmul %62, %63, %cst_27 {dimension_numbers = #tpu.dot_dimension_numbers<[1], [1], [0], [0], [0, 0, 1, 0], [], []>} : vector<16x32xf32>, vector<16x32xf32>, vector<16x16xf32> -> vector<16x16xf32>
    %cst_28 = arith.constant 0.176776692 : f32
    %66 = vector.broadcast %cst_28 : f32 to vector<16x16xf32>
    %67 = arith.mulf %65, %66 : vector<16x16xf32>
    %68 = arith.addf %67, %3 : vector<16x16xf32>
    %cst_29 = arith.constant dense<0xFF800000> : vector<16xf32>
    %69 = vector.multi_reduction <maximumf>, %68, %cst_29 [1] : vector<16x16xf32> to vector<16xf32>
    %70 = vector.shape_cast %69 : vector<16xf32> to vector<16x1xf32>
    %71 = vector.broadcast %70 : vector<16x1xf32> to vector<16x16xf32>
    %72 = arith.subf %68, %71 : vector<16x16xf32>
    %73 = math.exp %72 : vector<16x16xf32>
    %cst_30 = arith.constant dense<0.000000e+00> : vector<16xf32>
    %74 = vector.multi_reduction <add>, %73, %cst_30 [1] : vector<16x16xf32> to vector<16xf32>
    %75 = vector.shape_cast %74 : vector<16xf32> to vector<16x1xf32>
    %cst_31 = arith.constant 1.000000e-30 : f32
    %76 = vector.broadcast %cst_31 : f32 to vector<16x1xf32>
    %77 = arith.maximumf %75, %76 : vector<16x1xf32>
    %78 = tpu.reciprocal %77 {approx = true} : vector<16x1xf32> -> vector<16x1xf32>
    %79 = vector.broadcast %78 : vector<16x1xf32> to vector<16x16xf32>
    %80 = arith.mulf %73, %79 : vector<16x16xf32>
    %cst_32 = arith.constant dense<0.000000e+00> : vector<16x32xf32>
    %81 = tpu.matmul %80, %64, %cst_32 {dimension_numbers = #tpu.dot_dimension_numbers<[1], [0], [0], [1], [0, 0, 1, 1], [], []>} : vector<16x16xf32>, vector<16x32xf32>, vector<16x32xf32> -> vector<16x32xf32>
    %82 = vector.extract_strided_slice %12 {offsets = [64, 0], sizes = [32, 128], strides = [1, 1]} : vector<128x128xf32> to vector<32x128xf32>
    %cst_33 = arith.constant dense<0.000000e+00> : vector<16x128xf32>
    %83 = tpu.matmul %81, %82, %cst_33 {dimension_numbers = #tpu.dot_dimension_numbers<[1], [0], [0], [1], [0, 0, 1, 1], [], []>} : vector<16x32xf32>, vector<32x128xf32>, vector<16x128xf32> -> vector<16x128xf32>
    %84 = arith.addf %61, %83 : vector<16x128xf32>
    %85 = vector.extract_strided_slice %9 {offsets = [0, 96], sizes = [16, 32], strides = [1, 1]} : vector<16x128xf32> to vector<16x32xf32>
    %86 = vector.extract_strided_slice %10 {offsets = [0, 96], sizes = [16, 32], strides = [1, 1]} : vector<16x128xf32> to vector<16x32xf32>
    %87 = vector.extract_strided_slice %11 {offsets = [0, 96], sizes = [16, 32], strides = [1, 1]} : vector<16x128xf32> to vector<16x32xf32>
    %cst_34 = arith.constant dense<0.000000e+00> : vector<16x16xf32>
    %88 = tpu.matmul %85, %86, %cst_34 {dimension_numbers = #tpu.dot_dimension_numbers<[1], [1], [0], [0], [0, 0, 1, 0], [], []>} : vector<16x32xf32>, vector<16x32xf32>, vector<16x16xf32> -> vector<16x16xf32>
    %cst_35 = arith.constant 0.176776692 : f32
    %89 = vector.broadcast %cst_35 : f32 to vector<16x16xf32>
    %90 = arith.mulf %88, %89 : vector<16x16xf32>
    %91 = arith.addf %90, %3 : vector<16x16xf32>
    %cst_36 = arith.constant dense<0xFF800000> : vector<16xf32>
    %92 = vector.multi_reduction <maximumf>, %91, %cst_36 [1] : vector<16x16xf32> to vector<16xf32>
    %93 = vector.shape_cast %92 : vector<16xf32> to vector<16x1xf32>
    %94 = vector.broadcast %93 : vector<16x1xf32> to vector<16x16xf32>
    %95 = arith.subf %91, %94 : vector<16x16xf32>
    %96 = math.exp %95 : vector<16x16xf32>
    %cst_37 = arith.constant dense<0.000000e+00> : vector<16xf32>
    %97 = vector.multi_reduction <add>, %96, %cst_37 [1] : vector<16x16xf32> to vector<16xf32>
    %98 = vector.shape_cast %97 : vector<16xf32> to vector<16x1xf32>
    %cst_38 = arith.constant 1.000000e-30 : f32
    %99 = vector.broadcast %cst_38 : f32 to vector<16x1xf32>
    %100 = arith.maximumf %98, %99 : vector<16x1xf32>
    %101 = tpu.reciprocal %100 {approx = true} : vector<16x1xf32> -> vector<16x1xf32>
    %102 = vector.broadcast %101 : vector<16x1xf32> to vector<16x16xf32>
    %103 = arith.mulf %96, %102 : vector<16x16xf32>
    %cst_39 = arith.constant dense<0.000000e+00> : vector<16x32xf32>
    %104 = tpu.matmul %103, %87, %cst_39 {dimension_numbers = #tpu.dot_dimension_numbers<[1], [0], [0], [1], [0, 0, 1, 1], [], []>} : vector<16x16xf32>, vector<16x32xf32>, vector<16x32xf32> -> vector<16x32xf32>
    %105 = vector.extract_strided_slice %12 {offsets = [96, 0], sizes = [32, 128], strides = [1, 1]} : vector<128x128xf32> to vector<32x128xf32>
    %cst_40 = arith.constant dense<0.000000e+00> : vector<16x128xf32>
    %106 = tpu.matmul %104, %105, %cst_40 {dimension_numbers = #tpu.dot_dimension_numbers<[1], [0], [0], [1], [0, 0, 1, 1], [], []>} : vector<16x32xf32>, vector<32x128xf32>, vector<16x128xf32> -> vector<16x128xf32>
    %107 = arith.addf %84, %106 : vector<16x128xf32>
    %108 = arith.addf %1, %107 : vector<16x128xf32>
    %c0_41 = arith.constant 0 : index
    %c0_42 = arith.constant 0 : index
    %109 = vector.load %arg7[%c0_41, %c0_42] : memref<1x128xf32, #tpu.memory_space<vmem>>, vector<1x128xf32>
    %c0_43 = arith.constant 0 : index
    %c0_44 = arith.constant 0 : index
    %110 = vector.load %arg8[%c0_43, %c0_44] : memref<1x128xf32, #tpu.memory_space<vmem>>, vector<1x128xf32>
    %cst_45 = arith.constant dense<0.000000e+00> : vector<16xf32>
    %111 = vector.multi_reduction <add>, %108, %cst_45 [1] : vector<16x128xf32> to vector<16xf32>
    %112 = vector.shape_cast %111 : vector<16xf32> to vector<16x1xf32>
    %cst_46 = arith.constant 1.280000e+02 : f32
    %113 = vector.broadcast %cst_46 : f32 to vector<16x1xf32>
    %114 = arith.divf %112, %113 : vector<16x1xf32>
    %115 = vector.broadcast %114 : vector<16x1xf32> to vector<16x128xf32>
    %116 = arith.subf %108, %115 : vector<16x128xf32>
    %117 = vector.broadcast %114 : vector<16x1xf32> to vector<16x128xf32>
    %118 = arith.subf %108, %117 : vector<16x128xf32>
    %119 = arith.mulf %116, %118 : vector<16x128xf32>
    %cst_47 = arith.constant dense<0.000000e+00> : vector<16xf32>
    %120 = vector.multi_reduction <add>, %119, %cst_47 [1] : vector<16x128xf32> to vector<16xf32>
    %121 = vector.shape_cast %120 : vector<16xf32> to vector<16x1xf32>
    %cst_48 = arith.constant 1.280000e+02 : f32
    %122 = vector.broadcast %cst_48 : f32 to vector<16x1xf32>
    %123 = arith.divf %121, %122 : vector<16x1xf32>
    %124 = vector.broadcast %114 : vector<16x1xf32> to vector<16x128xf32>
    %125 = arith.subf %108, %124 : vector<16x128xf32>
    %cst_49 = arith.constant 9.99999974E-6 : f32
    %126 = vector.broadcast %cst_49 : f32 to vector<16x1xf32>
    %127 = arith.addf %123, %126 : vector<16x1xf32>
    %128 = math.rsqrt %127 : vector<16x1xf32>
    %129 = vector.broadcast %128 : vector<16x1xf32> to vector<16x128xf32>
    %130 = arith.mulf %125, %129 : vector<16x128xf32>
    %131 = vector.broadcast %109 : vector<1x128xf32> to vector<16x128xf32>
    %132 = arith.mulf %130, %131 : vector<16x128xf32>
    %133 = vector.broadcast %110 : vector<1x128xf32> to vector<16x128xf32>
    %134 = arith.addf %132, %133 : vector<16x128xf32>
    %c0_50 = arith.constant 0 : index
    %c0_51 = arith.constant 0 : index
    %135 = vector.load %arg9[%c0_50, %c0_51] : memref<128x128xf32, #tpu.memory_space<vmem>>, vector<128x128xf32>
    %cst_52 = arith.constant dense<0.000000e+00> : vector<16x128xf32>
    %136 = tpu.matmul %134, %135, %cst_52 {dimension_numbers = #tpu.dot_dimension_numbers<[1], [0], [0], [1], [0, 0, 1, 1], [], []>} : vector<16x128xf32>, vector<128x128xf32>, vector<16x128xf32> -> vector<16x128xf32>
    %c0_53 = arith.constant 0 : index
    %c0_54 = arith.constant 0 : index
    %137 = vector.load %arg10[%c0_53, %c0_54] : memref<1x128xf32, #tpu.memory_space<vmem>>, vector<1x128xf32>
    %138 = vector.broadcast %137 : vector<1x128xf32> to vector<16x128xf32>
    %139 = arith.addf %136, %138 : vector<16x128xf32>
    %cst_55 = arith.constant 0.000000e+00 : f32
    %140 = vector.broadcast %cst_55 : f32 to vector<16x128xf32>
    %141 = arith.maximumf %139, %140 : vector<16x128xf32>
    %c0_56 = arith.constant 0 : index
    %c0_57 = arith.constant 0 : index
    %142 = vector.load %arg11[%c0_56, %c0_57] : memref<128x128xf32, #tpu.memory_space<vmem>>, vector<128x128xf32>
    %cst_58 = arith.constant dense<0.000000e+00> : vector<16x128xf32>
    %143 = tpu.matmul %141, %142, %cst_58 {dimension_numbers = #tpu.dot_dimension_numbers<[1], [0], [0], [1], [0, 0, 1, 1], [], []>} : vector<16x128xf32>, vector<128x128xf32>, vector<16x128xf32> -> vector<16x128xf32>
    %c0_59 = arith.constant 0 : index
    %c0_60 = arith.constant 0 : index
    %144 = vector.load %arg12[%c0_59, %c0_60] : memref<1x128xf32, #tpu.memory_space<vmem>>, vector<1x128xf32>
    %145 = vector.broadcast %144 : vector<1x128xf32> to vector<16x128xf32>
    %146 = arith.addf %143, %145 : vector<16x128xf32>
    %147 = arith.addf %134, %146 : vector<16x128xf32>
    %c0_61 = arith.constant 0 : index
    %c0_62 = arith.constant 0 : index
    %148 = vector.load %arg13[%c0_61, %c0_62] : memref<1x128xf32, #tpu.memory_space<vmem>>, vector<1x128xf32>
    %c0_63 = arith.constant 0 : index
    %c0_64 = arith.constant 0 : index
    %149 = vector.load %arg14[%c0_63, %c0_64] : memref<1x128xf32, #tpu.memory_space<vmem>>, vector<1x128xf32>
    %cst_65 = arith.constant dense<0.000000e+00> : vector<16xf32>
    %150 = vector.multi_reduction <add>, %147, %cst_65 [1] : vector<16x128xf32> to vector<16xf32>
    %151 = vector.shape_cast %150 : vector<16xf32> to vector<16x1xf32>
    %cst_66 = arith.constant 1.280000e+02 : f32
    %152 = vector.broadcast %cst_66 : f32 to vector<16x1xf32>
    %153 = arith.divf %151, %152 : vector<16x1xf32>
    %154 = vector.broadcast %153 : vector<16x1xf32> to vector<16x128xf32>
    %155 = arith.subf %147, %154 : vector<16x128xf32>
    %156 = vector.broadcast %153 : vector<16x1xf32> to vector<16x128xf32>
    %157 = arith.subf %147, %156 : vector<16x128xf32>
    %158 = arith.mulf %155, %157 : vector<16x128xf32>
    %cst_67 = arith.constant dense<0.000000e+00> : vector<16xf32>
    %159 = vector.multi_reduction <add>, %158, %cst_67 [1] : vector<16x128xf32> to vector<16xf32>
    %160 = vector.shape_cast %159 : vector<16xf32> to vector<16x1xf32>
    %cst_68 = arith.constant 1.280000e+02 : f32
    %161 = vector.broadcast %cst_68 : f32 to vector<16x1xf32>
    %162 = arith.divf %160, %161 : vector<16x1xf32>
    %163 = vector.broadcast %153 : vector<16x1xf32> to vector<16x128xf32>
    %164 = arith.subf %147, %163 : vector<16x128xf32>
    %cst_69 = arith.constant 9.99999974E-6 : f32
    %165 = vector.broadcast %cst_69 : f32 to vector<16x1xf32>
    %166 = arith.addf %162, %165 : vector<16x1xf32>
    %167 = math.rsqrt %166 : vector<16x1xf32>
    %168 = vector.broadcast %167 : vector<16x1xf32> to vector<16x128xf32>
    %169 = arith.mulf %164, %168 : vector<16x128xf32>
    %170 = vector.broadcast %148 : vector<1x128xf32> to vector<16x128xf32>
    %171 = arith.mulf %169, %170 : vector<16x128xf32>
    %172 = vector.broadcast %149 : vector<1x128xf32> to vector<16x128xf32>
    %173 = arith.addf %171, %172 : vector<16x128xf32>
    %c0_70 = arith.constant 0 : index
    %c0_71 = arith.constant 0 : index
    %c0_72 = arith.constant 0 : index
    %174 = vector.load %arg15[%c0_70, %c0_71, %c0_72] : memref<1x16x128xf32, #tpu.memory_space<vmem>>, vector<1x16x128xf32>
    %175 = vector.shape_cast %174 : vector<1x16x128xf32> to vector<16x128xf32>
    %176 = vector.shape_cast %173 : vector<16x128xf32> to vector<1x16x128xf32>
    tpu.vector_store %arg15[%c0_70, %c0_71, %c0_72], %176 {strides = array<i32>} : memref<1x16x128xf32, #tpu.memory_space<vmem>>, vector<1x16x128xf32>,
    return
  }
  func.func @transform_0(%arg0: i32) -> (i32, i32, i32) {
    %c0_i32 = arith.constant 0 : i32
    %c0_i32_0 = arith.constant 0 : i32
    %c0_i32_1 = arith.constant 0 : i32
    return %arg0, %c0_i32, %c0_i32_0 : i32, i32, i32
  }
  func.func @transform_1(%arg0: i32) -> (i32, i32, i32) {
    %c0_i32 = arith.constant 0 : i32
    %c0_i32_0 = arith.constant 0 : i32
    %c0_i32_1 = arith.constant 0 : i32
    return %arg0, %c0_i32, %c0_i32_0 : i32, i32, i32
  }
  func.func @transform_2(%arg0: i32) -> (i32, i32) {
    %c0_i32 = arith.constant 0 : i32
    %c0_i32_0 = arith.constant 0 : i32
    %c0_i32_1 = arith.constant 0 : i32
    return %c0_i32, %c0_i32_0 : i32, i32
  }
  func.func @transform_3(%arg0: i32) -> (i32, i32) {
    %c0_i32 = arith.constant 0 : i32
    %c0_i32_0 = arith.constant 0 : i32
    %c0_i32_1 = arith.constant 0 : i32
    return %c0_i32, %c0_i32_0 : i32, i32
  }
  func.func @transform_4(%arg0: i32) -> (i32, i32) {
    %c0_i32 = arith.constant 0 : i32
    %c0_i32_0 = arith.constant 0 : i32
    %c0_i32_1 = arith.constant 0 : i32
    return %c0_i32, %c0_i32_0 : i32, i32
  }
  func.func @transform_5(%arg0: i32) -> (i32, i32) {
    %c0_i32 = arith.constant 0 : i32
    %c0_i32_0 = arith.constant 0 : i32
    %c0_i32_1 = arith.constant 0 : i32
    return %c0_i32, %c0_i32_0 : i32, i32
  }
  func.func @transform_6(%arg0: i32) -> (i32, i32) {
    %c0_i32 = arith.constant 0 : i32
    %c0_i32_0 = arith.constant 0 : i32
    %c0_i32_1 = arith.constant 0 : i32
    return %c0_i32, %c0_i32_0 : i32, i32
  }
  func.func @transform_7(%arg0: i32) -> (i32, i32) {
    %c0_i32 = arith.constant 0 : i32
    %c0_i32_0 = arith.constant 0 : i32
    %c0_i32_1 = arith.constant 0 : i32
    return %c0_i32, %c0_i32_0 : i32, i32
  }
  func.func @transform_8(%arg0: i32) -> (i32, i32) {
    %c0_i32 = arith.constant 0 : i32
    %c0_i32_0 = arith.constant 0 : i32
    %c0_i32_1 = arith.constant 0 : i32
    return %c0_i32, %c0_i32_0 : i32, i32
  }
  func.func @transform_9(%arg0: i32) -> (i32, i32) {
    %c0_i32 = arith.constant 0 : i32
    %c0_i32_0 = arith.constant 0 : i32
    %c0_i32_1 = arith.constant 0 : i32
    return %c0_i32, %c0_i32_0 : i32, i32
  }
  func.func @transform_10(%arg0: i32) -> (i32, i32) {
    %c0_i32 = arith.constant 0 : i32
    %c0_i32_0 = arith.constant 0 : i32
    %c0_i32_1 = arith.constant 0 : i32
    return %c0_i32, %c0_i32_0 : i32, i32
  }
  func.func @transform_11(%arg0: i32) -> (i32, i32) {
    %c0_i32 = arith.constant 0 : i32
    %c0_i32_0 = arith.constant 0 : i32
    %c0_i32_1 = arith.constant 0 : i32
    return %c0_i32, %c0_i32_0 : i32, i32
  }
  func.func @transform_12(%arg0: i32) -> (i32, i32) {
    %c0_i32 = arith.constant 0 : i32
    %c0_i32_0 = arith.constant 0 : i32
    %c0_i32_1 = arith.constant 0 : i32
    return %c0_i32, %c0_i32_0 : i32, i32
  }
  func.func @transform_13(%arg0: i32) -> (i32, i32) {
    %c0_i32 = arith.constant 0 : i32
    %c0_i32_0 = arith.constant 0 : i32
    %c0_i32_1 = arith.constant 0 : i32
    return %c0_i32, %c0_i32_0 : i32, i32
  }
  func.func @transform_14(%arg0: i32) -> (i32, i32, i32) {
    %c0_i32 = arith.constant 0 : i32
    %c0_i32_0 = arith.constant 0 : i32
    %c0_i32_1 = arith.constant 0 : i32
    return %arg0, %c0_i32, %c0_i32_0 : i32, i32, i32
  }
}

</mosaic_0001>

<llo_original>
// kernel: transformer_xl_forward.5
$region0: #{transformer_xl_forward.5}
  #allocation0 [shape = 'u32[]', space=smem, size = 0x4, offset = 0x4, fixed_abs, tag = 'smem constant byte address 0x4 - core index']
  #allocation1 [shape = 'u32[144,128]{1,0:T(1,128)}', space=vmem, size = 0x12000, scoped, tag = 'internal scratch']
  #allocation2 [shape = 'f32[16,128]{1,0:T(8,128)}', space=vmem, size = 0x2000, scoped, tag = 'scratch operand']
  %s0 = inlined_call_operand.vmem [shape: f32[32,128], index: 0, kind: input, shape index: {}]
  %s1 = inlined_call_operand.vmem [shape: f32[128,128], index: 1, kind: input, shape index: {}]
  %s2 = inlined_call_operand.vmem [shape: f32[1,128], index: 2, kind: input, shape index: {}]
  %s3 = inlined_call_operand.hbm [shape: f32[32,128], index: 3, kind: output, shape index: {}]
  %s4 = sld [smem:[#allocation0]]
  $region53: #{transformer_xl_forward.5} parent=0
    _
  %s6 = ssub.s32 1, %s4
  %s7 = scalar_select 0, %s6, %s4
  $region1: #{transformer_xl_forward.5} parent=0
    #allocation3 [shape = 'u8[16384]{0}', space=vmem, size = 0x4000, scoped, tag = 'output window, operand 0']
    #allocation4 [shape = 's32[2]{0}', space=sflag, size = 0x8, scoped, tag = 'scoped memory for transformer_xl_forward.5']
    %8 = vsyncpa [#allocation4], 0
    %s9 = scalar_lea.sflag [#allocation4], 1
    %10 = vsyncpa %s9, 0
    loop: start=0, step=1, limit=4
    $region2: #{transformer_xl_forward.5} parent=1 // loop_pre_header
      _
    $region3: #{transformer_xl_forward.5} parent=1 // loop_header
      %s12 = sphi 0, %s16
      %p13 = scmp.ge.s32.totalorder %s12, 4
      %s19 = sphi 0, %s38
      %s20 = sphi 0, %s34
      %s21 = sphi 0, %s30
      %s22 = sphi 0, %s19
      %s23 = sphi 0, %s20
      %s24 = sphi 0, %s21
      %s25 = sphi 0, %s22
      %s26 = sphi 0, %s23
      %s27 = sphi 0, %s24
      %s43 = sphi 0, %s45
      %s46 = sphi 0, %s43
      %s47 = sphi 0, %s46
      %s63 = sphi 0, %s47
      %s71 = sphi 0, %s73
      %s74 = sphi 0, %s71
      %s75 = sphi 0, %s74
      %s91 = sphi 0, %s75
      %s97 = sphi 0, %s99
      %s100 = sphi 0, %s97
      %s101 = sphi 0, %s100
      %s117 = sphi 0, %s101
      %s125 = sphi 0, %s127
      %s128 = sphi 0, %s125
      %s129 = sphi 0, %s128
      %s145 = sphi 0, %s129
    $region4: #{transformer_xl_forward.5} parent=1 // loop_header_branch
      %15 = sbr.rel (%p13) target = $region8
    $region5: #{transformer_xl_forward.5} parent=1 // loop_body
      %s17 = ssub.s32 %s12, 1
      %s18 = ssub.s32 %s12, 2
      %s28 = sadd.s32 1, %s21
      %p29 = scmp.ge.s32.totalorder %s28, 1
      %s30 = scalar_select %p29, 0, %s28
      %s31 = sadd.s32 1, %s20
      %s32 = scalar_select %p29, %s31, %s20
      %p33 = scmp.ge.s32.totalorder %s32, 1
      %s34 = scalar_select %p33, 0, %s32
      %s35 = sadd.s32 1, %s19
      %s36 = scalar_select %p33, %s35, %s19
      %p37 = scmp.ge.s32.totalorder %s36, 2
      %s38 = scalar_select %p37, 0, %s36
      %s39 = ssub.s32 %s19, %s38
      %s40 = ssub.s32 %s21, %s30
      %s41 = sor.u32 %s39, %s40
      %p42 = scmp.eq.s32.totalorder %s41, 0
      %s44 = sadd.s32 %s43, 1
      %s45 = scalar_select %p42, %s43, %s44
      %p48 = pneg %p42
      %p49 = scmp.eq.s32.totalorder %s12, 1
      %p50 = por %p48, %p49
      %p51 = scmp.ne.s32.totalorder %s43, %s46
      %p52 = scmp.eq.s32.totalorder %s12, 0
      %p53 = por %p51, %p52
      %p54 = scmp.ne.s32.totalorder %s43, %s46
      %p55 = scmp.eq.s32.totalorder %s17, 1
      %p56 = por %p54, %p55
      %p57 = scmp.ne.s32.totalorder %s46, %s47
      %p58 = scmp.eq.s32.totalorder %s17, 0
      %p59 = por %p57, %p58
      %p60 = scmp.ne.s32.totalorder %s46, %s47
      %p61 = scmp.eq.s32.totalorder %s18, 1
      %p62 = por %p60, %p61
      %p64 = scmp.ne.s32.totalorder %s47, %s63
      %p65 = scmp.eq.s32.totalorder %s18, 0
      %p66 = por %p64, %p65
      %s67 = ssub.s32 %s21, %s30
      %s68 = ssub.s32 %s20, %s34
      %s69 = sor.u32 %s67, %s68
      %p70 = scmp.eq.s32.totalorder %s69, 0
      %s72 = sadd.s32 %s71, 1
      %s73 = scalar_select %p70, %s71, %s72
      %p76 = pneg %p70
      %p77 = scmp.eq.s32.totalorder %s12, 1
      %p78 = por %p76, %p77
      %p79 = scmp.ne.s32.totalorder %s71, %s74
      %p80 = scmp.eq.s32.totalorder %s12, 0
      %p81 = por %p79, %p80
      %p82 = scmp.ne.s32.totalorder %s71, %s74
      %p83 = scmp.eq.s32.totalorder %s17, 1
      %p84 = por %p82, %p83
      %p85 = scmp.ne.s32.totalorder %s74, %s75
      %p86 = scmp.eq.s32.totalorder %s17, 0
      %p87 = por %p85, %p86
      %p88 = scmp.ne.s32.totalorder %s74, %s75
      %p89 = scmp.eq.s32.totalorder %s18, 1
      %p90 = por %p88, %p89
      %p92 = scmp.ne.s32.totalorder %s75, %s91
      %p93 = scmp.eq.s32.totalorder %s18, 0
      %p94 = por %p92, %p93
      %s95 = ssub.s32 %s20, %s34
      %p96 = scmp.eq.s32.totalorder %s95, 0
      %s98 = sadd.s32 %s97, 1
      %s99 = scalar_select %p96, %s97, %s98
      %p102 = pneg %p96
      %p103 = scmp.eq.s32.totalorder %s12, 1
      %p104 = por %p102, %p103
      %p105 = scmp.ne.s32.totalorder %s97, %s100
      %p106 = scmp.eq.s32.totalorder %s12, 0
      %p107 = por %p105, %p106
      %p108 = scmp.ne.s32.totalorder %s97, %s100
      %p109 = scmp.eq.s32.totalorder %s17, 1
      %p110 = por %p108, %p109
      %p111 = scmp.ne.s32.totalorder %s100, %s101
      %p112 = scmp.eq.s32.totalorder %s17, 0
      %p113 = por %p111, %p112
      %p114 = scmp.ne.s32.totalorder %s100, %s101
      %p115 = scmp.eq.s32.totalorder %s18, 1
      %p116 = por %p114, %p115
      %p118 = scmp.ne.s32.totalorder %s101, %s117
      %p119 = scmp.eq.s32.totalorder %s18, 0
      %p120 = por %p118, %p119
      %s121 = ssub.s32 %s19, %s38
      %s122 = ssub.s32 %s20, %s34
      %s123 = sor.u32 %s121, %s122
      %p124 = scmp.eq.s32.totalorder %s123, 0
      %s126 = sadd.s32 %s125, 1
      %s127 = scalar_select %p124, %s125, %s126
      %p130 = pneg %p124
      %p131 = scmp.eq.s32.totalorder %s12, 1
      %p132 = por %p130, %p131
      %p133 = scmp.ne.s32.totalorder %s125, %s128
      %p134 = scmp.eq.s32.totalorder %s12, 0
      %p135 = por %p133, %p134
      %p136 = scmp.ne.s32.totalorder %s125, %s128
      %p137 = scmp.eq.s32.totalorder %s17, 1
      %p138 = por %p136, %p137
      %p139 = scmp.ne.s32.totalorder %s128, %s129
      %p140 = scmp.eq.s32.totalorder %s17, 0
      %p141 = por %p139, %p140
      %p142 = scmp.ne.s32.totalorder %s128, %s129
      %p143 = scmp.eq.s32.totalorder %s18, 1
      %p144 = por %p142, %p143
      %p146 = scmp.ne.s32.totalorder %s129, %s145
      %p147 = scmp.eq.s32.totalorder %s18, 0
      %p148 = por %p146, %p147
      %p149 = scmp.le.s32.totalorder 1, %s12
      %p150 = scmp.lt.s32.totalorder %s12, 3
      %p151 = pnand %p149, %p150
      %p152 = pneg %p151
      // Predicated region
      $region9: #{transformer_xl_forward.5} parent=5 // pred_check
        _
      $region10: #{transformer_xl_forward.5} parent=5 // pred_check_branch
        %154 = sbr.rel (%p151) target = $region12
      $region11: #{transformer_xl_forward.5} parent=5 // pred_region
        %s155 = ssub.s32 %s12, 1
        // Predicated region
        $region13: #{transformer_xl_forward.5} parent=11 // pred_check
          %p156 = pneg %p87
        $region14: #{transformer_xl_forward.5} parent=11 // pred_check_branch
          %158 = sbr.rel (%p156) target = $region16
        $region15: #{transformer_xl_forward.5} parent=11 // pred_region
          %s159 = smul.u32 16, %s24
          %p160 = scmp.lt.s32.totalorder %s159, 15
          %s161 = scalar_select %p160, %s159, 15
          %p162 = scmp.lt.s32.totalorder %s23, 0
          %s163 = scalar_select %p162, %s23, 0
          %s164 = sadd.s32 %s163, %s161
          %s165 = smul.addr %s164, 8
          %s166 = scalar_lea.vmem %s1, %s165
          %s167 = smul.u32 16, %s24
        $region16: #{transformer_xl_forward.5} parent=11 // pred_fallthru
          _
        // Predicated region
        $region17: #{transformer_xl_forward.5} parent=11 // pred_check
          %p168 = pneg %p113
        $region18: #{transformer_xl_forward.5} parent=11 // pred_check_branch
          %170 = sbr.rel (%p168) target = $region20
        $region19: #{transformer_xl_forward.5} parent=11 // pred_region
          %p171 = scmp.lt.s32.totalorder %s23, 0
          %s172 = scalar_select %p171, %s23, 0
          %s173 = scalar_lea.vmem %s2, %s172
        $region20: #{transformer_xl_forward.5} parent=11 // pred_fallthru
          _
      $region12: #{transformer_xl_forward.5} parent=5 // pred_fallthru
        _
      %p174 = scmp.lt.s32.totalorder %s12, 2
      // Predicated region
      $region21: #{transformer_xl_forward.5} parent=5 // pred_check
        %p175 = pneg %p174
      $region22: #{transformer_xl_forward.5} parent=5 // pred_check_branch
        %177 = sbr.rel (%p175) target = $region24
      $region23: #{transformer_xl_forward.5} parent=5 // pred_region
        // Predicated region
        $region25: #{transformer_xl_forward.5} parent=23 // pred_check
          %p178 = pneg %p53
        $region26: #{transformer_xl_forward.5} parent=23 // pred_check_branch
          %180 = sbr.rel (%p178) target = $region28
        $region27: #{transformer_xl_forward.5} parent=23 // pred_region
          %s181 = smul.u32 2, %s19
          %p182 = scmp.lt.s32.totalorder %s181, 3
          %s183 = scalar_select %p182, %s181, 3
          %p184 = scmp.lt.s32.totalorder %s21, 0
          %s185 = scalar_select %p184, %s21, 0
          %s186 = sadd.s32 %s185, %s183
          %s187 = smul.addr %s186, 8
          %s188 = scalar_lea.vmem %s0, %s187
          %s189 = smul.u32 2, %s19
        $region28: #{transformer_xl_forward.5} parent=23 // pred_fallthru
          _
      $region24: #{transformer_xl_forward.5} parent=5 // pred_fallthru
        _
      %p190 = scmp.le.s32.totalorder 1, %s12
      %p191 = scmp.lt.s32.totalorder %s12, 3
      %p192 = pnand %p190, %p191
      %p193 = pneg %p192
      // Predicated region
      $region29: #{transformer_xl_forward.5} parent=5 // pred_check
        _
      $region30: #{transformer_xl_forward.5} parent=5 // pred_check_branch
        %195 = sbr.rel (%p192) target = $region32
      $region31: #{transformer_xl_forward.5} parent=5 // pred_region
        %s196 = ssub.s32 %s12, 1
        %s197 = smul.u32 2, %s22
        %p198 = scmp.lt.s32.totalorder %s197, 3
        %s199 = scalar_select %p198, %s197, 3
        %p200 = scmp.lt.s32.totalorder %s24, 0
        %s201 = scalar_select %p200, %s24, 0
        %s202 = sadd.s32 %s201, %s199
        %s203 = smul.addr %s202, 8
        %s204 = scalar_lea.vmem %s0, %s203
        %p205 = pneg %p59
        %p206 = pneg %p56
        %s207 = smul.u32 16, %s24
        %p208 = scmp.lt.s32.totalorder %s207, 15
        %s209 = scalar_select %p208, %s207, 15
        %p210 = scmp.lt.s32.totalorder %s23, 0
        %s211 = scalar_select %p210, %s23, 0
        %s212 = sadd.s32 %s211, %s209
        %s213 = smul.addr %s212, 8
        %s214 = scalar_lea.vmem %s1, %s213
        %p215 = pneg %p87
        %p216 = pneg %p84
        %p217 = scmp.lt.s32.totalorder %s23, 0
        %s218 = scalar_select %p217, %s23, 0
        %s219 = scalar_lea.vmem %s2, %s218
        %p220 = pneg %p113
        %p221 = pneg %p110
        %p222 = pneg %p141
        %p223 = pneg %p138
        %s224 = sand.u32 %s128, 1
        %s225 = scalar_lea.sflag [#allocation4], %s224
        %s226 = sand.u32 %s128, 1
        %s227 = smul.addr %s226, 16
        %s228 = scalar_lea.vmem [#allocation3], %s227
        %s229 = smul.u32 2, %s22
        %p230 = scmp.lt.s32.totalorder %s229, 3
        %s231 = scalar_select %p230, %s229, 3
        %p232 = scmp.lt.s32.totalorder %s24, 0
        %s233 = scalar_select %p232, %s24, 0
        %s234 = sadd.s32 %s233, %s231
        %s235 = smul.addr %s234, 8
        %s236 = scalar_lea.vmem %s0, %s235
        %s237 = smul.u32 2, %s22
        %s238 = smul.u32 16, %s24
        %p239 = scmp.lt.s32.totalorder %s238, 15
        %s240 = scalar_select %p239, %s238, 15
        %p241 = scmp.lt.s32.totalorder %s23, 0
        %s242 = scalar_select %p241, %s23, 0
        %s243 = sadd.s32 %s242, %s240
        %s244 = smul.addr %s243, 8
        %s245 = scalar_lea.vmem %s1, %s244
        %s246 = smul.u32 16, %s24
        %p247 = scmp.lt.s32.totalorder %s23, 0
        %s248 = scalar_select %p247, %s23, 0
        %s249 = scalar_lea.vmem %s2, %s248
        %s250 = smul.u32 2, %s22
        %p251 = scmp.eq.s32.totalorder %s24, 0
        // Predicated region
        $region33: #{transformer_xl_forward.5} parent=31 // pred_check
          %p252 = pneg %p251
        $region34: #{transformer_xl_forward.5} parent=31 // pred_check_branch
          %254 = sbr.rel (%p252) target = $region36
        $region35: #{transformer_xl_forward.5} parent=31 // pred_region
          %v255 = vld [vmem:[%s249] sm:$0x1]
          %v257 = vlaneseq
          %v258 = vshrl.u32 %v257, 7
          %v259 = vsub.s32 0, %v258
          %v260 = vrot.slane %v255, %v259
          %262 = vst [vmem:[#allocation2] sm:$0xff] %v260
          %263 = vst [vmem:[#allocation2 + $0x8] sm:$0xff] %v260
        $region36: #{transformer_xl_forward.5} parent=31 // pred_fallthru
          _
        %v264 = vld [vmem:[#allocation2] sm:$0xff]
        %v265 = vld [vmem:[#allocation2 + $0x8] sm:$0xff]
        %v266 = vld [vmem:[%s236] sm:$0xff]
        %v267 = vld [vmem:[%s236 + $0x8] sm:$0xff]
        %v268 = vld [vmem:[%s245] sm:$0xff]
        %v269 = vld [vmem:[%s245 + $0x8] sm:$0xff]
        %v270 = vld [vmem:[%s245 + $0x10] sm:$0xff]
        %v271 = vld [vmem:[%s245 + $0x18] sm:$0xff]
        %v272 = vld [vmem:[%s245 + $0x20] sm:$0xff]
        %v273 = vld [vmem:[%s245 + $0x28] sm:$0xff]
        %v274 = vld [vmem:[%s245 + $0x30] sm:$0xff]
        %v275 = vld [vmem:[%s245 + $0x38] sm:$0xff]
        %v276 = vld [vmem:[%s245 + $0x40] sm:$0xff]
        %v277 = vld [vmem:[%s245 + $0x48] sm:$0xff]
        %v278 = vld [vmem:[%s245 + $0x50] sm:$0xff]
        %v279 = vld [vmem:[%s245 + $0x58] sm:$0xff]
        %v280 = vld [vmem:[%s245 + $0x60] sm:$0xff]
        %v281 = vld [vmem:[%s245 + $0x68] sm:$0xff]
        %v282 = vld [vmem:[%s245 + $0x70] sm:$0xff]
        %v283 = vld [vmem:[%s245 + $0x78] sm:$0xff]
        %284 = vmatprep.subr.mxu0 0.0
        %285 = vmatpush1.msra.mxu0 %v283
        %286 = vmatprep.subr.mxu0 0.0
        %287 = vmatpush1.msra.mxu0 %v282
        %288 = vmatprep.subr.mxu0 0.0
        %289 = vmatpush1.msra.mxu0 %v281
        %290 = vmatprep.subr.mxu0 0.0
        %291 = vmatpush1.msra.mxu0 %v280
        %292 = vmatprep.subr.mxu0 0.0
        %293 = vmatpush1.msra.mxu0 %v279
        %294 = vmatprep.subr.mxu0 0.0
        %295 = vmatpush1.msra.mxu0 %v278
        %296 = vmatprep.subr.mxu0 0.0
        %297 = vmatpush1.msra.mxu0 %v277
        %298 = vmatprep.subr.mxu0 0.0
        %299 = vmatpush1.msra.mxu0 %v276
        %300 = vmatprep.subr.mxu0 0.0
        %301 = vmatpush1.msra.mxu0 %v275
        %302 = vmatprep.subr.mxu0 0.0
        %303 = vmatpush1.msra.mxu0 %v274
        %304 = vmatprep.subr.mxu0 0.0
        %305 = vmatpush1.msra.mxu0 %v273
        %306 = vmatprep.subr.mxu0 0.0
        %307 = vmatpush1.msra.mxu0 %v272
        %308 = vmatprep.subr.mxu0 0.0
        %309 = vmatpush1.msra.mxu0 %v271
        %310 = vmatprep.subr.mxu0 0.0
        %311 = vmatpush1.msra.mxu0 %v270
        %312 = vmatprep.subr.mxu0 0.0
        %313 = vmatpush1.msra.mxu0 %v269
        %314 = vmatprep.subr.mxu0 0.0
        %315 = vmatpush1.msra.mxu0 %v268
        %316 = vmatprep.subr.mxu0 0.0
        %317 = vmatpush2.msra.mxu0 0.0
        %318 = vmatprep.subr.mxu0 0.0
        %319 = vmatpush2.msra.mxu0 0.0
        %320 = vmatprep.subr.mxu0 0.0
        %321 = vmatpush2.msra.mxu0 0.0
        %322 = vmatprep.subr.mxu0 0.0
        %323 = vmatpush2.msra.mxu0 0.0
        %324 = vmatprep.subr.mxu0 0.0
        %325 = vmatpush2.msra.mxu0 0.0
        %326 = vmatprep.subr.mxu0 0.0
        %327 = vmatpush2.msra.mxu0 0.0
        %328 = vmatprep.subr.mxu0 0.0
        %329 = vmatpush2.msra.mxu0 0.0
        %330 = vmatprep.subr.mxu0 0.0
        %331 = vmatpush2.msra.mxu0 0.0
        %332 = vmatprep.subr.mxu0 0.0
        %333 = vmatpush2.msra.mxu0 0.0
        %334 = vmatprep.subr.mxu0 0.0
        %335 = vmatpush2.msra.mxu0 0.0
        %336 = vmatprep.subr.mxu0 0.0
        %337 = vmatpush2.msra.mxu0 0.0
        %338 = vmatprep.subr.mxu0 0.0
        %339 = vmatpush2.msra.mxu0 0.0
        %340 = vmatprep.subr.mxu0 0.0
        %341 = vmatpush2.msra.mxu0 0.0
        %342 = vmatprep.subr.mxu0 0.0
        %343 = vmatpush2.msra.mxu0 0.0
        %344 = vmatprep.subr.mxu0 0.0
        %345 = vmatpush2.msra.mxu0 0.0
        %346 = vmatprep.subr.mxu0 0.0
        %347 = vmatpush2.msra.mxu0 0.0
        %348 = vmatprep.mubr.f32.mxu0 0.0
        %349 = vmatmul.mubr.f32.gmra.mxu0 %v266
        %v350 = vpop.f32.mrf.mxu0
        %v351 = vadd.f32 0.0, %v350
        %v352 = vpop.f32.mrf.mxu0
        %353 = vmatprep.mubr.f32.mxu0 0.0
        %354 = vmatmul.mubr.f32.gmra.mxu0 %v267
        %v355 = vpop.f32.mrf.mxu0
        %v356 = vadd.f32 0.0, %v355
        %v357 = vpop.f32.mrf.mxu0
        %358 = vdwg.mxu0
        %v359 = vadd.f32 %v264, %v351
        %v360 = vadd.f32 %v265, %v356
        %361 = vst [vmem:[#allocation2] sm:$0xff] %v359
        %362 = vst [vmem:[#allocation2 + $0x8] sm:$0xff] %v360
        // Predicated region
        $region37: #{transformer_xl_forward.5} parent=31 // pred_check
          %p363 = pneg %p251
        $region38: #{transformer_xl_forward.5} parent=31 // pred_check_branch
          %365 = sbr.rel (%p363) target = $region40
        $region39: #{transformer_xl_forward.5} parent=31 // pred_region
          %v366 = vld [vmem:[#allocation2] sm:$0xff]
          %v367 = vld [vmem:[#allocation2 + $0x8] sm:$0xff]
          %368 = vst [vmem:[%s228] sm:$0xff] %v366
          %369 = vst [vmem:[%s228 + $0x8] sm:$0xff] %v367
        $region40: #{transformer_xl_forward.5} parent=31 // pred_fallthru
          _
        %s370 = sand.u32 %s128, 1
        %s371 = scalar_lea.sflag [#allocation4], %s370
        %s372 = sand.u32 %s128, 1
        %s373 = smul.addr %s372, 16
        %s374 = scalar_lea.vmem [#allocation3], %s373
        // Predicated region
        $region41: #{transformer_xl_forward.5} parent=31 // pred_check
          %p375 = pneg %p138
        $region42: #{transformer_xl_forward.5} parent=31 // pred_check_branch
          %377 = sbr.rel (%p375) target = $region44
        $region43: #{transformer_xl_forward.5} parent=31 // pred_region
          %s378 = smul.u32 2, %s22
          %s380 = ssub.s32 256, 256
          %381 = vsyncadd %s371, %s380
          %s382 = sadd.s32 %s23, %s378
          %s383 = smul.addr %s382, 128
          %s384 = scalar_lea.hbm %s3, %s383
          %s385 = sshll.u32 %s374, 4
          %s386 = int_to_ptr.vmem [resolvable:$true] %s385
          %391 = dma.vmem_to_hbm [thread:$0]  %s386, 256, %s384, %s371, 128, 128, 8
        $region44: #{transformer_xl_forward.5} parent=31 // pred_fallthru
          _
      $region32: #{transformer_xl_forward.5} parent=5 // pred_fallthru
        _
      %p392 = scmp.le.s32.totalorder 2, %s12
      // Predicated region
      $region45: #{transformer_xl_forward.5} parent=5 // pred_check
        %p393 = pneg %p392
      $region46: #{transformer_xl_forward.5} parent=5 // pred_check_branch
        %395 = sbr.rel (%p393) target = $region48
      $region47: #{transformer_xl_forward.5} parent=5 // pred_region
        %s396 = ssub.s32 %s12, 2
        // Predicated region
        $region49: #{transformer_xl_forward.5} parent=47 // pred_check
          %p397 = pneg %p144
        $region50: #{transformer_xl_forward.5} parent=47 // pred_check_branch
          %399 = sbr.rel (%p397) target = $region52
        $region51: #{transformer_xl_forward.5} parent=47 // pred_region
          %s400 = sand.u32 %s129, 1
          %s401 = scalar_lea.sflag [#allocation4], %s400
          %s402 = sand.u32 %s129, 1
          %s403 = smul.addr %s402, 16
          %s404 = scalar_lea.vmem [#allocation3], %s403
          %405 = dma.done %s401, 256
        $region52: #{transformer_xl_forward.5} parent=47 // pred_fallthru
          _
      $region48: #{transformer_xl_forward.5} parent=5 // pred_fallthru
        _
    $region6: #{transformer_xl_forward.5} parent=1 // loop_footer
      %s16 = sadd.s32 1, %s12
    $region7: #{transformer_xl_forward.5} parent=1 // loop_footer_branch
      %11 = sbr.rel target = $region3
    $region8: #{transformer_xl_forward.5} parent=1 // loop_exit
      _
    %406 = vsyncpa [#allocation4], 1
    %s407 = scalar_lea.sflag [#allocation4], 1
    %408 = vsyncpa %s407, 1

// kernel: transformer_xl_forward.4
$region0: #{transformer_xl_forward.4}
  #allocation0 [shape = 'u32[]', space=smem, size = 0x4, offset = 0x4, fixed_abs, tag = 'smem constant byte address 0x4 - core index']
  #allocation1 [shape = 'u32[144,128]{1,0:T(1,128)}', space=vmem, size = 0x12000, scoped, tag = 'internal scratch']
  %s0 = inlined_call_operand.vmem [shape: f32[2,16,128], index: 0, kind: input, shape index: {}]
  %s1 = inlined_call_operand.vmem [shape: f32[2,16,16], index: 1, kind: input, shape index: {}]
  %s2 = inlined_call_operand.vmem [shape: f32[128,384], index: 2, kind: input, shape index: {}]
  %s3 = inlined_call_operand.vmem [shape: f32[1,384], index: 3, kind: input, shape index: {}]
  %s4 = inlined_call_operand.vmem [shape: f32[128,128], index: 4, kind: input, shape index: {}]
  %s5 = inlined_call_operand.vmem [shape: f32[1,128], index: 5, kind: input, shape index: {}]
  %s6 = inlined_call_operand.vmem [shape: f32[1,128], index: 6, kind: input, shape index: {}]
  %s7 = inlined_call_operand.vmem [shape: f32[1,128], index: 7, kind: input, shape index: {}]
  %s8 = inlined_call_operand.vmem [shape: f32[128,128], index: 8, kind: input, shape index: {}]
  %s9 = inlined_call_operand.vmem [shape: f32[1,128], index: 9, kind: input, shape index: {}]
  %s10 = inlined_call_operand.vmem [shape: f32[128,128], index: 10, kind: input, shape index: {}]
  %s11 = inlined_call_operand.vmem [shape: f32[1,128], index: 11, kind: input, shape index: {}]
  %s12 = inlined_call_operand.vmem [shape: f32[1,128], index: 12, kind: input, shape index: {}]
  %s13 = inlined_call_operand.vmem [shape: f32[1,128], index: 13, kind: input, shape index: {}]
  %s14 = inlined_call_operand.vmem [shape: f32[2,16,128], index: 14, kind: output, shape index: {}]
  %s15 = sld [smem:[#allocation0]]
  $region89: #{transformer_xl_forward.4} parent=0
    _
  %s17 = ssub.s32 1, %s15
  %s18 = scalar_select 0, %s17, %s15
  loop: start=0, step=1, limit=4
  $region2: #{transformer_xl_forward.4} parent=0 // loop_pre_header
    _
  $region3: #{transformer_xl_forward.4} parent=0 // loop_header
    %s20 = sphi 0, %s24
    %p21 = scmp.ge.s32.totalorder %s20, 4
    %s30 = sphi 0, %s32
    %s33 = sphi 0, %s30
    %s34 = sphi 0, %s33
    %s50 = sphi 0, %s34
    %s56 = sphi 0, %s58
    %s59 = sphi 0, %s56
    %s60 = sphi 0, %s59
    %s76 = sphi 0, %s60
    %s80 = sphi 0, %s80
    %s82 = sphi 0, %s80
    %s83 = sphi 0, %s82
    %s97 = sphi 0, %s83
    %s101 = sphi 0, %s101
    %s103 = sphi 0, %s101
    %s104 = sphi 0, %s103
    %s118 = sphi 0, %s104
    %s122 = sphi 0, %s122
    %s124 = sphi 0, %s122
    %s125 = sphi 0, %s124
    %s139 = sphi 0, %s125
    %s143 = sphi 0, %s143
    %s145 = sphi 0, %s143
    %s146 = sphi 0, %s145
    %s160 = sphi 0, %s146
    %s164 = sphi 0, %s164
    %s166 = sphi 0, %s164
    %s167 = sphi 0, %s166
    %s181 = sphi 0, %s167
    %s185 = sphi 0, %s185
    %s187 = sphi 0, %s185
    %s188 = sphi 0, %s187
    %s202 = sphi 0, %s188
    %s206 = sphi 0, %s206
    %s208 = sphi 0, %s206
    %s209 = sphi 0, %s208
    %s223 = sphi 0, %s209
    %s227 = sphi 0, %s227
    %s229 = sphi 0, %s227
    %s230 = sphi 0, %s229
    %s244 = sphi 0, %s230
    %s248 = sphi 0, %s248
    %s250 = sphi 0, %s248
    %s251 = sphi 0, %s250
    %s265 = sphi 0, %s251
    %s269 = sphi 0, %s269
    %s271 = sphi 0, %s269
    %s272 = sphi 0, %s271
    %s286 = sphi 0, %s272
    %s290 = sphi 0, %s290
    %s292 = sphi 0, %s290
    %s293 = sphi 0, %s292
    %s307 = sphi 0, %s293
    %s311 = sphi 0, %s311
    %s313 = sphi 0, %s311
    %s314 = sphi 0, %s313
    %s328 = sphi 0, %s314
    %s334 = sphi 0, %s336
    %s337 = sphi 0, %s334
    %s338 = sphi 0, %s337
    %s354 = sphi 0, %s338
  $region4: #{transformer_xl_forward.4} parent=0 // loop_header_branch
    %23 = sbr.rel (%p21) target = $region8
  $region5: #{transformer_xl_forward.4} parent=0 // loop_body
    %s25 = ssub.s32 %s20, 1
    %s26 = ssub.s32 %s20, 2
    %s27 = sadd.s32 %s20, 1
    %s28 = ssub.s32 %s20, %s27
    %p29 = scmp.eq.s32.totalorder %s28, 0
    %s31 = sadd.s32 %s30, 1
    %s32 = scalar_select %p29, %s30, %s31
    %p35 = pneg %p29
    %p36 = scmp.eq.s32.totalorder %s20, 1
    %p37 = por %p35, %p36
    %p38 = scmp.ne.s32.totalorder %s30, %s33
    %p39 = scmp.eq.s32.totalorder %s20, 0
    %p40 = por %p38, %p39
    %p41 = scmp.ne.s32.totalorder %s30, %s33
    %p42 = scmp.eq.s32.totalorder %s25, 1
    %p43 = por %p41, %p42
    %p44 = scmp.ne.s32.totalorder %s33, %s34
    %p45 = scmp.eq.s32.totalorder %s25, 0
    %p46 = por %p44, %p45
    %p47 = scmp.ne.s32.totalorder %s33, %s34
    %p48 = scmp.eq.s32.totalorder %s26, 1
    %p49 = por %p47, %p48
    %p51 = scmp.ne.s32.totalorder %s34, %s50
    %p52 = scmp.eq.s32.totalorder %s26, 0
    %p53 = por %p51, %p52
    %s54 = ssub.s32 %s20, %s27
    %p55 = scmp.eq.s32.totalorder %s54, 0
    %s57 = sadd.s32 %s56, 1
    %s58 = scalar_select %p55, %s56, %s57
    %p61 = pneg %p55
    %p62 = scmp.eq.s32.totalorder %s20, 1
    %p63 = por %p61, %p62
    %p64 = scmp.ne.s32.totalorder %s56, %s59
    %p65 = scmp.eq.s32.totalorder %s20, 0
    %p66 = por %p64, %p65
    %p67 = scmp.ne.s32.totalorder %s56, %s59
    %p68 = scmp.eq.s32.totalorder %s25, 1
    %p69 = por %p67, %p68
    %p70 = scmp.ne.s32.totalorder %s59, %s60
    %p71 = scmp.eq.s32.totalorder %s25, 0
    %p72 = por %p70, %p71
    %p73 = scmp.ne.s32.totalorder %s59, %s60
    %p74 = scmp.eq.s32.totalorder %s26, 1
    %p75 = por %p73, %p74
    %p77 = scmp.ne.s32.totalorder %s60, %s76
    %p78 = scmp.eq.s32.totalorder %s26, 0
    %p79 = por %p77, %p78
    %s81 = sadd.s32 %s80, 1
    %p84 = scmp.eq.s32.totalorder %s20, 1
    %p85 = scmp.ne.s32.totalorder %s80, %s82
    %p86 = scmp.eq.s32.totalorder %s20, 0
    %p87 = por %p85, %p86
    %p88 = scmp.ne.s32.totalorder %s80, %s82
    %p89 = scmp.eq.s32.totalorder %s25, 1
    %p90 = por %p88, %p89
    %p91 = scmp.ne.s32.totalorder %s82, %s83
    %p92 = scmp.eq.s32.totalorder %s25, 0
    %p93 = por %p91, %p92
    %p94 = scmp.ne.s32.totalorder %s82, %s83
    %p95 = scmp.eq.s32.totalorder %s26, 1
    %p96 = por %p94, %p95
    %p98 = scmp.ne.s32.totalorder %s83, %s97
    %p99 = scmp.eq.s32.totalorder %s26, 0
    %p100 = por %p98, %p99
    %s102 = sadd.s32 %s101, 1
    %p105 = scmp.eq.s32.totalorder %s20, 1
    %p106 = scmp.ne.s32.totalorder %s101, %s103
    %p107 = scmp.eq.s32.totalorder %s20, 0
    %p108 = por %p106, %p107
    %p109 = scmp.ne.s32.totalorder %s101, %s103
    %p110 = scmp.eq.s32.totalorder %s25, 1
    %p111 = por %p109, %p110
    %p112 = scmp.ne.s32.totalorder %s103, %s104
    %p113 = scmp.eq.s32.totalorder %s25, 0
    %p114 = por %p112, %p113
    %p115 = scmp.ne.s32.totalorder %s103, %s104
    %p116 = scmp.eq.s32.totalorder %s26, 1
    %p117 = por %p115, %p116
    %p119 = scmp.ne.s32.totalorder %s104, %s118
    %p120 = scmp.eq.s32.totalorder %s26, 0
    %p121 = por %p119, %p120
    %s123 = sadd.s32 %s122, 1
    %p126 = scmp.eq.s32.totalorder %s20, 1
    %p127 = scmp.ne.s32.totalorder %s122, %s124
    %p128 = scmp.eq.s32.totalorder %s20, 0
    %p129 = por %p127, %p128
    %p130 = scmp.ne.s32.totalorder %s122, %s124
    %p131 = scmp.eq.s32.totalorder %s25, 1
    %p132 = por %p130, %p131
    %p133 = scmp.ne.s32.totalorder %s124, %s125
    %p134 = scmp.eq.s32.totalorder %s25, 0
    %p135 = por %p133, %p134
    %p136 = scmp.ne.s32.totalorder %s124, %s125
    %p137 = scmp.eq.s32.totalorder %s26, 1
    %p138 = por %p136, %p137
    %p140 = scmp.ne.s32.totalorder %s125, %s139
    %p141 = scmp.eq.s32.totalorder %s26, 0
    %p142 = por %p140, %p141
    %s144 = sadd.s32 %s143, 1
    %p147 = scmp.eq.s32.totalorder %s20, 1
    %p148 = scmp.ne.s32.totalorder %s143, %s145
    %p149 = scmp.eq.s32.totalorder %s20, 0
    %p150 = por %p148, %p149
    %p151 = scmp.ne.s32.totalorder %s143, %s145
    %p152 = scmp.eq.s32.totalorder %s25, 1
    %p153 = por %p151, %p152
    %p154 = scmp.ne.s32.totalorder %s145, %s146
    %p155 = scmp.eq.s32.totalorder %s25, 0
    %p156 = por %p154, %p155
    %p157 = scmp.ne.s32.totalorder %s145, %s146
    %p158 = scmp.eq.s32.totalorder %s26, 1
    %p159 = por %p157, %p158
    %p161 = scmp.ne.s32.totalorder %s146, %s160
    %p162 = scmp.eq.s32.totalorder %s26, 0
    %p163 = por %p161, %p162
    %s165 = sadd.s32 %s164, 1
    %p168 = scmp.eq.s32.totalorder %s20, 1
    %p169 = scmp.ne.s32.totalorder %s164, %s166
    %p170 = scmp.eq.s32.totalorder %s20, 0
    %p171 = por %p169, %p170
    %p172 = scmp.ne.s32.totalorder %s164, %s166
    %p173 = scmp.eq.s32.totalorder %s25, 1
    %p174 = por %p172, %p173
    %p175 = scmp.ne.s32.totalorder %s166, %s167
    %p176 = scmp.eq.s32.totalorder %s25, 0
    %p177 = por %p175, %p176
    %p178 = scmp.ne.s32.totalorder %s166, %s167
    %p179 = scmp.eq.s32.totalorder %s26, 1
    %p180 = por %p178, %p179
    %p182 = scmp.ne.s32.totalorder %s167, %s181
    %p183 = scmp.eq.s32.totalorder %s26, 0
    %p184 = por %p182, %p183
    %s186 = sadd.s32 %s185, 1
    %p189 = scmp.eq.s32.totalorder %s20, 1
    %p190 = scmp.ne.s32.totalorder %s185, %s187
    %p191 = scmp.eq.s32.totalorder %s20, 0
    %p192 = por %p190, %p191
    %p193 = scmp.ne.s32.totalorder %s185, %s187
    %p194 = scmp.eq.s32.totalorder %s25, 1
    %p195 = por %p193, %p194
    %p196 = scmp.ne.s32.totalorder %s187, %s188
    %p197 = scmp.eq.s32.totalorder %s25, 0
    %p198 = por %p196, %p197
    %p199 = scmp.ne.s32.totalorder %s187, %s188
    %p200 = scmp.eq.s32.totalorder %s26, 1
    %p201 = por %p199, %p200
    %p203 = scmp.ne.s32.totalorder %s188, %s202
    %p204 = scmp.eq.s32.totalorder %s26, 0
    %p205 = por %p203, %p204
    %s207 = sadd.s32 %s206, 1
    %p210 = scmp.eq.s32.totalorder %s20, 1
    %p211 = scmp.ne.s32.totalorder %s206, %s208
    %p212 = scmp.eq.s32.totalorder %s20, 0
    %p213 = por %p211, %p212
    %p214 = scmp.ne.s32.totalorder %s206, %s208
    %p215 = scmp.eq.s32.totalorder %s25, 1
    %p216 = por %p214, %p215
    %p217 = scmp.ne.s32.totalorder %s208, %s209
    %p218 = scmp.eq.s32.totalorder %s25, 0
    %p219 = por %p217, %p218
    %p220 = scmp.ne.s32.totalorder %s208, %s209
    %p221 = scmp.eq.s32.totalorder %s26, 1
    %p222 = por %p220, %p221
    %p224 = scmp.ne.s32.totalorder %s209, %s223
    %p225 = scmp.eq.s32.totalorder %s26, 0
    %p226 = por %p224, %p225
    %s228 = sadd.s32 %s227, 1
    %p231 = scmp.eq.s32.totalorder %s20, 1
    %p232 = scmp.ne.s32.totalorder %s227, %s229
    %p233 = scmp.eq.s32.totalorder %s20, 0
    %p234 = por %p232, %p233
    %p235 = scmp.ne.s32.totalorder %s227, %s229
    %p236 = scmp.eq.s32.totalorder %s25, 1
    %p237 = por %p235, %p236
    %p238 = scmp.ne.s32.totalorder %s229, %s230
    %p239 = scmp.eq.s32.totalorder %s25, 0
    %p240 = por %p238, %p239
    %p241 = scmp.ne.s32.totalorder %s229, %s230
    %p242 = scmp.eq.s32.totalorder %s26, 1
    %p243 = por %p241, %p242
    %p245 = scmp.ne.s32.totalorder %s230, %s244
    %p246 = scmp.eq.s32.totalorder %s26, 0
    %p247 = por %p245, %p246
    %s249 = sadd.s32 %s248, 1
    %p252 = scmp.eq.s32.totalorder %s20, 1
    %p253 = scmp.ne.s32.totalorder %s248, %s250
    %p254 = scmp.eq.s32.totalorder %s20, 0
    %p255 = por %p253, %p254
    %p256 = scmp.ne.s32.totalorder %s248, %s250
    %p257 = scmp.eq.s32.totalorder %s25, 1
    %p258 = por %p256, %p257
    %p259 = scmp.ne.s32.totalorder %s250, %s251
    %p260 = scmp.eq.s32.totalorder %s25, 0
    %p261 = por %p259, %p260
    %p262 = scmp.ne.s32.totalorder %s250, %s251
    %p263 = scmp.eq.s32.totalorder %s26, 1
    %p264 = por %p262, %p263
    %p266 = scmp.ne.s32.totalorder %s251, %s265
    %p267 = scmp.eq.s32.totalorder %s26, 0
    %p268 = por %p266, %p267
    %s270 = sadd.s32 %s269, 1
    %p273 = scmp.eq.s32.totalorder %s20, 1
    %p274 = scmp.ne.s32.totalorder %s269, %s271
    %p275 = scmp.eq.s32.totalorder %s20, 0
    %p276 = por %p274, %p275
    %p277 = scmp.ne.s32.totalorder %s269, %s271
    %p278 = scmp.eq.s32.totalorder %s25, 1
    %p279 = por %p277, %p278
    %p280 = scmp.ne.s32.totalorder %s271, %s272
    %p281 = scmp.eq.s32.totalorder %s25, 0
    %p282 = por %p280, %p281
    %p283 = scmp.ne.s32.totalorder %s271, %s272
    %p284 = scmp.eq.s32.totalorder %s26, 1
    %p285 = por %p283, %p284
    %p287 = scmp.ne.s32.totalorder %s272, %s286
    %p288 = scmp.eq.s32.totalorder %s26, 0
    %p289 = por %p287, %p288
    %s291 = sadd.s32 %s290, 1
    %p294 = scmp.eq.s32.totalorder %s20, 1
    %p295 = scmp.ne.s32.totalorder %s290, %s292
    %p296 = scmp.eq.s32.totalorder %s20, 0
    %p297 = por %p295, %p296
    %p298 = scmp.ne.s32.totalorder %s290, %s292
    %p299 = scmp.eq.s32.totalorder %s25, 1
    %p300 = por %p298, %p299
    %p301 = scmp.ne.s32.totalorder %s292, %s293
    %p302 = scmp.eq.s32.totalorder %s25, 0
    %p303 = por %p301, %p302
    %p304 = scmp.ne.s32.totalorder %s292, %s293
    %p305 = scmp.eq.s32.totalorder %s26, 1
    %p306 = por %p304, %p305
    %p308 = scmp.ne.s32.totalorder %s293, %s307
    %p309 = scmp.eq.s32.totalorder %s26, 0
    %p310 = por %p308, %p309
    %s312 = sadd.s32 %s311, 1
    %p315 = scmp.eq.s32.totalorder %s20, 1
    %p316 = scmp.ne.s32.totalorder %s311, %s313
    %p317 = scmp.eq.s32.totalorder %s20, 0
    %p318 = por %p316, %p317
    %p319 = scmp.ne.s32.totalorder %s311, %s313
    %p320 = scmp.eq.s32.totalorder %s25, 1
    %p321 = por %p319, %p320
    %p322 = scmp.ne.s32.totalorder %s313, %s314
    %p323 = scmp.eq.s32.totalorder %s25, 0
    %p324 = por %p322, %p323
    %p325 = scmp.ne.s32.totalorder %s313, %s314
    %p326 = scmp.eq.s32.totalorder %s26, 1
    %p327 = por %p325, %p326
    %p329 = scmp.ne.s32.totalorder %s314, %s328
    %p330 = scmp.eq.s32.totalorder %s26, 0
    %p331 = por %p329, %p330
    %s332 = ssub.s32 %s20, %s27
    %p333 = scmp.eq.s32.totalorder %s332, 0
    %s335 = sadd.s32 %s334, 1
    %s336 = scalar_select %p333, %s334, %s335
    %p339 = pneg %p333
    %p340 = scmp.eq.s32.totalorder %s20, 1
    %p341 = por %p339, %p340
    %p342 = scmp.ne.s32.totalorder %s334, %s337
    %p343 = scmp.eq.s32.totalorder %s20, 0
    %p344 = por %p342, %p343
    %p345 = scmp.ne.s32.totalorder %s334, %s337
    %p346 = scmp.eq.s32.totalorder %s25, 1
    %p347 = por %p345, %p346
    %p348 = scmp.ne.s32.totalorder %s337, %s338
    %p349 = scmp.eq.s32.totalorder %s25, 0
    %p350 = por %p348, %p349
    %p351 = scmp.ne.s32.totalorder %s337, %s338
    %p352 = scmp.eq.s32.totalorder %s26, 1
    %p353 = por %p351, %p352
    %p355 = scmp.ne.s32.totalorder %s338, %s354
    %p356 = scmp.eq.s32.totalorder %s26, 0
    %p357 = por %p355, %p356
    %p358 = scmp.le.s32.totalorder 1, %s20
    %p359 = scmp.lt.s32.totalorder %s20, 3
    %p360 = pnand %p358, %p359
    %p361 = pneg %p360
    // Predicated region
    $region9: #{transformer_xl_forward.4} parent=5 // pred_check
      _
    $region10: #{transformer_xl_forward.4} parent=5 // pred_check_branch
      %363 = sbr.rel (%p360) target = $region12
    $region11: #{transformer_xl_forward.4} parent=5 // pred_region
      %s364 = ssub.s32 %s20, 1
      // Predicated region
      $region13: #{transformer_xl_forward.4} parent=11 // pred_check
        %p365 = pneg %p93
      $region14: #{transformer_xl_forward.4} parent=11 // pred_check_branch
        %367 = sbr.rel (%p365) target = $region16
      $region15: #{transformer_xl_forward.4} parent=11 // pred_region
        _
      $region16: #{transformer_xl_forward.4} parent=11 // pred_fallthru
        _
      // Predicated region
      $region17: #{transformer_xl_forward.4} parent=11 // pred_check
        %p368 = pneg %p114
      $region18: #{transformer_xl_forward.4} parent=11 // pred_check_branch
        %370 = sbr.rel (%p368) target = $region20
      $region19: #{transformer_xl_forward.4} parent=11 // pred_region
        _
      $region20: #{transformer_xl_forward.4} parent=11 // pred_fallthru
        _
      // Predicated region
      $region21: #{transformer_xl_forward.4} parent=11 // pred_check
        %p371 = pneg %p135
      $region22: #{transformer_xl_forward.4} parent=11 // pred_check_branch
        %373 = sbr.rel (%p371) target = $region24
      $region23: #{transformer_xl_forward.4} parent=11 // pred_region
        _
      $region24: #{transformer_xl_forward.4} parent=11 // pred_fallthru
        _
      // Predicated region
      $region25: #{transformer_xl_forward.4} parent=11 // pred_check
        %p374 = pneg %p156
      $region26: #{transformer_xl_forward.4} parent=11 // pred_check_branch
        %376 = sbr.rel (%p374) target = $region28
      $region27: #{transformer_xl_forward.4} parent=11 // pred_region
        _
      $region28: #{transformer_xl_forward.4} parent=11 // pred_fallthru
        _
      // Predicated region
      $region29: #{transformer_xl_forward.4} parent=11 // pred_check
        %p377 = pneg %p177
      $region30: #{transformer_xl_forward.4} parent=11 // pred_check_branch
        %379 = sbr.rel (%p377) target = $region32
      $region31: #{transformer_xl_forward.4} parent=11 // pred_region
        _
      $region32: #{transformer_xl_forward.4} parent=11 // pred_fallthru
        _
      // Predicated region
      $region33: #{transformer_xl_forward.4} parent=11 // pred_check
        %p380 = pneg %p198
      $region34: #{transformer_xl_forward.4} parent=11 // pred_check_branch
        %382 = sbr.rel (%p380) target = $region36
      $region35: #{transformer_xl_forward.4} parent=11 // pred_region
        _
      $region36: #{transformer_xl_forward.4} parent=11 // pred_fallthru
        _
      // Predicated region
      $region37: #{transformer_xl_forward.4} parent=11 // pred_check
        %p383 = pneg %p219
      $region38: #{transformer_xl_forward.4} parent=11 // pred_check_branch
        %385 = sbr.rel (%p383) target = $region40
      $region39: #{transformer_xl_forward.4} parent=11 // pred_region
        _
      $region40: #{transformer_xl_forward.4} parent=11 // pred_fallthru
        _
      // Predicated region
      $region41: #{transformer_xl_forward.4} parent=11 // pred_check
        %p386 = pneg %p240
      $region42: #{transformer_xl_forward.4} parent=11 // pred_check_branch
        %388 = sbr.rel (%p386) target = $region44
      $region43: #{transformer_xl_forward.4} parent=11 // pred_region
        _
      $region44: #{transformer_xl_forward.4} parent=11 // pred_fallthru
        _
      // Predicated region
      $region45: #{transformer_xl_forward.4} parent=11 // pred_check
        %p389 = pneg %p261
      $region46: #{transformer_xl_forward.4} parent=11 // pred_check_branch
        %391 = sbr.rel (%p389) target = $region48
      $region47: #{transformer_xl_forward.4} parent=11 // pred_region
        _
      $region48: #{transformer_xl_forward.4} parent=11 // pred_fallthru
        _
      // Predicated region
      $region49: #{transformer_xl_forward.4} parent=11 // pred_check
        %p392 = pneg %p282
      $region50: #{transformer_xl_forward.4} parent=11 // pred_check_branch
        %394 = sbr.rel (%p392) target = $region52
      $region51: #{transformer_xl_forward.4} parent=11 // pred_region
        _
      $region52: #{transformer_xl_forward.4} parent=11 // pred_fallthru
        _
      // Predicated region
      $region53: #{transformer_xl_forward.4} parent=11 // pred_check
        %p395 = pneg %p303
      $region54: #{transformer_xl_forward.4} parent=11 // pred_check_branch
        %397 = sbr.rel (%p395) target = $region56
      $region55: #{transformer_xl_forward.4} parent=11 // pred_region
        _
      $region56: #{transformer_xl_forward.4} parent=11 // pred_fallthru
        _
      // Predicated region
      $region57: #{transformer_xl_forward.4} parent=11 // pred_check
        %p398 = pneg %p324
      $region58: #{transformer_xl_forward.4} parent=11 // pred_check_branch
        %400 = sbr.rel (%p398) target = $region60
      $region59: #{transformer_xl_forward.4} parent=11 // pred_region
        _
      $region60: #{transformer_xl_forward.4} parent=11 // pred_fallthru
        _
    $region12: #{transformer_xl_forward.4} parent=5 // pred_fallthru
      _
    %p401 = scmp.lt.s32.totalorder %s20, 2
    // Predicated region
    $region61: #{transformer_xl_forward.4} parent=5 // pred_check
      %p402 = pneg %p401
    $region62: #{transformer_xl_forward.4} parent=5 // pred_check_branch
      %404 = sbr.rel (%p402) target = $region64
    $region63: #{transformer_xl_forward.4} parent=5 // pred_region
      // Predicated region
      $region65: #{transformer_xl_forward.4} parent=63 // pred_check
        %p405 = pneg %p40
      $region66: #{transformer_xl_forward.4} parent=63 // pred_check_branch
        %407 = sbr.rel (%p405) target = $region68
      $region67: #{transformer_xl_forward.4} parent=63 // pred_region
        %p408 = scmp.lt.s32.totalorder %s20, 1
        %s409 = scalar_select %p408, %s20, 1
        %s410 = smul.addr %s409, 2
        %s411 = smul.addr %s410, 8
        %s412 = scalar_lea.vmem %s0, %s411
      $region68: #{transformer_xl_forward.4} parent=63 // pred_fallthru
        _
      // Predicated region
      $region69: #{transformer_xl_forward.4} parent=63 // pred_check
        %p413 = pneg %p66
      $region70: #{transformer_xl_forward.4} parent=63 // pred_check_branch
        %415 = sbr.rel (%p413) target = $region72
      $region71: #{transformer_xl_forward.4} parent=63 // pred_region
        %p416 = scmp.lt.s32.totalorder %s20, 1
        %s417 = scalar_select %p416, %s20, 1
        %s418 = smul.addr %s417, 2
        %s419 = smul.addr %s418, 8
        %s420 = scalar_lea.vmem %s1, %s419
      $region72: #{transformer_xl_forward.4} parent=63 // pred_fallthru
        _
    $region64: #{transformer_xl_forward.4} parent=5 // pred_fallthru
      _
    %p421 = scmp.le.s32.totalorder 1, %s20
    %p422 = scmp.lt.s32.totalorder %s20, 3
    %p423 = pnand %p421, %p422
    %p424 = pneg %p423
    // Predicated region
    $region73: #{transformer_xl_forward.4} parent=5 // pred_check
      _
    $region74: #{transformer_xl_forward.4} parent=5 // pred_check_branch
      %426 = sbr.rel (%p423) target = $region76
    $region75: #{transformer_xl_forward.4} parent=5 // pred_region
      %s427 = ssub.s32 %s20, 1
      %p428 = scmp.lt.s32.totalorder %s25, 1
      %s429 = scalar_select %p428, %s25, 1
      %s430 = smul.addr %s429, 2
      %s431 = smul.addr %s430, 8
      %s432 = scalar_lea.vmem %s0, %s431
      %p433 = pneg %p46
      %p434 = pneg %p43
      %p435 = scmp.lt.s32.totalorder %s25, 1
      %s436 = scalar_select %p435, %s25, 1
      %s437 = smul.addr %s436, 2
      %s438 = smul.addr %s437, 8
      %s439 = scalar_lea.vmem %s1, %s438
      %p440 = pneg %p72
      %p441 = pneg %p69
      %p442 = pneg %p93
      %p443 = pneg %p90
      %p444 = pneg %p114
      %p445 = pneg %p111
      %p446 = pneg %p135
      %p447 = pneg %p132
      %p448 = pneg %p156
      %p449 = pneg %p153
      %p450 = pneg %p177
      %p451 = pneg %p174
      %p452 = pneg %p198
      %p453 = pneg %p195
      %p454 = pneg %p219
      %p455 = pneg %p216
      %p456 = pneg %p240
      %p457 = pneg %p237
      %p458 = pneg %p261
      %p459 = pneg %p258
      %p460 = pneg %p282
      %p461 = pneg %p279
      %p462 = pneg %p303
      %p463 = pneg %p300
      %p464 = pneg %p324
      %p465 = pneg %p321
      %p466 = pneg %p350
      %p467 = pneg %p347
      %p468 = scmp.lt.s32.totalorder %s25, 1
      %s469 = scalar_select %p468, %s25, 1
      %s470 = smul.addr %s469, 2
      %s471 = smul.addr %s470, 8
      %s472 = scalar_lea.vmem %s14, %s471
      %p473 = scmp.lt.s32.totalorder %s25, 1
      %s474 = scalar_select %p473, %s25, 1
      %s475 = smul.addr %s474, 2
      %s476 = smul.addr %s475, 8
      %s477 = scalar_lea.vmem %s0, %s476
      %p478 = scmp.lt.s32.totalorder %s25, 1
      %s479 = scalar_select %p478, %s25, 1
      %s480 = smul.addr %s479, 2
      %s481 = smul.addr %s480, 8
      %s482 = scalar_lea.vmem %s1, %s481
      %p483 = scmp.lt.s32.totalorder %s25, 1
      %s484 = scalar_select %p483, %s25, 1
      %s485 = smul.addr %s484, 2
      %s486 = smul.addr %s485, 8
      %s487 = scalar_lea.vmem %s14, %s486
      %v488 = vld [vmem:[%s477] sm:$0xff]
      %v489 = vld [vmem:[%s477 + $0x8] sm:$0xff]
      %v490 = vld [vmem:[%s482] sm:$0xff]
      %v491 = vld [vmem:[%s482 + $0x8] sm:$0xff]
      %v492 = vld [vmem:[%s2] sm:$0xff]
      %v493 = vld [vmem:[%s2 + $0x8] sm:$0xff]
      %v494 = vld [vmem:[%s2 + $0x10] sm:$0xff]
      %v495 = vld [vmem:[%s2 + $0x18] sm:$0xff]
      %v496 = vld [vmem:[%s2 + $0x20] sm:$0xff]
      %v497 = vld [vmem:[%s2 + $0x28] sm:$0xff]
      %v498 = vld [vmem:[%s2 + $0x30] sm:$0xff]
      %v499 = vld [vmem:[%s2 + $0x38] sm:$0xff]
      %v500 = vld [vmem:[%s2 + $0x40] sm:$0xff]
      %v501 = vld [vmem:[%s2 + $0x48] sm:$0xff]
      %v502 = vld [vmem:[%s2 + $0x50] sm:$0xff]
      %v503 = vld [vmem:[%s2 + $0x58] sm:$0xff]
      %v504 = vld [vmem:[%s2 + $0x60] sm:$0xff]
      %v505 = vld [vmem:[%s2 + $0x68] sm:$0xff]
      %v506 = vld [vmem:[%s2 + $0x70] sm:$0xff]
      %v507 = vld [vmem:[%s2 + $0x78] sm:$0xff]
      %v508 = vld [vmem:[%s2 + $0x80] sm:$0xff]
      %v509 = vld [vmem:[%s2 + $0x88] sm:$0xff]
      %v510 = vld [vmem:[%s2 + $0x90] sm:$0xff]
      %v511 = vld [vmem:[%s2 + $0x98] sm:$0xff]
      %v512 = vld [vmem:[%s2 + $0xa0] sm:$0xff]
      %v513 = vld [vmem:[%s2 + $0xa8] sm:$0xff]
      %v514 = vld [vmem:[%s2 + $0xb0] sm:$0xff]
      %v515 = vld [vmem:[%s2 + $0xb8] sm:$0xff]
      %v516 = vld [vmem:[%s2 + $0xc0] sm:$0xff]
      %v517 = vld [vmem:[%s2 + $0xc8] sm:$0xff]
      %v518 = vld [vmem:[%s2 + $0xd0] sm:$0xff]
      %v519 = vld [vmem:[%s2 + $0xd8] sm:$0xff]
      %v520 = vld [vmem:[%s2 + $0xe0] sm:$0xff]
      %v521 = vld [vmem:[%s2 + $0xe8] sm:$0xff]
      %v522 = vld [vmem:[%s2 + $0xf0] sm:$0xff]
      %v523 = vld [vmem:[%s2 + $0xf8] sm:$0xff]
      %v524 = vld [vmem:[%s2 + $0x100] sm:$0xff]
      %v525 = vld [vmem:[%s2 + $0x108] sm:$0xff]
      %v526 = vld [vmem:[%s2 + $0x110] sm:$0xff]
      %v527 = vld [vmem:[%s2 + $0x118] sm:$0xff]
      %v528 = vld [vmem:[%s2 + $0x120] sm:$0xff]
      %v529 = vld [vmem:[%s2 + $0x128] sm:$0xff]
      %v530 = vld [vmem:[%s2 + $0x130] sm:$0xff]
      %v531 = vld [vmem:[%s2 + $0x138] sm:$0xff]
      %v532 = vld [vmem:[%s2 + $0x140] sm:$0xff]
      %v533 = vld [vmem:[%s2 + $0x148] sm:$0xff]
      %v534 = vld [vmem:[%s2 + $0x150] sm:$0xff]
      %v535 = vld [vmem:[%s2 + $0x158] sm:$0xff]
      %v536 = vld [vmem:[%s2 + $0x160] sm:$0xff]
      %v537 = vld [vmem:[%s2 + $0x168] sm:$0xff]
      %v538 = vld [vmem:[%s2 + $0x170] sm:$0xff]
      %v539 = vld [vmem:[%s2 + $0x178] sm:$0xff]
      %v540 = vld [vmem:[%s3] sm:$0x7]
      %v542 = vlaneseq
      %v543 = vshrl.u32 %v542, 7
      %v544 = vsub.s32 0, %v543
      %v545 = vrot.slane %v540, %v544
      %v546 = vlaneseq
      %v547 = vshrl.u32 %v546, 7
      %v548 = vsub.s32 1, %v547
      %v549 = vrot.slane %v540, %v548
      %v550 = vlaneseq
      %v551 = vshrl.u32 %v550, 7
      %v552 = vsub.s32 2, %v551
      %v553 = vrot.slane %v540, %v552
      %557 = vmatprep.subr.mxu0 %v538
      %558 = vmatpush1.msra.mxu0 %v537
      %559 = vmatprep.subr.mxu0 %v535
      %560 = vmatpush1.msra.mxu0 %v534
      %561 = vmatprep.subr.mxu0 %v532
      %562 = vmatpush1.msra.mxu0 %v531
      %563 = vmatprep.subr.mxu0 %v529
      %564 = vmatpush1.msra.mxu0 %v528
      %565 = vmatprep.subr.mxu0 %v526
      %566 = vmatpush1.msra.mxu0 %v525
      %567 = vmatprep.subr.mxu0 %v523
      %568 = vmatpush1.msra.mxu0 %v522
      %569 = vmatprep.subr.mxu0 %v520
      %570 = vmatpush1.msra.mxu0 %v519
      %571 = vmatprep.subr.mxu0 %v517
      %572 = vmatpush1.msra.mxu0 %v516
      %573 = vmatprep.subr.mxu0 %v514
      %574 = vmatpush1.msra.mxu0 %v513
      %575 = vmatprep.subr.mxu0 %v511
      %576 = vmatpush1.msra.mxu0 %v510
      %577 = vmatprep.subr.mxu0 %v508
      %578 = vmatpush1.msra.mxu0 %v507
      %579 = vmatprep.subr.mxu0 %v505
      %580 = vmatpush1.msra.mxu0 %v504
      %581 = vmatprep.subr.mxu0 %v502
      %582 = vmatpush1.msra.mxu0 %v501
      %583 = vmatprep.subr.mxu0 %v499
      %584 = vmatpush1.msra.mxu0 %v498
      %585 = vmatprep.subr.mxu0 %v496
      %586 = vmatpush1.msra.mxu0 %v495
      %587 = vmatprep.subr.mxu0 %v493
      %588 = vmatpush1.msra.mxu0 %v492
      %589 = vmatprep.subr.mxu0 0.0
      %590 = vmatpush2.msra.mxu0 0.0
      %591 = vmatprep.subr.mxu0 0.0
      %592 = vmatpush2.msra.mxu0 0.0
      %593 = vmatprep.subr.mxu0 0.0
      %594 = vmatpush2.msra.mxu0 0.0
      %595 = vmatprep.subr.mxu0 0.0
      %596 = vmatpush2.msra.mxu0 0.0
      %597 = vmatprep.subr.mxu0 0.0
      %598 = vmatpush2.msra.mxu0 0.0
      %599 = vmatprep.subr.mxu0 0.0
      %600 = vmatpush2.msra.mxu0 0.0
      %601 = vmatprep.subr.mxu0 0.0
      %602 = vmatpush2.msra.mxu0 0.0
      %603 = vmatprep.subr.mxu0 0.0
      %604 = vmatpush2.msra.mxu0 0.0
      %605 = vmatprep.subr.mxu0 0.0
      %606 = vmatpush2.msra.mxu0 0.0
      %607 = vmatprep.subr.mxu0 0.0
      %608 = vmatpush2.msra.mxu0 0.0
      %609 = vmatprep.subr.mxu0 0.0
      %610 = vmatpush2.msra.mxu0 0.0
      %611 = vmatprep.subr.mxu0 0.0
      %612 = vmatpush2.msra.mxu0 0.0
      %613 = vmatprep.subr.mxu0 0.0
      %614 = vmatpush2.msra.mxu0 0.0
      %615 = vmatprep.subr.mxu0 0.0
      %616 = vmatpush2.msra.mxu0 0.0
      %617 = vmatprep.subr.mxu0 0.0
      %618 = vmatpush2.msra.mxu0 0.0
      %619 = vmatprep.subr.mxu0 0.0
      %620 = vmatpush2.msra.mxu0 0.0
      %621 = vmatprep.mubr.f32.mxu0 0.0
      %622 = vmatmul.mubr.f32.gmra.mxu0 %v488
      %v623 = vpop.f32.mrf.mxu0
      %v624 = vadd.f32 %v545, %v623
      %v625 = vpop.f32.mrf.mxu0
      %v626 = vadd.f32 %v549, %v625
      %627 = vmatprep.mubr.f32.mxu0 0.0
      %628 = vmatmul.mubr.f32.gmra.mxu0 %v489
      %v629 = vpop.f32.mrf.mxu0
      %v630 = vadd.f32 %v545, %v629
      %v631 = vpop.f32.mrf.mxu0
      %v632 = vadd.f32 %v549, %v631
      %633 = vdwg.mxu0
      %634 = vmatprep.subr.mxu0 0.0
      %635 = vmatpush1.msra.mxu0 %v539
      %636 = vmatprep.subr.mxu0 0.0
      %637 = vmatpush1.msra.mxu0 %v536
      %638 = vmatprep.subr.mxu0 0.0
      %639 = vmatpush1.msra.mxu0 %v533
      %640 = vmatprep.subr.mxu0 0.0
      %641 = vmatpush1.msra.mxu0 %v530
      %642 = vmatprep.subr.mxu0 0.0
      %643 = vmatpush1.msra.mxu0 %v527
      %644 = vmatprep.subr.mxu0 0.0
      %645 = vmatpush1.msra.mxu0 %v524
      %646 = vmatprep.subr.mxu0 0.0
      %647 = vmatpush1.msra.mxu0 %v521
      %648 = vmatprep.subr.mxu0 0.0
      %649 = vmatpush1.msra.mxu0 %v518
      %650 = vmatprep.subr.mxu0 0.0
      %651 = vmatpush1.msra.mxu0 %v515
      %652 = vmatprep.subr.mxu0 0.0
      %653 = vmatpush1.msra.mxu0 %v512
      %654 = vmatprep.subr.mxu0 0.0
      %655 = vmatpush1.msra.mxu0 %v509
      %656 = vmatprep.subr.mxu0 0.0
      %657 = vmatpush1.msra.mxu0 %v506
      %658 = vmatprep.subr.mxu0 0.0
      %659 = vmatpush1.msra.mxu0 %v503
      %660 = vmatprep.subr.mxu0 0.0
      %661 = vmatpush1.msra.mxu0 %v500
      %662 = vmatprep.subr.mxu0 0.0
      %663 = vmatpush1.msra.mxu0 %v497
      %664 = vmatprep.subr.mxu0 0.0
      %665 = vmatpush1.msra.mxu0 %v494
      %666 = vmatprep.subr.mxu0 0.0
      %667 = vmatpush2.msra.mxu0 0.0
      %668 = vmatprep.subr.mxu0 0.0
      %669 = vmatpush2.msra.mxu0 0.0
      %670 = vmatprep.subr.mxu0 0.0
      %671 = vmatpush2.msra.mxu0 0.0
      %672 = vmatprep.subr.mxu0 0.0
      %673 = vmatpush2.msra.mxu0 0.0
      %674 = vmatprep.subr.mxu0 0.0
      %675 = vmatpush2.msra.mxu0 0.0
      %676 = vmatprep.subr.mxu0 0.0
      %677 = vmatpush2.msra.mxu0 0.0
      %678 = vmatprep.subr.mxu0 0.0
      %679 = vmatpush2.msra.mxu0 0.0
      %680 = vmatprep.subr.mxu0 0.0
      %681 = vmatpush2.msra.mxu0 0.0
      %682 = vmatprep.subr.mxu0 0.0
      %683 = vmatpush2.msra.mxu0 0.0
      %684 = vmatprep.subr.mxu0 0.0
      %685 = vmatpush2.msra.mxu0 0.0
      %686 = vmatprep.subr.mxu0 0.0
      %687 = vmatpush2.msra.mxu0 0.0
      %688 = vmatprep.subr.mxu0 0.0
      %689 = vmatpush2.msra.mxu0 0.0
      %690 = vmatprep.subr.mxu0 0.0
      %691 = vmatpush2.msra.mxu0 0.0
      %692 = vmatprep.subr.mxu0 0.0
      %693 = vmatpush2.msra.mxu0 0.0
      %694 = vmatprep.subr.mxu0 0.0
      %695 = vmatpush2.msra.mxu0 0.0
      %696 = vmatprep.subr.mxu0 0.0
      %697 = vmatpush2.msra.mxu0 0.0
      %698 = vmatprep.mubr.f32.mxu0 0.0
      %699 = vmatmul.mubr.f32.gmra.mxu0 %v488
      %v700 = vpop.f32.mrf.mxu0
      %v701 = vadd.f32 %v553, %v700
      %v702 = vpop.f32.mrf.mxu0
      %703 = vmatprep.mubr.f32.mxu0 0.0
      %704 = vmatmul.mubr.f32.gmra.mxu0 %v489
      %v705 = vpop.f32.mrf.mxu0
      %v706 = vadd.f32 %v553, %v705
      %v707 = vpop.f32.mrf.mxu0
      %708 = vdwg.mxu0
      %v709 = vld [vmem:[%s4] sm:$0xff]
      %v710 = vld [vmem:[%s4 + $0x8] sm:$0xff]
      %v711 = vld [vmem:[%s4 + $0x10] sm:$0xff]
      %v712 = vld [vmem:[%s4 + $0x18] sm:$0xff]
      %v713 = vld [vmem:[%s4 + $0x20] sm:$0xff]
      %v714 = vld [vmem:[%s4 + $0x28] sm:$0xff]
      %v715 = vld [vmem:[%s4 + $0x30] sm:$0xff]
      %v716 = vld [vmem:[%s4 + $0x38] sm:$0xff]
      %v717 = vld [vmem:[%s4 + $0x40] sm:$0xff]
      %v718 = vld [vmem:[%s4 + $0x48] sm:$0xff]
      %v719 = vld [vmem:[%s4 + $0x50] sm:$0xff]
      %v720 = vld [vmem:[%s4 + $0x58] sm:$0xff]
      %v721 = vld [vmem:[%s4 + $0x60] sm:$0xff]
      %v722 = vld [vmem:[%s4 + $0x68] sm:$0xff]
      %v723 = vld [vmem:[%s4 + $0x70] sm:$0xff]
      %v724 = vld [vmem:[%s4 + $0x78] sm:$0xff]
      %v725 = vld [vmem:[%s5] sm:$0x1]
      %v727 = vlaneseq
      %v728 = vshrl.u32 %v727, 7
      %v729 = vsub.s32 0, %v728
      %v730 = vrot.slane %v725, %v729
      %vm732 = vcmask 261120
      %v734 = vsel %vm732, %v624, 0
      %v737 = vsel %vm732, %v630, 0
      %v740 = vsel %vm732, %v626, 0
      %v743 = vsel %vm732, %v632, 0
      %745 = vmatprep.subr.mxu0 0.0
      %746 = vmatpush1.xpose.msra.mxu0 0.0
      %747 = vmatprep.subr.mxu0 0.0
      %748 = vmatpush1.xpose.msra.mxu0 0.0
      %749 = vmatprep.subr.mxu0 0.0
      %750 = vmatpush1.xpose.msra.mxu0 0.0
      %751 = vmatprep.subr.mxu0 0.0
      %752 = vmatpush1.xpose.msra.mxu0 0.0
      %753 = vmatprep.subr.mxu0 0.0
      %754 = vmatpush1.xpose.msra.mxu0 0.0
      %755 = vmatprep.subr.mxu0 0.0
      %756 = vmatpush1.xpose.msra.mxu0 0.0
      %757 = vmatprep.subr.mxu0 0.0
      %758 = vmatpush1.xpose.msra.mxu0 0.0
      %759 = vmatprep.subr.mxu0 0.0
      %760 = vmatpush1.xpose.msra.mxu0 0.0
      %761 = vmatprep.subr.mxu0 0.0
      %762 = vmatpush1.xpose.msra.mxu0 0.0
      %763 = vmatprep.subr.mxu0 0.0
      %764 = vmatpush1.xpose.msra.mxu0 0.0
      %765 = vmatprep.subr.mxu0 0.0
      %766 = vmatpush1.xpose.msra.mxu0 0.0
      %767 = vmatprep.subr.mxu0 0.0
      %768 = vmatpush1.xpose.msra.mxu0 0.0
      %769 = vmatprep.subr.mxu0 0.0
      %770 = vmatpush1.xpose.msra.mxu0 0.0
      %771 = vmatprep.subr.mxu0 0.0
      %772 = vmatpush1.xpose.msra.mxu0 0.0
      %773 = vmatprep.subr.mxu0 0.0
      %774 = vmatpush1.xpose.msra.mxu0 %v743
      %775 = vmatprep.subr.mxu0 0.0
      %776 = vmatpush1.xpose.msra.mxu0 %v740
      %777 = vmatprep.subr.mxu0 0.0
      %778 = vmatpush2.xpose.msra.mxu0 0.0
      %779 = vmatprep.subr.mxu0 0.0
      %780 = vmatpush2.xpose.msra.mxu0 0.0
      %781 = vmatprep.subr.mxu0 0.0
      %782 = vmatpush2.xpose.msra.mxu0 0.0
      %783 = vmatprep.subr.mxu0 0.0
      %784 = vmatpush2.xpose.msra.mxu0 0.0
      %785 = vmatprep.subr.mxu0 0.0
      %786 = vmatpush2.xpose.msra.mxu0 0.0
      %787 = vmatprep.subr.mxu0 0.0
      %788 = vmatpush2.xpose.msra.mxu0 0.0
      %789 = vmatprep.subr.mxu0 0.0
      %790 = vmatpush2.xpose.msra.mxu0 0.0
      %791 = vmatprep.subr.mxu0 0.0
      %792 = vmatpush2.xpose.msra.mxu0 0.0
      %793 = vmatprep.subr.mxu0 0.0
      %794 = vmatpush2.xpose.msra.mxu0 0.0
      %795 = vmatprep.subr.mxu0 0.0
      %796 = vmatpush2.xpose.msra.mxu0 0.0
      %797 = vmatprep.subr.mxu0 0.0
      %798 = vmatpush2.xpose.msra.mxu0 0.0
      %799 = vmatprep.subr.mxu0 0.0
      %800 = vmatpush2.xpose.msra.mxu0 0.0
      %801 = vmatprep.subr.mxu0 0.0
      %802 = vmatpush2.xpose.msra.mxu0 0.0
      %803 = vmatprep.subr.mxu0 0.0
      %804 = vmatpush2.xpose.msra.mxu0 0.0
      %805 = vmatprep.subr.mxu0 0.0
      %806 = vmatpush2.xpose.msra.mxu0 0.0
      %807 = vmatprep.subr.mxu0 0.0
      %808 = vmatpush2.xpose.msra.mxu0 0.0
      %809 = vmatprep.mubr.f32.mxu0 0.0
      %810 = vmatmul.mubr.f32.gmra.mxu0 %v734
      %v811 = vpop.f32.mrf.mxu0
      %v812 = vadd.f32 0.0, %v811
      %v813 = vpop.f32.mrf.mxu0
      %814 = vmatprep.mubr.f32.mxu0 0.0
      %815 = vmatmul.mubr.f32.gmra.mxu0 %v737
      %v816 = vpop.f32.mrf.mxu0
      %v817 = vadd.f32 0.0, %v816
      %v818 = vpop.f32.mrf.mxu0
      %819 = vdwg.mxu0
      %v820 = vmul.f32 %v812, 0.17677669
      %v821 = vmul.f32 %v817, 0.17677669
      %v822 = vadd.f32 %v820, %v490
      %v823 = vadd.f32 %v821, %v491
      %vm824 = vcmask 130048
      %v825 = vsel %vm824, %v822, -inf
      %826 = vmax.xlane.f32.xlu0 %v825
      %v827 = vpop.xlane.xlu0 %826
      %v828 = vsel %vm824, %v823, -inf
      %829 = vmax.xlane.f32.xlu0 %v828
      %v830 = vpop.xlane.xlu0 %829
      %v831 = vsub.f32 %v822, %v827
      %v832 = vsub.f32 %v823, %v830
      %v833 = vmul.f32 %v831, 1.442695
      %v834 = vpow.pop %v833
      %v835 = vmul.f32 %v832, 1.442695
      %v836 = vpow.pop %v835
      %v837 = vsel %vm824, %v834, 0.0
      %838 = vadd.xlane.f32.xlu0 %v837
      %v839 = vpop.xlane.xlu0 %838
      %v840 = vsel %vm824, %v836, 0.0
      %841 = vadd.xlane.f32.xlu0 %v840
      %v842 = vpop.xlane.xlu0 %841
      %v843 = vmax.f32 %v839, 1e-30
      %v844 = vmax.f32 %v842, 1e-30
      %v845 = vrcp.pop %v843
      %v846 = vrcp.pop %v844
      %v847 = vmul.f32 %v834, %v845
      %v848 = vmul.f32 %v836, %v846
      %v850 = vsel %vm824, %v847, 0
      %v853 = vsel %vm824, %v848, 0
      %855 = vmatprep.subr.mxu0 0.0
      %856 = vmatpush1.msra.mxu0 0.0
      %857 = vmatprep.subr.mxu0 0.0
      %858 = vmatpush1.msra.mxu0 0.0
      %859 = vmatprep.subr.mxu0 0.0
      %860 = vmatpush1.msra.mxu0 0.0
      %861 = vmatprep.subr.mxu0 0.0
      %862 = vmatpush1.msra.mxu0 0.0
      %863 = vmatprep.subr.mxu0 0.0
      %864 = vmatpush1.msra.mxu0 0.0
      %865 = vmatprep.subr.mxu0 0.0
      %866 = vmatpush1.msra.mxu0 0.0
      %867 = vmatprep.subr.mxu0 0.0
      %868 = vmatpush1.msra.mxu0 0.0
      %869 = vmatprep.subr.mxu0 0.0
      %870 = vmatpush1.msra.mxu0 0.0
      %871 = vmatprep.subr.mxu0 0.0
      %872 = vmatpush1.msra.mxu0 0.0
      %873 = vmatprep.subr.mxu0 0.0
      %874 = vmatpush1.msra.mxu0 0.0
      %875 = vmatprep.subr.mxu0 0.0
      %876 = vmatpush1.msra.mxu0 0.0
      %877 = vmatprep.subr.mxu0 0.0
      %878 = vmatpush1.msra.mxu0 0.0
      %879 = vmatprep.subr.mxu0 0.0
      %880 = vmatpush1.msra.mxu0 0.0
      %881 = vmatprep.subr.mxu0 0.0
      %882 = vmatpush1.msra.mxu0 0.0
      %883 = vmatprep.subr.mxu0 0.0
      %884 = vmatpush1.msra.mxu0 %v706
      %885 = vmatprep.subr.mxu0 0.0
      %886 = vmatpush1.msra.mxu0 %v701
      %887 = vmatprep.subr.mxu0 0.0
      %888 = vmatpush2.msra.mxu0 0.0
      %889 = vmatprep.subr.mxu0 0.0
      %890 = vmatpush2.msra.mxu0 0.0
      %891 = vmatprep.subr.mxu0 0.0
      %892 = vmatpush2.msra.mxu0 0.0
      %893 = vmatprep.subr.mxu0 0.0
      %894 = vmatpush2.msra.mxu0 0.0
      %895 = vmatprep.subr.mxu0 0.0
      %896 = vmatpush2.msra.mxu0 0.0
      %897 = vmatprep.subr.mxu0 0.0
      %898 = vmatpush2.msra.mxu0 0.0
      %899 = vmatprep.subr.mxu0 0.0
      %900 = vmatpush2.msra.mxu0 0.0
      %901 = vmatprep.subr.mxu0 0.0
      %902 = vmatpush2.msra.mxu0 0.0
      %903 = vmatprep.subr.mxu0 0.0
      %904 = vmatpush2.msra.mxu0 0.0
      %905 = vmatprep.subr.mxu0 0.0
      %906 = vmatpush2.msra.mxu0 0.0
      %907 = vmatprep.subr.mxu0 0.0
      %908 = vmatpush2.msra.mxu0 0.0
      %909 = vmatprep.subr.mxu0 0.0
      %910 = vmatpush2.msra.mxu0 0.0
      %911 = vmatprep.subr.mxu0 0.0
      %912 = vmatpush2.msra.mxu0 0.0
      %913 = vmatprep.subr.mxu0 0.0
      %914 = vmatpush2.msra.mxu0 0.0
      %915 = vmatprep.subr.mxu0 0.0
      %916 = vmatpush2.msra.mxu0 0.0
      %917 = vmatprep.subr.mxu0 0.0
      %918 = vmatpush2.msra.mxu0 0.0
      %919 = vmatprep.mubr.f32.mxu0 0.0
      %920 = vmatmul.mubr.f32.gmra.mxu0 %v850
      %v921 = vpop.f32.mrf.mxu0
      %v922 = vadd.f32 0.0, %v921
      %v923 = vpop.f32.mrf.mxu0
      %924 = vmatprep.mubr.f32.mxu0 0.0
      %925 = vmatmul.mubr.f32.gmra.mxu0 %v853
      %v926 = vpop.f32.mrf.mxu0
      %v927 = vadd.f32 0.0, %v926
      %v928 = vpop.f32.mrf.mxu0
      %929 = vdwg.mxu0
      %v931 = vsel %vm732, %v922, 0
      %v934 = vsel %vm732, %v927, 0
      %936 = vmatprep.subr.mxu0 0.0
      %937 = vmatpush1.msra.mxu0 0.0
      %938 = vmatprep.subr.mxu0 0.0
      %939 = vmatpush1.msra.mxu0 0.0
      %940 = vmatprep.subr.mxu0 0.0
      %941 = vmatpush1.msra.mxu0 0.0
      %942 = vmatprep.subr.mxu0 0.0
      %943 = vmatpush1.msra.mxu0 0.0
      %944 = vmatprep.subr.mxu0 0.0
      %945 = vmatpush1.msra.mxu0 0.0
      %946 = vmatprep.subr.mxu0 0.0
      %947 = vmatpush1.msra.mxu0 0.0
      %948 = vmatprep.subr.mxu0 0.0
      %949 = vmatpush1.msra.mxu0 0.0
      %950 = vmatprep.subr.mxu0 0.0
      %951 = vmatpush1.msra.mxu0 0.0
      %952 = vmatprep.subr.mxu0 0.0
      %953 = vmatpush1.msra.mxu0 0.0
      %954 = vmatprep.subr.mxu0 0.0
      %955 = vmatpush1.msra.mxu0 0.0
      %956 = vmatprep.subr.mxu0 0.0
      %957 = vmatpush1.msra.mxu0 0.0
      %958 = vmatprep.subr.mxu0 0.0
      %959 = vmatpush1.msra.mxu0 0.0
      %960 = vmatprep.subr.mxu0 0.0
      %961 = vmatpush1.msra.mxu0 %v712
      %962 = vmatprep.subr.mxu0 0.0
      %963 = vmatpush1.msra.mxu0 %v711
      %964 = vmatprep.subr.mxu0 0.0
      %965 = vmatpush1.msra.mxu0 %v710
      %966 = vmatprep.subr.mxu0 0.0
      %967 = vmatpush1.msra.mxu0 %v709
      %968 = vmatprep.subr.mxu0 0.0
      %969 = vmatpush2.msra.mxu0 0.0
      %970 = vmatprep.subr.mxu0 0.0
      %971 = vmatpush2.msra.mxu0 0.0
      %972 = vmatprep.subr.mxu0 0.0
      %973 = vmatpush2.msra.mxu0 0.0
      %974 = vmatprep.subr.mxu0 0.0
      %975 = vmatpush2.msra.mxu0 0.0
      %976 = vmatprep.subr.mxu0 0.0
      %977 = vmatpush2.msra.mxu0 0.0
      %978 = vmatprep.subr.mxu0 0.0
      %979 = vmatpush2.msra.mxu0 0.0
      %980 = vmatprep.subr.mxu0 0.0
      %981 = vmatpush2.msra.mxu0 0.0
      %982 = vmatprep.subr.mxu0 0.0
      %983 = vmatpush2.msra.mxu0 0.0
      %984 = vmatprep.subr.mxu0 0.0
      %985 = vmatpush2.msra.mxu0 0.0
      %986 = vmatprep.subr.mxu0 0.0
      %987 = vmatpush2.msra.mxu0 0.0
      %988 = vmatprep.subr.mxu0 0.0
      %989 = vmatpush2.msra.mxu0 0.0
      %990 = vmatprep.subr.mxu0 0.0
      %991 = vmatpush2.msra.mxu0 0.0
      %992 = vmatprep.subr.mxu0 0.0
      %993 = vmatpush2.msra.mxu0 0.0
      %994 = vmatprep.subr.mxu0 0.0
      %995 = vmatpush2.msra.mxu0 0.0
      %996 = vmatprep.subr.mxu0 0.0
      %997 = vmatpush2.msra.mxu0 0.0
      %998 = vmatprep.subr.mxu0 0.0
      %999 = vmatpush2.msra.mxu0 0.0
      %1000 = vmatprep.mubr.f32.mxu0 0.0
      %1001 = vmatmul.mubr.f32.gmra.mxu0 %v931
      %v1002 = vpop.f32.mrf.mxu0
      %v1003 = vadd.f32 0.0, %v1002
      %v1004 = vpop.f32.mrf.mxu0
      %1005 = vmatprep.mubr.f32.mxu0 0.0
      %1006 = vmatmul.mubr.f32.gmra.mxu0 %v934
      %v1007 = vpop.f32.mrf.mxu0
      %v1008 = vadd.f32 0.0, %v1007
      %v1009 = vpop.f32.mrf.mxu0
      %1010 = vdwg.mxu0
      %v1011 = vadd.f32 %v730, %v1003
      %v1012 = vadd.f32 %v730, %v1008
      %1013 = vrot.lane.b32.xlu0 %v624, 96
      %v1014 = vpop.permute.xlu0 %1013
      %1015 = vrot.lane.b32.xlu0 %v630, 96
      %v1016 = vpop.permute.xlu0 %1015
      %1017 = vrot.lane.b32.xlu0 %v626, 96
      %v1018 = vpop.permute.xlu0 %1017
      %1019 = vrot.lane.b32.xlu0 %v632, 96
      %v1020 = vpop.permute.xlu0 %1019
      %v1021 = vsel %vm732, %v1014, 0
      %v1023 = vsel %vm732, %v1016, 0
      %v1025 = vsel %vm732, %v1018, 0
      %v1027 = vsel %vm732, %v1020, 0
      %1029 = vmatprep.subr.mxu0 0.0
      %1030 = vmatpush1.xpose.msra.mxu0 0.0
      %1031 = vmatprep.subr.mxu0 0.0
      %1032 = vmatpush1.xpose.msra.mxu0 0.0
      %1033 = vmatprep.subr.mxu0 0.0
      %1034 = vmatpush1.xpose.msra.mxu0 0.0
      %1035 = vmatprep.subr.mxu0 0.0
      %1036 = vmatpush1.xpose.msra.mxu0 0.0
      %1037 = vmatprep.subr.mxu0 0.0
      %1038 = vmatpush1.xpose.msra.mxu0 0.0
      %1039 = vmatprep.subr.mxu0 0.0
      %1040 = vmatpush1.xpose.msra.mxu0 0.0
      %1041 = vmatprep.subr.mxu0 0.0
      %1042 = vmatpush1.xpose.msra.mxu0 0.0
      %1043 = vmatprep.subr.mxu0 0.0
      %1044 = vmatpush1.xpose.msra.mxu0 0.0
      %1045 = vmatprep.subr.mxu0 0.0
      %1046 = vmatpush1.xpose.msra.mxu0 0.0
      %1047 = vmatprep.subr.mxu0 0.0
      %1048 = vmatpush1.xpose.msra.mxu0 0.0
      %1049 = vmatprep.subr.mxu0 0.0
      %1050 = vmatpush1.xpose.msra.mxu0 0.0
      %1051 = vmatprep.subr.mxu0 0.0
      %1052 = vmatpush1.xpose.msra.mxu0 0.0
      %1053 = vmatprep.subr.mxu0 0.0
      %1054 = vmatpush1.xpose.msra.mxu0 0.0
      %1055 = vmatprep.subr.mxu0 0.0
      %1056 = vmatpush1.xpose.msra.mxu0 0.0
      %1057 = vmatprep.subr.mxu0 0.0
      %1058 = vmatpush1.xpose.msra.mxu0 %v1027
      %1059 = vmatprep.subr.mxu0 0.0
      %1060 = vmatpush1.xpose.msra.mxu0 %v1025
      %1061 = vmatprep.subr.mxu0 0.0
      %1062 = vmatpush2.xpose.msra.mxu0 0.0
      %1063 = vmatprep.subr.mxu0 0.0
      %1064 = vmatpush2.xpose.msra.mxu0 0.0
      %1065 = vmatprep.subr.mxu0 0.0
      %1066 = vmatpush2.xpose.msra.mxu0 0.0
      %1067 = vmatprep.subr.mxu0 0.0
      %1068 = vmatpush2.xpose.msra.mxu0 0.0
      %1069 = vmatprep.subr.mxu0 0.0
      %1070 = vmatpush2.xpose.msra.mxu0 0.0
      %1071 = vmatprep.subr.mxu0 0.0
      %1072 = vmatpush2.xpose.msra.mxu0 0.0
      %1073 = vmatprep.subr.mxu0 0.0
      %1074 = vmatpush2.xpose.msra.mxu0 0.0
      %1075 = vmatprep.subr.mxu0 0.0
      %1076 = vmatpush2.xpose.msra.mxu0 0.0
      %1077 = vmatprep.subr.mxu0 0.0
      %1078 = vmatpush2.xpose.msra.mxu0 0.0
      %1079 = vmatprep.subr.mxu0 0.0
      %1080 = vmatpush2.xpose.msra.mxu0 0.0
      %1081 = vmatprep.subr.mxu0 0.0
      %1082 = vmatpush2.xpose.msra.mxu0 0.0
      %1083 = vmatprep.subr.mxu0 0.0
      %1084 = vmatpush2.xpose.msra.mxu0 0.0
      %1085 = vmatprep.subr.mxu0 0.0
      %1086 = vmatpush2.xpose.msra.mxu0 0.0
      %1087 = vmatprep.subr.mxu0 0.0
      %1088 = vmatpush2.xpose.msra.mxu0 0.0
      %1089 = vmatprep.subr.mxu0 0.0
      %1090 = vmatpush2.xpose.msra.mxu0 0.0
      %1091 = vmatprep.subr.mxu0 0.0
      %1092 = vmatpush2.xpose.msra.mxu0 0.0
      %1093 = vmatprep.mubr.f32.mxu0 0.0
      %1094 = vmatmul.mubr.f32.gmra.mxu0 %v1021
      %v1095 = vpop.f32.mrf.mxu0
      %v1096 = vadd.f32 0.0, %v1095
      %v1097 = vpop.f32.mrf.mxu0
      %1098 = vmatprep.mubr.f32.mxu0 0.0
      %1099 = vmatmul.mubr.f32.gmra.mxu0 %v1023
      %v1100 = vpop.f32.mrf.mxu0
      %v1101 = vadd.f32 0.0, %v1100
      %v1102 = vpop.f32.mrf.mxu0
      %1103 = vdwg.mxu0
      %v1104 = vmul.f32 %v1096, 0.17677669
      %v1105 = vmul.f32 %v1101, 0.17677669
      %v1106 = vadd.f32 %v1104, %v490
      %v1107 = vadd.f32 %v1105, %v491
      %v1108 = vsel %vm824, %v1106, -inf
      %1109 = vmax.xlane.f32.xlu0 %v1108
      %v1110 = vpop.xlane.xlu0 %1109
      %v1111 = vsel %vm824, %v1107, -inf
      %1112 = vmax.xlane.f32.xlu0 %v1111
      %v1113 = vpop.xlane.xlu0 %1112
      %v1114 = vsub.f32 %v1106, %v1110
      %v1115 = vsub.f32 %v1107, %v1113
      %v1116 = vmul.f32 %v1114, 1.442695
      %v1117 = vpow.pop %v1116
      %v1118 = vmul.f32 %v1115, 1.442695
      %v1119 = vpow.pop %v1118
      %v1120 = vsel %vm824, %v1117, 0.0
      %1121 = vadd.xlane.f32.xlu0 %v1120
      %v1122 = vpop.xlane.xlu0 %1121
      %v1123 = vsel %vm824, %v1119, 0.0
      %1124 = vadd.xlane.f32.xlu0 %v1123
      %v1125 = vpop.xlane.xlu0 %1124
      %v1126 = vmax.f32 %v1122, 1e-30
      %v1127 = vmax.f32 %v1125, 1e-30
      %v1128 = vrcp.pop %v1126
      %v1129 = vrcp.pop %v1127
      %v1130 = vmul.f32 %v1117, %v1128
      %v1131 = vmul.f32 %v1119, %v1129
      %1134 = vrot.lane.b32.xlu0 %v701, 96
      %v1135 = vpop.permute.xlu0 %1134
      %1136 = vrot.lane.b32.xlu0 %v706, 96
      %v1137 = vpop.permute.xlu0 %1136
      %v1141 = vsel %vm824, %v1130, 0
      %v1144 = vsel %vm824, %v1131, 0
      %1146 = vmatprep.subr.mxu0 0.0
      %1147 = vmatpush1.msra.mxu0 0.0
      %1148 = vmatprep.subr.mxu0 0.0
      %1149 = vmatpush1.msra.mxu0 0.0
      %1150 = vmatprep.subr.mxu0 0.0
      %1151 = vmatpush1.msra.mxu0 0.0
      %1152 = vmatprep.subr.mxu0 0.0
      %1153 = vmatpush1.msra.mxu0 0.0
      %1154 = vmatprep.subr.mxu0 0.0
      %1155 = vmatpush1.msra.mxu0 0.0
      %1156 = vmatprep.subr.mxu0 0.0
      %1157 = vmatpush1.msra.mxu0 0.0
      %1158 = vmatprep.subr.mxu0 0.0
      %1159 = vmatpush1.msra.mxu0 0.0
      %1160 = vmatprep.subr.mxu0 0.0
      %1161 = vmatpush1.msra.mxu0 0.0
      %1162 = vmatprep.subr.mxu0 0.0
      %1163 = vmatpush1.msra.mxu0 0.0
      %1164 = vmatprep.subr.mxu0 0.0
      %1165 = vmatpush1.msra.mxu0 0.0
      %1166 = vmatprep.subr.mxu0 0.0
      %1167 = vmatpush1.msra.mxu0 0.0
      %1168 = vmatprep.subr.mxu0 0.0
      %1169 = vmatpush1.msra.mxu0 0.0
      %1170 = vmatprep.subr.mxu0 0.0
      %1171 = vmatpush1.msra.mxu0 0.0
      %1172 = vmatprep.subr.mxu0 0.0
      %1173 = vmatpush1.msra.mxu0 0.0
      %1174 = vmatprep.subr.mxu0 0.0
      %1175 = vmatpush1.msra.mxu0 %v1137
      %1176 = vmatprep.subr.mxu0 0.0
      %1177 = vmatpush1.msra.mxu0 %v1135
      %1178 = vmatprep.subr.mxu0 0.0
      %1179 = vmatpush2.msra.mxu0 0.0
      %1180 = vmatprep.subr.mxu0 0.0
      %1181 = vmatpush2.msra.mxu0 0.0
      %1182 = vmatprep.subr.mxu0 0.0
      %1183 = vmatpush2.msra.mxu0 0.0
      %1184 = vmatprep.subr.mxu0 0.0
      %1185 = vmatpush2.msra.mxu0 0.0
      %1186 = vmatprep.subr.mxu0 0.0
      %1187 = vmatpush2.msra.mxu0 0.0
      %1188 = vmatprep.subr.mxu0 0.0
      %1189 = vmatpush2.msra.mxu0 0.0
      %1190 = vmatprep.subr.mxu0 0.0
      %1191 = vmatpush2.msra.mxu0 0.0
      %1192 = vmatprep.subr.mxu0 0.0
      %1193 = vmatpush2.msra.mxu0 0.0
      %1194 = vmatprep.subr.mxu0 0.0
      %1195 = vmatpush2.msra.mxu0 0.0
      %1196 = vmatprep.subr.mxu0 0.0
      %1197 = vmatpush2.msra.mxu0 0.0
      %1198 = vmatprep.subr.mxu0 0.0
      %1199 = vmatpush2.msra.mxu0 0.0
      %1200 = vmatprep.subr.mxu0 0.0
      %1201 = vmatpush2.msra.mxu0 0.0
      %1202 = vmatprep.subr.mxu0 0.0
      %1203 = vmatpush2.msra.mxu0 0.0
      %1204 = vmatprep.subr.mxu0 0.0
      %1205 = vmatpush2.msra.mxu0 0.0
      %1206 = vmatprep.subr.mxu0 0.0
      %1207 = vmatpush2.msra.mxu0 0.0
      %1208 = vmatprep.subr.mxu0 0.0
      %1209 = vmatpush2.msra.mxu0 0.0
      %1210 = vmatprep.mubr.f32.mxu0 0.0
      %1211 = vmatmul.mubr.f32.gmra.mxu0 %v1141
      %v1212 = vpop.f32.mrf.mxu0
      %v1213 = vadd.f32 0.0, %v1212
      %v1214 = vpop.f32.mrf.mxu0
      %1215 = vmatprep.mubr.f32.mxu0 0.0
      %1216 = vmatmul.mubr.f32.gmra.mxu0 %v1144
      %v1217 = vpop.f32.mrf.mxu0
      %v1218 = vadd.f32 0.0, %v1217
      %v1219 = vpop.f32.mrf.mxu0
      %1220 = vdwg.mxu0
      %v1222 = vsel %vm732, %v1213, 0
      %v1225 = vsel %vm732, %v1218, 0
      %1227 = vmatprep.subr.mxu0 0.0
      %1228 = vmatpush1.msra.mxu0 0.0
      %1229 = vmatprep.subr.mxu0 0.0
      %1230 = vmatpush1.msra.mxu0 0.0
      %1231 = vmatprep.subr.mxu0 0.0
      %1232 = vmatpush1.msra.mxu0 0.0
      %1233 = vmatprep.subr.mxu0 0.0
      %1234 = vmatpush1.msra.mxu0 0.0
      %1235 = vmatprep.subr.mxu0 0.0
      %1236 = vmatpush1.msra.mxu0 0.0
      %1237 = vmatprep.subr.mxu0 0.0
      %1238 = vmatpush1.msra.mxu0 0.0
      %1239 = vmatprep.subr.mxu0 0.0
      %1240 = vmatpush1.msra.mxu0 0.0
      %1241 = vmatprep.subr.mxu0 0.0
      %1242 = vmatpush1.msra.mxu0 0.0
      %1243 = vmatprep.subr.mxu0 0.0
      %1244 = vmatpush1.msra.mxu0 0.0
      %1245 = vmatprep.subr.mxu0 0.0
      %1246 = vmatpush1.msra.mxu0 0.0
      %1247 = vmatprep.subr.mxu0 0.0
      %1248 = vmatpush1.msra.mxu0 0.0
      %1249 = vmatprep.subr.mxu0 0.0
      %1250 = vmatpush1.msra.mxu0 0.0
      %1251 = vmatprep.subr.mxu0 0.0
      %1252 = vmatpush1.msra.mxu0 %v716
      %1253 = vmatprep.subr.mxu0 0.0
      %1254 = vmatpush1.msra.mxu0 %v715
      %1255 = vmatprep.subr.mxu0 0.0
      %1256 = vmatpush1.msra.mxu0 %v714
      %1257 = vmatprep.subr.mxu0 0.0
      %1258 = vmatpush1.msra.mxu0 %v713
      %1259 = vmatprep.subr.mxu0 0.0
      %1260 = vmatpush2.msra.mxu0 0.0
      %1261 = vmatprep.subr.mxu0 0.0
      %1262 = vmatpush2.msra.mxu0 0.0
      %1263 = vmatprep.subr.mxu0 0.0
      %1264 = vmatpush2.msra.mxu0 0.0
      %1265 = vmatprep.subr.mxu0 0.0
      %1266 = vmatpush2.msra.mxu0 0.0
      %1267 = vmatprep.subr.mxu0 0.0
      %1268 = vmatpush2.msra.mxu0 0.0
      %1269 = vmatprep.subr.mxu0 0.0
      %1270 = vmatpush2.msra.mxu0 0.0
      %1271 = vmatprep.subr.mxu0 0.0
      %1272 = vmatpush2.msra.mxu0 0.0
      %1273 = vmatprep.subr.mxu0 0.0
      %1274 = vmatpush2.msra.mxu0 0.0
      %1275 = vmatprep.subr.mxu0 0.0
      %1276 = vmatpush2.msra.mxu0 0.0
      %1277 = vmatprep.subr.mxu0 0.0
      %1278 = vmatpush2.msra.mxu0 0.0
      %1279 = vmatprep.subr.mxu0 0.0
      %1280 = vmatpush2.msra.mxu0 0.0
      %1281 = vmatprep.subr.mxu0 0.0
      %1282 = vmatpush2.msra.mxu0 0.0
      %1283 = vmatprep.subr.mxu0 0.0
      %1284 = vmatpush2.msra.mxu0 0.0
      %1285 = vmatprep.subr.mxu0 0.0
      %1286 = vmatpush2.msra.mxu0 0.0
      %1287 = vmatprep.subr.mxu0 0.0
      %1288 = vmatpush2.msra.mxu0 0.0
      %1289 = vmatprep.subr.mxu0 0.0
      %1290 = vmatpush2.msra.mxu0 0.0
      %1291 = vmatprep.mubr.f32.mxu0 0.0
      %1292 = vmatmul.mubr.f32.gmra.mxu0 %v1222
      %v1293 = vpop.f32.mrf.mxu0
      %v1294 = vadd.f32 0.0, %v1293
      %v1295 = vpop.f32.mrf.mxu0
      %1296 = vmatprep.mubr.f32.mxu0 0.0
      %1297 = vmatmul.mubr.f32.gmra.mxu0 %v1225
      %v1298 = vpop.f32.mrf.mxu0
      %v1299 = vadd.f32 0.0, %v1298
      %v1300 = vpop.f32.mrf.mxu0
      %1301 = vdwg.mxu0
      %v1302 = vadd.f32 %v1011, %v1294
      %v1303 = vadd.f32 %v1012, %v1299
      %1304 = vrot.lane.b32.xlu0 %v624, 64
      %v1305 = vpop.permute.xlu0 %1304
      %1306 = vrot.lane.b32.xlu0 %v630, 64
      %v1307 = vpop.permute.xlu0 %1306
      %1308 = vrot.lane.b32.xlu0 %v626, 64
      %v1309 = vpop.permute.xlu0 %1308
      %1310 = vrot.lane.b32.xlu0 %v632, 64
      %v1311 = vpop.permute.xlu0 %1310
      %v1312 = vsel %vm732, %v1305, 0
      %v1314 = vsel %vm732, %v1307, 0
      %v1316 = vsel %vm732, %v1309, 0
      %v1318 = vsel %vm732, %v1311, 0
      %1320 = vmatprep.subr.mxu0 0.0
      %1321 = vmatpush1.xpose.msra.mxu0 0.0
      %1322 = vmatprep.subr.mxu0 0.0
      %1323 = vmatpush1.xpose.msra.mxu0 0.0
      %1324 = vmatprep.subr.mxu0 0.0
      %1325 = vmatpush1.xpose.msra.mxu0 0.0
      %1326 = vmatprep.subr.mxu0 0.0
      %1327 = vmatpush1.xpose.msra.mxu0 0.0
      %1328 = vmatprep.subr.mxu0 0.0
      %1329 = vmatpush1.xpose.msra.mxu0 0.0
      %1330 = vmatprep.subr.mxu0 0.0
      %1331 = vmatpush1.xpose.msra.mxu0 0.0
      %1332 = vmatprep.subr.mxu0 0.0
      %1333 = vmatpush1.xpose.msra.mxu0 0.0
      %1334 = vmatprep.subr.mxu0 0.0
      %1335 = vmatpush1.xpose.msra.mxu0 0.0
      %1336 = vmatprep.subr.mxu0 0.0
      %1337 = vmatpush1.xpose.msra.mxu0 0.0
      %1338 = vmatprep.subr.mxu0 0.0
      %1339 = vmatpush1.xpose.msra.mxu0 0.0
      %1340 = vmatprep.subr.mxu0 0.0
      %1341 = vmatpush1.xpose.msra.mxu0 0.0
      %1342 = vmatprep.subr.mxu0 0.0
      %1343 = vmatpush1.xpose.msra.mxu0 0.0
      %1344 = vmatprep.subr.mxu0 0.0
      %1345 = vmatpush1.xpose.msra.mxu0 0.0
      %1346 = vmatprep.subr.mxu0 0.0
      %1347 = vmatpush1.xpose.msra.mxu0 0.0
      %1348 = vmatprep.subr.mxu0 0.0
      %1349 = vmatpush1.xpose.msra.mxu0 %v1318
      %1350 = vmatprep.subr.mxu0 0.0
      %1351 = vmatpush1.xpose.msra.mxu0 %v1316
      %1352 = vmatprep.subr.mxu0 0.0
      %1353 = vmatpush2.xpose.msra.mxu0 0.0
      %1354 = vmatprep.subr.mxu0 0.0
      %1355 = vmatpush2.xpose.msra.mxu0 0.0
      %1356 = vmatprep.subr.mxu0 0.0
      %1357 = vmatpush2.xpose.msra.mxu0 0.0
      %1358 = vmatprep.subr.mxu0 0.0
      %1359 = vmatpush2.xpose.msra.mxu0 0.0
      %1360 = vmatprep.subr.mxu0 0.0
      %1361 = vmatpush2.xpose.msra.mxu0 0.0
      %1362 = vmatprep.subr.mxu0 0.0
      %1363 = vmatpush2.xpose.msra.mxu0 0.0
      %1364 = vmatprep.subr.mxu0 0.0
      %1365 = vmatpush2.xpose.msra.mxu0 0.0
      %1366 = vmatprep.subr.mxu0 0.0
      %1367 = vmatpush2.xpose.msra.mxu0 0.0
      %1368 = vmatprep.subr.mxu0 0.0
      %1369 = vmatpush2.xpose.msra.mxu0 0.0
      %1370 = vmatprep.subr.mxu0 0.0
      %1371 = vmatpush2.xpose.msra.mxu0 0.0
      %1372 = vmatprep.subr.mxu0 0.0
      %1373 = vmatpush2.xpose.msra.mxu0 0.0
      %1374 = vmatprep.subr.mxu0 0.0
      %1375 = vmatpush2.xpose.msra.mxu0 0.0
      %1376 = vmatprep.subr.mxu0 0.0
      %1377 = vmatpush2.xpose.msra.mxu0 0.0
      %1378 = vmatprep.subr.mxu0 0.0
      %1379 = vmatpush2.xpose.msra.mxu0 0.0
      %1380 = vmatprep.subr.mxu0 0.0
      %1381 = vmatpush2.xpose.msra.mxu0 0.0
      %1382 = vmatprep.subr.mxu0 0.0
      %1383 = vmatpush2.xpose.msra.mxu0 0.0
      %1384 = vmatprep.mubr.f32.mxu0 0.0
      %1385 = vmatmul.mubr.f32.gmra.mxu0 %v1312
      %v1386 = vpop.f32.mrf.mxu0
      %v1387 = vadd.f32 0.0, %v1386
      %v1388 = vpop.f32.mrf.mxu0
      %1389 = vmatprep.mubr.f32.mxu0 0.0
      %1390 = vmatmul.mubr.f32.gmra.mxu0 %v1314
      %v1391 = vpop.f32.mrf.mxu0
      %v1392 = vadd.f32 0.0, %v1391
      %v1393 = vpop.f32.mrf.mxu0
      %1394 = vdwg.mxu0
      %v1395 = vmul.f32 %v1387, 0.17677669
      %v1396 = vmul.f32 %v1392, 0.17677669
      %v1397 = vadd.f32 %v1395, %v490
      %v1398 = vadd.f32 %v1396, %v491
      %v1399 = vsel %vm824, %v1397, -inf
      %1400 = vmax.xlane.f32.xlu0 %v1399
      %v1401 = vpop.xlane.xlu0 %1400
      %v1402 = vsel %vm824, %v1398, -inf
      %1403 = vmax.xlane.f32.xlu0 %v1402
      %v1404 = vpop.xlane.xlu0 %1403
      %v1405 = vsub.f32 %v1397, %v1401
      %v1406 = vsub.f32 %v1398, %v1404
      %v1407 = vmul.f32 %v1405, 1.442695
      %v1408 = vpow.pop %v1407
      %v1409 = vmul.f32 %v1406, 1.442695
      %v1410 = vpow.pop %v1409
      %v1411 = vsel %vm824, %v1408, 0.0
      %1412 = vadd.xlane.f32.xlu0 %v1411
      %v1413 = vpop.xlane.xlu0 %1412
      %v1414 = vsel %vm824, %v1410, 0.0
      %1415 = vadd.xlane.f32.xlu0 %v1414
      %v1416 = vpop.xlane.xlu0 %1415
      %v1417 = vmax.f32 %v1413, 1e-30
      %v1418 = vmax.f32 %v1416, 1e-30
      %v1419 = vrcp.pop %v1417
      %v1420 = vrcp.pop %v1418
      %v1421 = vmul.f32 %v1408, %v1419
      %v1422 = vmul.f32 %v1410, %v1420
      %1423 = vrot.lane.b32.xlu0 %v701, 64
      %v1424 = vpop.permute.xlu0 %1423
      %1425 = vrot.lane.b32.xlu0 %v706, 64
      %v1426 = vpop.permute.xlu0 %1425
      %v1430 = vsel %vm824, %v1421, 0
      %v1433 = vsel %vm824, %v1422, 0
      %1435 = vmatprep.subr.mxu0 0.0
      %1436 = vmatpush1.msra.mxu0 0.0
      %1437 = vmatprep.subr.mxu0 0.0
      %1438 = vmatpush1.msra.mxu0 0.0
      %1439 = vmatprep.subr.mxu0 0.0
      %1440 = vmatpush1.msra.mxu0 0.0
      %1441 = vmatprep.subr.mxu0 0.0
      %1442 = vmatpush1.msra.mxu0 0.0
      %1443 = vmatprep.subr.mxu0 0.0
      %1444 = vmatpush1.msra.mxu0 0.0
      %1445 = vmatprep.subr.mxu0 0.0
      %1446 = vmatpush1.msra.mxu0 0.0
      %1447 = vmatprep.subr.mxu0 0.0
      %1448 = vmatpush1.msra.mxu0 0.0
      %1449 = vmatprep.subr.mxu0 0.0
      %1450 = vmatpush1.msra.mxu0 0.0
      %1451 = vmatprep.subr.mxu0 0.0
      %1452 = vmatpush1.msra.mxu0 0.0
      %1453 = vmatprep.subr.mxu0 0.0
      %1454 = vmatpush1.msra.mxu0 0.0
      %1455 = vmatprep.subr.mxu0 0.0
      %1456 = vmatpush1.msra.mxu0 0.0
      %1457 = vmatprep.subr.mxu0 0.0
      %1458 = vmatpush1.msra.mxu0 0.0
      %1459 = vmatprep.subr.mxu0 0.0
      %1460 = vmatpush1.msra.mxu0 0.0
      %1461 = vmatprep.subr.mxu0 0.0
      %1462 = vmatpush1.msra.mxu0 0.0
      %1463 = vmatprep.subr.mxu0 0.0
      %1464 = vmatpush1.msra.mxu0 %v1426
      %1465 = vmatprep.subr.mxu0 0.0
      %1466 = vmatpush1.msra.mxu0 %v1424
      %1467 = vmatprep.subr.mxu0 0.0
      %1468 = vmatpush2.msra.mxu0 0.0
      %1469 = vmatprep.subr.mxu0 0.0
      %1470 = vmatpush2.msra.mxu0 0.0
      %1471 = vmatprep.subr.mxu0 0.0
      %1472 = vmatpush2.msra.mxu0 0.0
      %1473 = vmatprep.subr.mxu0 0.0
      %1474 = vmatpush2.msra.mxu0 0.0
      %1475 = vmatprep.subr.mxu0 0.0
      %1476 = vmatpush2.msra.mxu0 0.0
      %1477 = vmatprep.subr.mxu0 0.0
      %1478 = vmatpush2.msra.mxu0 0.0
      %1479 = vmatprep.subr.mxu0 0.0
      %1480 = vmatpush2.msra.mxu0 0.0
      %1481 = vmatprep.subr.mxu0 0.0
      %1482 = vmatpush2.msra.mxu0 0.0
      %1483 = vmatprep.subr.mxu0 0.0
      %1484 = vmatpush2.msra.mxu0 0.0
      %1485 = vmatprep.subr.mxu0 0.0
      %1486 = vmatpush2.msra.mxu0 0.0
      %1487 = vmatprep.subr.mxu0 0.0
      %1488 = vmatpush2.msra.mxu0 0.0
      %1489 = vmatprep.subr.mxu0 0.0
      %1490 = vmatpush2.msra.mxu0 0.0
      %1491 = vmatprep.subr.mxu0 0.0
      %1492 = vmatpush2.msra.mxu0 0.0
      %1493 = vmatprep.subr.mxu0 0.0
      %1494 = vmatpush2.msra.mxu0 0.0
      %1495 = vmatprep.subr.mxu0 0.0
      %1496 = vmatpush2.msra.mxu0 0.0
      %1497 = vmatprep.subr.mxu0 0.0
      %1498 = vmatpush2.msra.mxu0 0.0
      %1499 = vmatprep.mubr.f32.mxu0 0.0
      %1500 = vmatmul.mubr.f32.gmra.mxu0 %v1430
      %v1501 = vpop.f32.mrf.mxu0
      %v1502 = vadd.f32 0.0, %v1501
      %v1503 = vpop.f32.mrf.mxu0
      %1504 = vmatprep.mubr.f32.mxu0 0.0
      %1505 = vmatmul.mubr.f32.gmra.mxu0 %v1433
      %v1506 = vpop.f32.mrf.mxu0
      %v1507 = vadd.f32 0.0, %v1506
      %v1508 = vpop.f32.mrf.mxu0
      %1509 = vdwg.mxu0
      %v1511 = vsel %vm732, %v1502, 0
      %v1514 = vsel %vm732, %v1507, 0
      %1516 = vmatprep.subr.mxu0 0.0
      %1517 = vmatpush1.msra.mxu0 0.0
      %1518 = vmatprep.subr.mxu0 0.0
      %1519 = vmatpush1.msra.mxu0 0.0
      %1520 = vmatprep.subr.mxu0 0.0
      %1521 = vmatpush1.msra.mxu0 0.0
      %1522 = vmatprep.subr.mxu0 0.0
      %1523 = vmatpush1.msra.mxu0 0.0
      %1524 = vmatprep.subr.mxu0 0.0
      %1525 = vmatpush1.msra.mxu0 0.0
      %1526 = vmatprep.subr.mxu0 0.0
      %1527 = vmatpush1.msra.mxu0 0.0
      %1528 = vmatprep.subr.mxu0 0.0
      %1529 = vmatpush1.msra.mxu0 0.0
      %1530 = vmatprep.subr.mxu0 0.0
      %1531 = vmatpush1.msra.mxu0 0.0
      %1532 = vmatprep.subr.mxu0 0.0
      %1533 = vmatpush1.msra.mxu0 0.0
      %1534 = vmatprep.subr.mxu0 0.0
      %1535 = vmatpush1.msra.mxu0 0.0
      %1536 = vmatprep.subr.mxu0 0.0
      %1537 = vmatpush1.msra.mxu0 0.0
      %1538 = vmatprep.subr.mxu0 0.0
      %1539 = vmatpush1.msra.mxu0 0.0
      %1540 = vmatprep.subr.mxu0 0.0
      %1541 = vmatpush1.msra.mxu0 %v720
      %1542 = vmatprep.subr.mxu0 0.0
      %1543 = vmatpush1.msra.mxu0 %v719
      %1544 = vmatprep.subr.mxu0 0.0
      %1545 = vmatpush1.msra.mxu0 %v718
      %1546 = vmatprep.subr.mxu0 0.0
      %1547 = vmatpush1.msra.mxu0 %v717
      %1548 = vmatprep.subr.mxu0 0.0
      %1549 = vmatpush2.msra.mxu0 0.0
      %1550 = vmatprep.subr.mxu0 0.0
      %1551 = vmatpush2.msra.mxu0 0.0
      %1552 = vmatprep.subr.mxu0 0.0
      %1553 = vmatpush2.msra.mxu0 0.0
      %1554 = vmatprep.subr.mxu0 0.0
      %1555 = vmatpush2.msra.mxu0 0.0
      %1556 = vmatprep.subr.mxu0 0.0
      %1557 = vmatpush2.msra.mxu0 0.0
      %1558 = vmatprep.subr.mxu0 0.0
      %1559 = vmatpush2.msra.mxu0 0.0
      %1560 = vmatprep.subr.mxu0 0.0
      %1561 = vmatpush2.msra.mxu0 0.0
      %1562 = vmatprep.subr.mxu0 0.0
      %1563 = vmatpush2.msra.mxu0 0.0
      %1564 = vmatprep.subr.mxu0 0.0
      %1565 = vmatpush2.msra.mxu0 0.0
      %1566 = vmatprep.subr.mxu0 0.0
      %1567 = vmatpush2.msra.mxu0 0.0
      %1568 = vmatprep.subr.mxu0 0.0
      %1569 = vmatpush2.msra.mxu0 0.0
      %1570 = vmatprep.subr.mxu0 0.0
      %1571 = vmatpush2.msra.mxu0 0.0
      %1572 = vmatprep.subr.mxu0 0.0
      %1573 = vmatpush2.msra.mxu0 0.0
      %1574 = vmatprep.subr.mxu0 0.0
      %1575 = vmatpush2.msra.mxu0 0.0
      %1576 = vmatprep.subr.mxu0 0.0
      %1577 = vmatpush2.msra.mxu0 0.0
      %1578 = vmatprep.subr.mxu0 0.0
      %1579 = vmatpush2.msra.mxu0 0.0
      %1580 = vmatprep.mubr.f32.mxu0 0.0
      %1581 = vmatmul.mubr.f32.gmra.mxu0 %v1511
      %v1582 = vpop.f32.mrf.mxu0
      %v1583 = vadd.f32 0.0, %v1582
      %v1584 = vpop.f32.mrf.mxu0
      %1585 = vmatprep.mubr.f32.mxu0 0.0
      %1586 = vmatmul.mubr.f32.gmra.mxu0 %v1514
      %v1587 = vpop.f32.mrf.mxu0
      %v1588 = vadd.f32 0.0, %v1587
      %v1589 = vpop.f32.mrf.mxu0
      %1590 = vdwg.mxu0
      %v1591 = vadd.f32 %v1302, %v1583
      %v1592 = vadd.f32 %v1303, %v1588
      %1593 = vrot.lane.b32.xlu0 %v624, 32
      %v1594 = vpop.permute.xlu0 %1593
      %1595 = vrot.lane.b32.xlu0 %v630, 32
      %v1596 = vpop.permute.xlu0 %1595
      %1597 = vrot.lane.b32.xlu0 %v626, 32
      %v1598 = vpop.permute.xlu0 %1597
      %1599 = vrot.lane.b32.xlu0 %v632, 32
      %v1600 = vpop.permute.xlu0 %1599
      %v1601 = vsel %vm732, %v1594, 0
      %v1603 = vsel %vm732, %v1596, 0
      %v1605 = vsel %vm732, %v1598, 0
      %v1607 = vsel %vm732, %v1600, 0
      %1609 = vmatprep.subr.mxu0 0.0
      %1610 = vmatpush1.xpose.msra.mxu0 0.0
      %1611 = vmatprep.subr.mxu0 0.0
      %1612 = vmatpush1.xpose.msra.mxu0 0.0
      %1613 = vmatprep.subr.mxu0 0.0
      %1614 = vmatpush1.xpose.msra.mxu0 0.0
      %1615 = vmatprep.subr.mxu0 0.0
      %1616 = vmatpush1.xpose.msra.mxu0 0.0
      %1617 = vmatprep.subr.mxu0 0.0
      %1618 = vmatpush1.xpose.msra.mxu0 0.0
      %1619 = vmatprep.subr.mxu0 0.0
      %1620 = vmatpush1.xpose.msra.mxu0 0.0
      %1621 = vmatprep.subr.mxu0 0.0
      %1622 = vmatpush1.xpose.msra.mxu0 0.0
      %1623 = vmatprep.subr.mxu0 0.0
      %1624 = vmatpush1.xpose.msra.mxu0 0.0
      %1625 = vmatprep.subr.mxu0 0.0
      %1626 = vmatpush1.xpose.msra.mxu0 0.0
      %1627 = vmatprep.subr.mxu0 0.0
      %1628 = vmatpush1.xpose.msra.mxu0 0.0
      %1629 = vmatprep.subr.mxu0 0.0
      %1630 = vmatpush1.xpose.msra.mxu0 0.0
      %1631 = vmatprep.subr.mxu0 0.0
      %1632 = vmatpush1.xpose.msra.mxu0 0.0
      %1633 = vmatprep.subr.mxu0 0.0
      %1634 = vmatpush1.xpose.msra.mxu0 0.0
      %1635 = vmatprep.subr.mxu0 0.0
      %1636 = vmatpush1.xpose.msra.mxu0 0.0
      %1637 = vmatprep.subr.mxu0 0.0
      %1638 = vmatpush1.xpose.msra.mxu0 %v1607
      %1639 = vmatprep.subr.mxu0 0.0
      %1640 = vmatpush1.xpose.msra.mxu0 %v1605
      %1641 = vmatprep.subr.mxu0 0.0
      %1642 = vmatpush2.xpose.msra.mxu0 0.0
      %1643 = vmatprep.subr.mxu0 0.0
      %1644 = vmatpush2.xpose.msra.mxu0 0.0
      %1645 = vmatprep.subr.mxu0 0.0
      %1646 = vmatpush2.xpose.msra.mxu0 0.0
      %1647 = vmatprep.subr.mxu0 0.0
      %1648 = vmatpush2.xpose.msra.mxu0 0.0
      %1649 = vmatprep.subr.mxu0 0.0
      %1650 = vmatpush2.xpose.msra.mxu0 0.0
      %1651 = vmatprep.subr.mxu0 0.0
      %1652 = vmatpush2.xpose.msra.mxu0 0.0
      %1653 = vmatprep.subr.mxu0 0.0
      %1654 = vmatpush2.xpose.msra.mxu0 0.0
      %1655 = vmatprep.subr.mxu0 0.0
      %1656 = vmatpush2.xpose.msra.mxu0 0.0
      %1657 = vmatprep.subr.mxu0 0.0
      %1658 = vmatpush2.xpose.msra.mxu0 0.0
      %1659 = vmatprep.subr.mxu0 0.0
      %1660 = vmatpush2.xpose.msra.mxu0 0.0
      %1661 = vmatprep.subr.mxu0 0.0
      %1662 = vmatpush2.xpose.msra.mxu0 0.0
      %1663 = vmatprep.subr.mxu0 0.0
      %1664 = vmatpush2.xpose.msra.mxu0 0.0
      %1665 = vmatprep.subr.mxu0 0.0
      %1666 = vmatpush2.xpose.msra.mxu0 0.0
      %1667 = vmatprep.subr.mxu0 0.0
      %1668 = vmatpush2.xpose.msra.mxu0 0.0
      %1669 = vmatprep.subr.mxu0 0.0
      %1670 = vmatpush2.xpose.msra.mxu0 0.0
      %1671 = vmatprep.subr.mxu0 0.0
      %1672 = vmatpush2.xpose.msra.mxu0 0.0
      %1673 = vmatprep.mubr.f32.mxu0 0.0
      %1674 = vmatmul.mubr.f32.gmra.mxu0 %v1601
      %v1675 = vpop.f32.mrf.mxu0
      %v1676 = vadd.f32 0.0, %v1675
      %v1677 = vpop.f32.mrf.mxu0
      %1678 = vmatprep.mubr.f32.mxu0 0.0
      %1679 = vmatmul.mubr.f32.gmra.mxu0 %v1603
      %v1680 = vpop.f32.mrf.mxu0
      %v1681 = vadd.f32 0.0, %v1680
      %v1682 = vpop.f32.mrf.mxu0
      %1683 = vdwg.mxu0
      %v1684 = vmul.f32 %v1676, 0.17677669
      %v1685 = vmul.f32 %v1681, 0.17677669
      %v1686 = vadd.f32 %v1684, %v490
      %v1687 = vadd.f32 %v1685, %v491
      %v1688 = vsel %vm824, %v1686, -inf
      %1689 = vmax.xlane.f32.xlu0 %v1688
      %v1690 = vpop.xlane.xlu0 %1689
      %v1691 = vsel %vm824, %v1687, -inf
      %1692 = vmax.xlane.f32.xlu0 %v1691
      %v1693 = vpop.xlane.xlu0 %1692
      %v1694 = vsub.f32 %v1686, %v1690
      %v1695 = vsub.f32 %v1687, %v1693
      %v1696 = vmul.f32 %v1694, 1.442695
      %v1697 = vpow.pop %v1696
      %v1698 = vmul.f32 %v1695, 1.442695
      %v1699 = vpow.pop %v1698
      %v1700 = vsel %vm824, %v1697, 0.0
      %1701 = vadd.xlane.f32.xlu0 %v1700
      %v1702 = vpop.xlane.xlu0 %1701
      %v1703 = vsel %vm824, %v1699, 0.0
      %1704 = vadd.xlane.f32.xlu0 %v1703
      %v1705 = vpop.xlane.xlu0 %1704
      %v1706 = vmax.f32 %v1702, 1e-30
      %v1707 = vmax.f32 %v1705, 1e-30
      %v1708 = vrcp.pop %v1706
      %v1709 = vrcp.pop %v1707
      %v1710 = vmul.f32 %v1697, %v1708
      %v1711 = vmul.f32 %v1699, %v1709
      %1712 = vrot.lane.b32.xlu0 %v701, 32
      %v1713 = vpop.permute.xlu0 %1712
      %1714 = vrot.lane.b32.xlu0 %v706, 32
      %v1715 = vpop.permute.xlu0 %1714
      %v1719 = vsel %vm824, %v1710, 0
      %v1722 = vsel %vm824, %v1711, 0
      %1724 = vmatprep.subr.mxu0 0.0
      %1725 = vmatpush1.msra.mxu0 0.0
      %1726 = vmatprep.subr.mxu0 0.0
      %1727 = vmatpush1.msra.mxu0 0.0
      %1728 = vmatprep.subr.mxu0 0.0
      %1729 = vmatpush1.msra.mxu0 0.0
      %1730 = vmatprep.subr.mxu0 0.0
      %1731 = vmatpush1.msra.mxu0 0.0
      %1732 = vmatprep.subr.mxu0 0.0
      %1733 = vmatpush1.msra.mxu0 0.0
      %1734 = vmatprep.subr.mxu0 0.0
      %1735 = vmatpush1.msra.mxu0 0.0
      %1736 = vmatprep.subr.mxu0 0.0
      %1737 = vmatpush1.msra.mxu0 0.0
      %1738 = vmatprep.subr.mxu0 0.0
      %1739 = vmatpush1.msra.mxu0 0.0
      %1740 = vmatprep.subr.mxu0 0.0
      %1741 = vmatpush1.msra.mxu0 0.0
      %1742 = vmatprep.subr.mxu0 0.0
      %1743 = vmatpush1.msra.mxu0 0.0
      %1744 = vmatprep.subr.mxu0 0.0
      %1745 = vmatpush1.msra.mxu0 0.0
      %1746 = vmatprep.subr.mxu0 0.0
      %1747 = vmatpush1.msra.mxu0 0.0
      %1748 = vmatprep.subr.mxu0 0.0
      %1749 = vmatpush1.msra.mxu0 0.0
      %1750 = vmatprep.subr.mxu0 0.0
      %1751 = vmatpush1.msra.mxu0 0.0
      %1752 = vmatprep.subr.mxu0 0.0
      %1753 = vmatpush1.msra.mxu0 %v1715
      %1754 = vmatprep.subr.mxu0 0.0
      %1755 = vmatpush1.msra.mxu0 %v1713
      %1756 = vmatprep.subr.mxu0 0.0
      %1757 = vmatpush2.msra.mxu0 0.0
      %1758 = vmatprep.subr.mxu0 0.0
      %1759 = vmatpush2.msra.mxu0 0.0
      %1760 = vmatprep.subr.mxu0 0.0
      %1761 = vmatpush2.msra.mxu0 0.0
      %1762 = vmatprep.subr.mxu0 0.0
      %1763 = vmatpush2.msra.mxu0 0.0
      %1764 = vmatprep.subr.mxu0 0.0
      %1765 = vmatpush2.msra.mxu0 0.0
      %1766 = vmatprep.subr.mxu0 0.0
      %1767 = vmatpush2.msra.mxu0 0.0
      %1768 = vmatprep.subr.mxu0 0.0
      %1769 = vmatpush2.msra.mxu0 0.0
      %1770 = vmatprep.subr.mxu0 0.0
      %1771 = vmatpush2.msra.mxu0 0.0
      %1772 = vmatprep.subr.mxu0 0.0
      %1773 = vmatpush2.msra.mxu0 0.0
      %1774 = vmatprep.subr.mxu0 0.0
      %1775 = vmatpush2.msra.mxu0 0.0
      %1776 = vmatprep.subr.mxu0 0.0
      %1777 = vmatpush2.msra.mxu0 0.0
      %1778 = vmatprep.subr.mxu0 0.0
      %1779 = vmatpush2.msra.mxu0 0.0
      %1780 = vmatprep.subr.mxu0 0.0
      %1781 = vmatpush2.msra.mxu0 0.0
      %1782 = vmatprep.subr.mxu0 0.0
      %1783 = vmatpush2.msra.mxu0 0.0
      %1784 = vmatprep.subr.mxu0 0.0
      %1785 = vmatpush2.msra.mxu0 0.0
      %1786 = vmatprep.subr.mxu0 0.0
      %1787 = vmatpush2.msra.mxu0 0.0
      %1788 = vmatprep.mubr.f32.mxu0 0.0
      %1789 = vmatmul.mubr.f32.gmra.mxu0 %v1719
      %v1790 = vpop.f32.mrf.mxu0
      %v1791 = vadd.f32 0.0, %v1790
      %v1792 = vpop.f32.mrf.mxu0
      %1793 = vmatprep.mubr.f32.mxu0 0.0
      %1794 = vmatmul.mubr.f32.gmra.mxu0 %v1722
      %v1795 = vpop.f32.mrf.mxu0
      %v1796 = vadd.f32 0.0, %v1795
      %v1797 = vpop.f32.mrf.mxu0
      %1798 = vdwg.mxu0
      %v1800 = vsel %vm732, %v1791, 0
      %v1803 = vsel %vm732, %v1796, 0
      %1805 = vmatprep.subr.mxu0 0.0
      %1806 = vmatpush1.msra.mxu0 0.0
      %1807 = vmatprep.subr.mxu0 0.0
      %1808 = vmatpush1.msra.mxu0 0.0
      %1809 = vmatprep.subr.mxu0 0.0
      %1810 = vmatpush1.msra.mxu0 0.0
      %1811 = vmatprep.subr.mxu0 0.0
      %1812 = vmatpush1.msra.mxu0 0.0
      %1813 = vmatprep.subr.mxu0 0.0
      %1814 = vmatpush1.msra.mxu0 0.0
      %1815 = vmatprep.subr.mxu0 0.0
      %1816 = vmatpush1.msra.mxu0 0.0
      %1817 = vmatprep.subr.mxu0 0.0
      %1818 = vmatpush1.msra.mxu0 0.0
      %1819 = vmatprep.subr.mxu0 0.0
      %1820 = vmatpush1.msra.mxu0 0.0
      %1821 = vmatprep.subr.mxu0 0.0
      %1822 = vmatpush1.msra.mxu0 0.0
      %1823 = vmatprep.subr.mxu0 0.0
      %1824 = vmatpush1.msra.mxu0 0.0
      %1825 = vmatprep.subr.mxu0 0.0
      %1826 = vmatpush1.msra.mxu0 0.0
      %1827 = vmatprep.subr.mxu0 0.0
      %1828 = vmatpush1.msra.mxu0 0.0
      %1829 = vmatprep.subr.mxu0 0.0
      %1830 = vmatpush1.msra.mxu0 %v724
      %1831 = vmatprep.subr.mxu0 0.0
      %1832 = vmatpush1.msra.mxu0 %v723
      %1833 = vmatprep.subr.mxu0 0.0
      %1834 = vmatpush1.msra.mxu0 %v722
      %1835 = vmatprep.subr.mxu0 0.0
      %1836 = vmatpush1.msra.mxu0 %v721
      %1837 = vmatprep.subr.mxu0 0.0
      %1838 = vmatpush2.msra.mxu0 0.0
      %1839 = vmatprep.subr.mxu0 0.0
      %1840 = vmatpush2.msra.mxu0 0.0
      %1841 = vmatprep.subr.mxu0 0.0
      %1842 = vmatpush2.msra.mxu0 0.0
      %1843 = vmatprep.subr.mxu0 0.0
      %1844 = vmatpush2.msra.mxu0 0.0
      %1845 = vmatprep.subr.mxu0 0.0
      %1846 = vmatpush2.msra.mxu0 0.0
      %1847 = vmatprep.subr.mxu0 0.0
      %1848 = vmatpush2.msra.mxu0 0.0
      %1849 = vmatprep.subr.mxu0 0.0
      %1850 = vmatpush2.msra.mxu0 0.0
      %1851 = vmatprep.subr.mxu0 0.0
      %1852 = vmatpush2.msra.mxu0 0.0
      %1853 = vmatprep.subr.mxu0 0.0
      %1854 = vmatpush2.msra.mxu0 0.0
      %1855 = vmatprep.subr.mxu0 0.0
      %1856 = vmatpush2.msra.mxu0 0.0
      %1857 = vmatprep.subr.mxu0 0.0
      %1858 = vmatpush2.msra.mxu0 0.0
      %1859 = vmatprep.subr.mxu0 0.0
      %1860 = vmatpush2.msra.mxu0 0.0
      %1861 = vmatprep.subr.mxu0 0.0
      %1862 = vmatpush2.msra.mxu0 0.0
      %1863 = vmatprep.subr.mxu0 0.0
      %1864 = vmatpush2.msra.mxu0 0.0
      %1865 = vmatprep.subr.mxu0 0.0
      %1866 = vmatpush2.msra.mxu0 0.0
      %1867 = vmatprep.subr.mxu0 0.0
      %1868 = vmatpush2.msra.mxu0 0.0
      %1869 = vmatprep.mubr.f32.mxu0 0.0
      %1870 = vmatmul.mubr.f32.gmra.mxu0 %v1800
      %v1871 = vpop.f32.mrf.mxu0
      %v1872 = vadd.f32 0.0, %v1871
      %v1873 = vpop.f32.mrf.mxu0
      %1874 = vmatprep.mubr.f32.mxu0 0.0
      %1875 = vmatmul.mubr.f32.gmra.mxu0 %v1803
      %v1876 = vpop.f32.mrf.mxu0
      %v1877 = vadd.f32 0.0, %v1876
      %v1878 = vpop.f32.mrf.mxu0
      %1879 = vdwg.mxu0
      %v1880 = vadd.f32 %v1591, %v1872
      %v1881 = vadd.f32 %v1592, %v1877
      %v1882 = vadd.f32 %v488, %v1880
      %v1883 = vadd.f32 %v489, %v1881
      %v1884 = vld [vmem:[%s6] sm:$0x1]
      %v1885 = vld [vmem:[%s7] sm:$0x1]
      %1886 = vadd.xlane.f32.xlu0 %v1882
      %v1887 = vpop.xlane.xlu0 %1886
      %1888 = vadd.xlane.f32.xlu0 %v1883
      %v1889 = vpop.xlane.xlu0 %1888
      %v1890 = vrcp.pop 128.0
      %v1891 = vmul.f32 %v1887, %v1890
      %v1892 = vmul.f32 %v1889, %v1890
      %v1893 = vsub.f32 %v1882, %v1891
      %v1894 = vsub.f32 %v1883, %v1892
      %v1895 = vmul.f32 %v1893, %v1893
      %v1896 = vmul.f32 %v1894, %v1894
      %1897 = vadd.xlane.f32.xlu0 %v1895
      %v1898 = vpop.xlane.xlu0 %1897
      %1899 = vadd.xlane.f32.xlu0 %v1896
      %v1900 = vpop.xlane.xlu0 %1899
      %v1901 = vmul.f32 %v1898, %v1890
      %v1902 = vmul.f32 %v1900, %v1890
      %v1903 = vadd.f32 %v1901, 1e-05
      %v1904 = vadd.f32 %v1902, 1e-05
      %v1905 = vrsqrt.pop %v1903
      %v1906 = vrsqrt.pop %v1904
      %v1907 = vmul.f32 %v1893, %v1905
      %v1908 = vmul.f32 %v1894, %v1906
      %v1910 = vlaneseq
      %v1911 = vshrl.u32 %v1910, 7
      %v1912 = vsub.s32 0, %v1911
      %v1913 = vrot.slane %v1884, %v1912
      %v1915 = vmul.f32 %v1907, %v1913
      %v1916 = vmul.f32 %v1908, %v1913
      %v1918 = vlaneseq
      %v1919 = vshrl.u32 %v1918, 7
      %v1920 = vsub.s32 0, %v1919
      %v1921 = vrot.slane %v1885, %v1920
      %v1923 = vadd.f32 %v1915, %v1921
      %v1924 = vadd.f32 %v1916, %v1921
      %v1925 = vld [vmem:[%s8] sm:$0xff]
      %v1926 = vld [vmem:[%s8 + $0x8] sm:$0xff]
      %v1927 = vld [vmem:[%s8 + $0x10] sm:$0xff]
      %v1928 = vld [vmem:[%s8 + $0x18] sm:$0xff]
      %v1929 = vld [vmem:[%s8 + $0x20] sm:$0xff]
      %v1930 = vld [vmem:[%s8 + $0x28] sm:$0xff]
      %v1931 = vld [vmem:[%s8 + $0x30] sm:$0xff]
      %v1932 = vld [vmem:[%s8 + $0x38] sm:$0xff]
      %v1933 = vld [vmem:[%s8 + $0x40] sm:$0xff]
      %v1934 = vld [vmem:[%s8 + $0x48] sm:$0xff]
      %v1935 = vld [vmem:[%s8 + $0x50] sm:$0xff]
      %v1936 = vld [vmem:[%s8 + $0x58] sm:$0xff]
      %v1937 = vld [vmem:[%s8 + $0x60] sm:$0xff]
      %v1938 = vld [vmem:[%s8 + $0x68] sm:$0xff]
      %v1939 = vld [vmem:[%s8 + $0x70] sm:$0xff]
      %v1940 = vld [vmem:[%s8 + $0x78] sm:$0xff]
      %v1941 = vld [vmem:[%s9] sm:$0x1]
      %v1943 = vlaneseq
      %v1944 = vshrl.u32 %v1943, 7
      %v1945 = vsub.s32 0, %v1944
      %v1946 = vrot.slane %v1941, %v1945
      %1948 = vmatprep.subr.mxu0 0.0
      %1949 = vmatpush1.msra.mxu0 %v1940
      %1950 = vmatprep.subr.mxu0 0.0
      %1951 = vmatpush1.msra.mxu0 %v1939
      %1952 = vmatprep.subr.mxu0 0.0
      %1953 = vmatpush1.msra.mxu0 %v1938
      %1954 = vmatprep.subr.mxu0 0.0
      %1955 = vmatpush1.msra.mxu0 %v1937
      %1956 = vmatprep.subr.mxu0 0.0
      %1957 = vmatpush1.msra.mxu0 %v1936
      %1958 = vmatprep.subr.mxu0 0.0
      %1959 = vmatpush1.msra.mxu0 %v1935
      %1960 = vmatprep.subr.mxu0 0.0
      %1961 = vmatpush1.msra.mxu0 %v1934
      %1962 = vmatprep.subr.mxu0 0.0
      %1963 = vmatpush1.msra.mxu0 %v1933
      %1964 = vmatprep.subr.mxu0 0.0
      %1965 = vmatpush1.msra.mxu0 %v1932
      %1966 = vmatprep.subr.mxu0 0.0
      %1967 = vmatpush1.msra.mxu0 %v1931
      %1968 = vmatprep.subr.mxu0 0.0
      %1969 = vmatpush1.msra.mxu0 %v1930
      %1970 = vmatprep.subr.mxu0 0.0
      %1971 = vmatpush1.msra.mxu0 %v1929
      %1972 = vmatprep.subr.mxu0 0.0
      %1973 = vmatpush1.msra.mxu0 %v1928
      %1974 = vmatprep.subr.mxu0 0.0
      %1975 = vmatpush1.msra.mxu0 %v1927
      %1976 = vmatprep.subr.mxu0 0.0
      %1977 = vmatpush1.msra.mxu0 %v1926
      %1978 = vmatprep.subr.mxu0 0.0
      %1979 = vmatpush1.msra.mxu0 %v1925
      %1980 = vmatprep.subr.mxu0 0.0
      %1981 = vmatpush2.msra.mxu0 0.0
      %1982 = vmatprep.subr.mxu0 0.0
      %1983 = vmatpush2.msra.mxu0 0.0
      %1984 = vmatprep.subr.mxu0 0.0
      %1985 = vmatpush2.msra.mxu0 0.0
      %1986 = vmatprep.subr.mxu0 0.0
      %1987 = vmatpush2.msra.mxu0 0.0
      %1988 = vmatprep.subr.mxu0 0.0
      %1989 = vmatpush2.msra.mxu0 0.0
      %1990 = vmatprep.subr.mxu0 0.0
      %1991 = vmatpush2.msra.mxu0 0.0
      %1992 = vmatprep.subr.mxu0 0.0
      %1993 = vmatpush2.msra.mxu0 0.0
      %1994 = vmatprep.subr.mxu0 0.0
      %1995 = vmatpush2.msra.mxu0 0.0
      %1996 = vmatprep.subr.mxu0 0.0
      %1997 = vmatpush2.msra.mxu0 0.0
      %1998 = vmatprep.subr.mxu0 0.0
      %1999 = vmatpush2.msra.mxu0 0.0
      %2000 = vmatprep.subr.mxu0 0.0
      %2001 = vmatpush2.msra.mxu0 0.0
      %2002 = vmatprep.subr.mxu0 0.0
      %2003 = vmatpush2.msra.mxu0 0.0
      %2004 = vmatprep.subr.mxu0 0.0
      %2005 = vmatpush2.msra.mxu0 0.0
      %2006 = vmatprep.subr.mxu0 0.0
      %2007 = vmatpush2.msra.mxu0 0.0
      %2008 = vmatprep.subr.mxu0 0.0
      %2009 = vmatpush2.msra.mxu0 0.0
      %2010 = vmatprep.subr.mxu0 0.0
      %2011 = vmatpush2.msra.mxu0 0.0
      %2012 = vmatprep.mubr.f32.mxu0 0.0
      %2013 = vmatmul.mubr.f32.gmra.mxu0 %v1923
      %v2014 = vpop.f32.mrf.mxu0
      %v2015 = vadd.f32 %v1946, %v2014
      %v2016 = vpop.f32.mrf.mxu0
      %2017 = vmatprep.mubr.f32.mxu0 0.0
      %2018 = vmatmul.mubr.f32.gmra.mxu0 %v1924
      %v2019 = vpop.f32.mrf.mxu0
      %v2020 = vadd.f32 %v1946, %v2019
      %v2021 = vpop.f32.mrf.mxu0
      %2022 = vdwg.mxu0
      %v2023 = vmax.f32 %v2015, 0.0
      %v2024 = vmax.f32 %v2020, 0.0
      %v2025 = vld [vmem:[%s10] sm:$0xff]
      %v2026 = vld [vmem:[%s10 + $0x8] sm:$0xff]
      %v2027 = vld [vmem:[%s10 + $0x10] sm:$0xff]
      %v2028 = vld [vmem:[%s10 + $0x18] sm:$0xff]
      %v2029 = vld [vmem:[%s10 + $0x20] sm:$0xff]
      %v2030 = vld [vmem:[%s10 + $0x28] sm:$0xff]
      %v2031 = vld [vmem:[%s10 + $0x30] sm:$0xff]
      %v2032 = vld [vmem:[%s10 + $0x38] sm:$0xff]
      %v2033 = vld [vmem:[%s10 + $0x40] sm:$0xff]
      %v2034 = vld [vmem:[%s10 + $0x48] sm:$0xff]
      %v2035 = vld [vmem:[%s10 + $0x50] sm:$0xff]
      %v2036 = vld [vmem:[%s10 + $0x58] sm:$0xff]
      %v2037 = vld [vmem:[%s10 + $0x60] sm:$0xff]
      %v2038 = vld [vmem:[%s10 + $0x68] sm:$0xff]
      %v2039 = vld [vmem:[%s10 + $0x70] sm:$0xff]
      %v2040 = vld [vmem:[%s10 + $0x78] sm:$0xff]
      %v2041 = vld [vmem:[%s11] sm:$0x1]
      %v2043 = vlaneseq
      %v2044 = vshrl.u32 %v2043, 7
      %v2045 = vsub.s32 0, %v2044
      %v2046 = vrot.slane %v2041, %v2045
      %2048 = vmatprep.subr.mxu0 0.0
      %2049 = vmatpush1.msra.mxu0 %v2040
      %2050 = vmatprep.subr.mxu0 0.0
      %2051 = vmatpush1.msra.mxu0 %v2039
      %2052 = vmatprep.subr.mxu0 0.0
      %2053 = vmatpush1.msra.mxu0 %v2038
      %2054 = vmatprep.subr.mxu0 0.0
      %2055 = vmatpush1.msra.mxu0 %v2037
      %2056 = vmatprep.subr.mxu0 0.0
      %2057 = vmatpush1.msra.mxu0 %v2036
      %2058 = vmatprep.subr.mxu0 0.0
      %2059 = vmatpush1.msra.mxu0 %v2035
      %2060 = vmatprep.subr.mxu0 0.0
      %2061 = vmatpush1.msra.mxu0 %v2034
      %2062 = vmatprep.subr.mxu0 0.0
      %2063 = vmatpush1.msra.mxu0 %v2033
      %2064 = vmatprep.subr.mxu0 0.0
      %2065 = vmatpush1.msra.mxu0 %v2032
      %2066 = vmatprep.subr.mxu0 0.0
      %2067 = vmatpush1.msra.mxu0 %v2031
      %2068 = vmatprep.subr.mxu0 0.0
      %2069 = vmatpush1.msra.mxu0 %v2030
      %2070 = vmatprep.subr.mxu0 0.0
      %2071 = vmatpush1.msra.mxu0 %v2029
      %2072 = vmatprep.subr.mxu0 0.0
      %2073 = vmatpush1.msra.mxu0 %v2028
      %2074 = vmatprep.subr.mxu0 0.0
      %2075 = vmatpush1.msra.mxu0 %v2027
      %2076 = vmatprep.subr.mxu0 0.0
      %2077 = vmatpush1.msra.mxu0 %v2026
      %2078 = vmatprep.subr.mxu0 0.0
      %2079 = vmatpush1.msra.mxu0 %v2025
      %2080 = vmatprep.subr.mxu0 0.0
      %2081 = vmatpush2.msra.mxu0 0.0
      %2082 = vmatprep.subr.mxu0 0.0
      %2083 = vmatpush2.msra.mxu0 0.0
      %2084 = vmatprep.subr.mxu0 0.0
      %2085 = vmatpush2.msra.mxu0 0.0
      %2086 = vmatprep.subr.mxu0 0.0
      %2087 = vmatpush2.msra.mxu0 0.0
      %2088 = vmatprep.subr.mxu0 0.0
      %2089 = vmatpush2.msra.mxu0 0.0
      %2090 = vmatprep.subr.mxu0 0.0
      %2091 = vmatpush2.msra.mxu0 0.0
      %2092 = vmatprep.subr.mxu0 0.0
      %2093 = vmatpush2.msra.mxu0 0.0
      %2094 = vmatprep.subr.mxu0 0.0
      %2095 = vmatpush2.msra.mxu0 0.0
      %2096 = vmatprep.subr.mxu0 0.0
      %2097 = vmatpush2.msra.mxu0 0.0
      %2098 = vmatprep.subr.mxu0 0.0
      %2099 = vmatpush2.msra.mxu0 0.0
      %2100 = vmatprep.subr.mxu0 0.0
      %2101 = vmatpush2.msra.mxu0 0.0
      %2102 = vmatprep.subr.mxu0 0.0
      %2103 = vmatpush2.msra.mxu0 0.0
      %2104 = vmatprep.subr.mxu0 0.0
      %2105 = vmatpush2.msra.mxu0 0.0
      %2106 = vmatprep.subr.mxu0 0.0
      %2107 = vmatpush2.msra.mxu0 0.0
      %2108 = vmatprep.subr.mxu0 0.0
      %2109 = vmatpush2.msra.mxu0 0.0
      %2110 = vmatprep.subr.mxu0 0.0
      %2111 = vmatpush2.msra.mxu0 0.0
      %2112 = vmatprep.mubr.f32.mxu0 0.0
      %2113 = vmatmul.mubr.f32.gmra.mxu0 %v2023
      %v2114 = vpop.f32.mrf.mxu0
      %v2115 = vadd.f32 %v2046, %v2114
      %v2116 = vpop.f32.mrf.mxu0
      %2117 = vmatprep.mubr.f32.mxu0 0.0
      %2118 = vmatmul.mubr.f32.gmra.mxu0 %v2024
      %v2119 = vpop.f32.mrf.mxu0
      %v2120 = vadd.f32 %v2046, %v2119
      %v2121 = vpop.f32.mrf.mxu0
      %2122 = vdwg.mxu0
      %v2123 = vadd.f32 %v1923, %v2115
      %v2124 = vadd.f32 %v1924, %v2120
      %v2125 = vld [vmem:[%s12] sm:$0x1]
      %v2126 = vld [vmem:[%s13] sm:$0x1]
      %2127 = vadd.xlane.f32.xlu0 %v2123
      %v2128 = vpop.xlane.xlu0 %2127
      %2129 = vadd.xlane.f32.xlu0 %v2124
      %v2130 = vpop.xlane.xlu0 %2129
      %v2131 = vmul.f32 %v2128, %v1890
      %v2132 = vmul.f32 %v2130, %v1890
      %v2133 = vsub.f32 %v2123, %v2131
      %v2134 = vsub.f32 %v2124, %v2132
      %v2135 = vmul.f32 %v2133, %v2133
      %v2136 = vmul.f32 %v2134, %v2134
      %2137 = vadd.xlane.f32.xlu0 %v2135
      %v2138 = vpop.xlane.xlu0 %2137
      %2139 = vadd.xlane.f32.xlu0 %v2136
      %v2140 = vpop.xlane.xlu0 %2139
      %v2141 = vmul.f32 %v2138, %v1890
      %v2142 = vmul.f32 %v2140, %v1890
      %v2143 = vadd.f32 %v2141, 1e-05
      %v2144 = vadd.f32 %v2142, 1e-05
      %v2145 = vrsqrt.pop %v2143
      %v2146 = vrsqrt.pop %v2144
      %v2147 = vmul.f32 %v2133, %v2145
      %v2148 = vmul.f32 %v2134, %v2146
      %v2150 = vlaneseq
      %v2151 = vshrl.u32 %v2150, 7
      %v2152 = vsub.s32 0, %v2151
      %v2153 = vrot.slane %v2125, %v2152
      %v2155 = vmul.f32 %v2147, %v2153
      %v2156 = vmul.f32 %v2148, %v2153
      %v2158 = vlaneseq
      %v2159 = vshrl.u32 %v2158, 7
      %v2160 = vsub.s32 0, %v2159
      %v2161 = vrot.slane %v2126, %v2160
      %v2163 = vadd.f32 %v2155, %v2161
      %v2164 = vadd.f32 %v2156, %v2161
      %2165 = vst [vmem:[%s487] sm:$0xff] %v2163
      %2166 = vst [vmem:[%s487 + $0x8] sm:$0xff] %v2164
      %p2167 = scmp.lt.s32.totalorder %s25, 1
      %s2168 = scalar_select %p2167, %s25, 1
      %s2169 = smul.addr %s2168, 2
      %s2170 = smul.addr %s2169, 8
      %s2171 = scalar_lea.vmem %s14, %s2170
      // Predicated region
      $region77: #{transformer_xl_forward.4} parent=75 // pred_check
        %p2172 = pneg %p347
      $region78: #{transformer_xl_forward.4} parent=75 // pred_check_branch
        %2174 = sbr.rel (%p2172) target = $region80
      $region79: #{transformer_xl_forward.4} parent=75 // pred_region
        _
      $region80: #{transformer_xl_forward.4} parent=75 // pred_fallthru
        _
    $region76: #{transformer_xl_forward.4} parent=5 // pred_fallthru
      _
    %p2175 = scmp.le.s32.totalorder 2, %s20
    // Predicated region
    $region81: #{transformer_xl_forward.4} parent=5 // pred_check
      %p2176 = pneg %p2175
    $region82: #{transformer_xl_forward.4} parent=5 // pred_check_branch
      %2178 = sbr.rel (%p2176) target = $region84
    $region83: #{transformer_xl_forward.4} parent=5 // pred_region
      %s2179 = ssub.s32 %s20, 2
      // Predicated region
      $region85: #{transformer_xl_forward.4} parent=83 // pred_check
        %p2180 = pneg %p353
      $region86: #{transformer_xl_forward.4} parent=83 // pred_check_branch
        %2182 = sbr.rel (%p2180) target = $region88
      $region87: #{transformer_xl_forward.4} parent=83 // pred_region
        %p2183 = scmp.lt.s32.totalorder %s26, 1
        %s2184 = scalar_select %p2183, %s26, 1
        %s2185 = smul.addr %s2184, 2
        %s2186 = smul.addr %s2185, 8
        %s2187 = scalar_lea.vmem %s14, %s2186
      $region88: #{transformer_xl_forward.4} parent=83 // pred_fallthru
        _
    $region84: #{transformer_xl_forward.4} parent=5 // pred_fallthru
      _
  $region6: #{transformer_xl_forward.4} parent=0 // loop_footer
    %s24 = sadd.s32 1, %s20
  $region7: #{transformer_xl_forward.4} parent=0 // loop_footer_branch
    %19 = sbr.rel target = $region3
  $region8: #{transformer_xl_forward.4} parent=0 // loop_exit
    _

// kernel: transformer_xl_forward.3
$region0: #{transformer_xl_forward.3}
  #allocation0 [shape = 'u32[]', space=smem, size = 0x4, offset = 0x4, fixed_abs, tag = 'smem constant byte address 0x4 - core index']
  #allocation1 [shape = 'u32[144,128]{1,0:T(1,128)}', space=vmem, size = 0x12000, scoped, tag = 'internal scratch']
  %s0 = inlined_call_operand.vmem [shape: f32[2,16,128], index: 0, kind: input, shape index: {}]
  %s1 = inlined_call_operand.vmem [shape: f32[2,16,16], index: 1, kind: input, shape index: {}]
  %s2 = inlined_call_operand.vmem [shape: f32[128,384], index: 2, kind: input, shape index: {}]
  %s3 = inlined_call_operand.vmem [shape: f32[1,384], index: 3, kind: input, shape index: {}]
  %s4 = inlined_call_operand.vmem [shape: f32[128,128], index: 4, kind: input, shape index: {}]
  %s5 = inlined_call_operand.vmem [shape: f32[1,128], index: 5, kind: input, shape index: {}]
  %s6 = inlined_call_operand.vmem [shape: f32[1,128], index: 6, kind: input, shape index: {}]
  %s7 = inlined_call_operand.vmem [shape: f32[1,128], index: 7, kind: input, shape index: {}]
  %s8 = inlined_call_operand.vmem [shape: f32[128,128], index: 8, kind: input, shape index: {}]
  %s9 = inlined_call_operand.vmem [shape: f32[1,128], index: 9, kind: input, shape index: {}]
  %s10 = inlined_call_operand.hbm [shape: f32[128,128], index: 10, kind: input, shape index: {}]
  %s11 = inlined_call_operand.vmem [shape: f32[1,128], index: 11, kind: input, shape index: {}]
  %s12 = inlined_call_operand.vmem [shape: f32[1,128], index: 12, kind: input, shape index: {}]
  %s13 = inlined_call_operand.vmem [shape: f32[1,128], index: 13, kind: input, shape index: {}]
  %s14 = inlined_call_operand.vmem [shape: f32[2,16,128], index: 14, kind: output, shape index: {}]
  %s15 = sld [smem:[#allocation0]]
  $region93: #{transformer_xl_forward.3} parent=0
    _
  %s17 = ssub.s32 1, %s15
  %s18 = scalar_select 0, %s17, %s15
  $region1: #{transformer_xl_forward.3} parent=0
    #allocation2 [shape = 'u8[65536]{0}', space=vmem, size = 0x10000, scoped, tag = 'input window, operand 10, single buffered']
    #allocation3 [shape = 's32[2]{0}', space=sflag, size = 0x8, scoped, tag = 'scoped memory for transformer_xl_forward.3']
    %19 = vsyncpa [#allocation3], 0
    loop: start=0, step=1, limit=4
    $region2: #{transformer_xl_forward.3} parent=1 // loop_pre_header
      _
    $region3: #{transformer_xl_forward.3} parent=1 // loop_header
      %s21 = sphi 0, %s25
      %p22 = scmp.ge.s32.totalorder %s21, 4
      %s31 = sphi 0, %s33
      %s34 = sphi 0, %s31
      %s35 = sphi 0, %s34
      %s51 = sphi 0, %s35
      %s57 = sphi 0, %s59
      %s60 = sphi 0, %s57
      %s61 = sphi 0, %s60
      %s77 = sphi 0, %s61
      %s81 = sphi 0, %s81
      %s83 = sphi 0, %s81
      %s84 = sphi 0, %s83
      %s98 = sphi 0, %s84
      %s102 = sphi 0, %s102
      %s104 = sphi 0, %s102
      %s105 = sphi 0, %s104
      %s119 = sphi 0, %s105
      %s123 = sphi 0, %s123
      %s125 = sphi 0, %s123
      %s126 = sphi 0, %s125
      %s140 = sphi 0, %s126
      %s144 = sphi 0, %s144
      %s146 = sphi 0, %s144
      %s147 = sphi 0, %s146
      %s161 = sphi 0, %s147
      %s165 = sphi 0, %s165
      %s167 = sphi 0, %s165
      %s168 = sphi 0, %s167
      %s182 = sphi 0, %s168
      %s186 = sphi 0, %s186
      %s188 = sphi 0, %s186
      %s189 = sphi 0, %s188
      %s203 = sphi 0, %s189
      %s207 = sphi 0, %s207
      %s209 = sphi 0, %s207
      %s210 = sphi 0, %s209
      %s224 = sphi 0, %s210
      %s228 = sphi 0, %s228
      %s230 = sphi 0, %s228
      %s231 = sphi 0, %s230
      %s245 = sphi 0, %s231
      %s249 = sphi 0, %s249
      %s251 = sphi 0, %s249
      %s252 = sphi 0, %s251
      %s266 = sphi 0, %s252
      %s270 = sphi 0, %s270
      %s272 = sphi 0, %s270
      %s273 = sphi 0, %s272
      %s287 = sphi 0, %s273
      %s291 = sphi 0, %s291
      %s293 = sphi 0, %s291
      %s294 = sphi 0, %s293
      %s308 = sphi 0, %s294
      %s312 = sphi 0, %s312
      %s314 = sphi 0, %s312
      %s315 = sphi 0, %s314
      %s329 = sphi 0, %s315
      %s335 = sphi 0, %s337
      %s338 = sphi 0, %s335
      %s339 = sphi 0, %s338
      %s355 = sphi 0, %s339
    $region4: #{transformer_xl_forward.3} parent=1 // loop_header_branch
      %24 = sbr.rel (%p22) target = $region8
    $region5: #{transformer_xl_forward.3} parent=1 // loop_body
      %s26 = ssub.s32 %s21, 1
      %s27 = ssub.s32 %s21, 2
      %s28 = sadd.s32 %s21, 1
      %s29 = ssub.s32 %s21, %s28
      %p30 = scmp.eq.s32.totalorder %s29, 0
      %s32 = sadd.s32 %s31, 1
      %s33 = scalar_select %p30, %s31, %s32
      %p36 = pneg %p30
      %p37 = scmp.eq.s32.totalorder %s21, 1
      %p38 = por %p36, %p37
      %p39 = scmp.ne.s32.totalorder %s31, %s34
      %p40 = scmp.eq.s32.totalorder %s21, 0
      %p41 = por %p39, %p40
      %p42 = scmp.ne.s32.totalorder %s31, %s34
      %p43 = scmp.eq.s32.totalorder %s26, 1
      %p44 = por %p42, %p43
      %p45 = scmp.ne.s32.totalorder %s34, %s35
      %p46 = scmp.eq.s32.totalorder %s26, 0
      %p47 = por %p45, %p46
      %p48 = scmp.ne.s32.totalorder %s34, %s35
      %p49 = scmp.eq.s32.totalorder %s27, 1
      %p50 = por %p48, %p49
      %p52 = scmp.ne.s32.totalorder %s35, %s51
      %p53 = scmp.eq.s32.totalorder %s27, 0
      %p54 = por %p52, %p53
      %s55 = ssub.s32 %s21, %s28
      %p56 = scmp.eq.s32.totalorder %s55, 0
      %s58 = sadd.s32 %s57, 1
      %s59 = scalar_select %p56, %s57, %s58
      %p62 = pneg %p56
      %p63 = scmp.eq.s32.totalorder %s21, 1
      %p64 = por %p62, %p63
      %p65 = scmp.ne.s32.totalorder %s57, %s60
      %p66 = scmp.eq.s32.totalorder %s21, 0
      %p67 = por %p65, %p66
      %p68 = scmp.ne.s32.totalorder %s57, %s60
      %p69 = scmp.eq.s32.totalorder %s26, 1
      %p70 = por %p68, %p69
      %p71 = scmp.ne.s32.totalorder %s60, %s61
      %p72 = scmp.eq.s32.totalorder %s26, 0
      %p73 = por %p71, %p72
      %p74 = scmp.ne.s32.totalorder %s60, %s61
      %p75 = scmp.eq.s32.totalorder %s27, 1
      %p76 = por %p74, %p75
      %p78 = scmp.ne.s32.totalorder %s61, %s77
      %p79 = scmp.eq.s32.totalorder %s27, 0
      %p80 = por %p78, %p79
      %s82 = sadd.s32 %s81, 1
      %p85 = scmp.eq.s32.totalorder %s21, 1
      %p86 = scmp.ne.s32.totalorder %s81, %s83
      %p87 = scmp.eq.s32.totalorder %s21, 0
      %p88 = por %p86, %p87
      %p89 = scmp.ne.s32.totalorder %s81, %s83
      %p90 = scmp.eq.s32.totalorder %s26, 1
      %p91 = por %p89, %p90
      %p92 = scmp.ne.s32.totalorder %s83, %s84
      %p93 = scmp.eq.s32.totalorder %s26, 0
      %p94 = por %p92, %p93
      %p95 = scmp.ne.s32.totalorder %s83, %s84
      %p96 = scmp.eq.s32.totalorder %s27, 1
      %p97 = por %p95, %p96
      %p99 = scmp.ne.s32.totalorder %s84, %s98
      %p100 = scmp.eq.s32.totalorder %s27, 0
      %p101 = por %p99, %p100
      %s103 = sadd.s32 %s102, 1
      %p106 = scmp.eq.s32.totalorder %s21, 1
      %p107 = scmp.ne.s32.totalorder %s102, %s104
      %p108 = scmp.eq.s32.totalorder %s21, 0
      %p109 = por %p107, %p108
      %p110 = scmp.ne.s32.totalorder %s102, %s104
      %p111 = scmp.eq.s32.totalorder %s26, 1
      %p112 = por %p110, %p111
      %p113 = scmp.ne.s32.totalorder %s104, %s105
      %p114 = scmp.eq.s32.totalorder %s26, 0
      %p115 = por %p113, %p114
      %p116 = scmp.ne.s32.totalorder %s104, %s105
      %p117 = scmp.eq.s32.totalorder %s27, 1
      %p118 = por %p116, %p117
      %p120 = scmp.ne.s32.totalorder %s105, %s119
      %p121 = scmp.eq.s32.totalorder %s27, 0
      %p122 = por %p120, %p121
      %s124 = sadd.s32 %s123, 1
      %p127 = scmp.eq.s32.totalorder %s21, 1
      %p128 = scmp.ne.s32.totalorder %s123, %s125
      %p129 = scmp.eq.s32.totalorder %s21, 0
      %p130 = por %p128, %p129
      %p131 = scmp.ne.s32.totalorder %s123, %s125
      %p132 = scmp.eq.s32.totalorder %s26, 1
      %p133 = por %p131, %p132
      %p134 = scmp.ne.s32.totalorder %s125, %s126
      %p135 = scmp.eq.s32.totalorder %s26, 0
      %p136 = por %p134, %p135
      %p137 = scmp.ne.s32.totalorder %s125, %s126
      %p138 = scmp.eq.s32.totalorder %s27, 1
      %p139 = por %p137, %p138
      %p141 = scmp.ne.s32.totalorder %s126, %s140
      %p142 = scmp.eq.s32.totalorder %s27, 0
      %p143 = por %p141, %p142
      %s145 = sadd.s32 %s144, 1
      %p148 = scmp.eq.s32.totalorder %s21, 1
      %p149 = scmp.ne.s32.totalorder %s144, %s146
      %p150 = scmp.eq.s32.totalorder %s21, 0
      %p151 = por %p149, %p150
      %p152 = scmp.ne.s32.totalorder %s144, %s146
      %p153 = scmp.eq.s32.totalorder %s26, 1
      %p154 = por %p152, %p153
      %p155 = scmp.ne.s32.totalorder %s146, %s147
      %p156 = scmp.eq.s32.totalorder %s26, 0
      %p157 = por %p155, %p156
      %p158 = scmp.ne.s32.totalorder %s146, %s147
      %p159 = scmp.eq.s32.totalorder %s27, 1
      %p160 = por %p158, %p159
      %p162 = scmp.ne.s32.totalorder %s147, %s161
      %p163 = scmp.eq.s32.totalorder %s27, 0
      %p164 = por %p162, %p163
      %s166 = sadd.s32 %s165, 1
      %p169 = scmp.eq.s32.totalorder %s21, 1
      %p170 = scmp.ne.s32.totalorder %s165, %s167
      %p171 = scmp.eq.s32.totalorder %s21, 0
      %p172 = por %p170, %p171
      %p173 = scmp.ne.s32.totalorder %s165, %s167
      %p174 = scmp.eq.s32.totalorder %s26, 1
      %p175 = por %p173, %p174
      %p176 = scmp.ne.s32.totalorder %s167, %s168
      %p177 = scmp.eq.s32.totalorder %s26, 0
      %p178 = por %p176, %p177
      %p179 = scmp.ne.s32.totalorder %s167, %s168
      %p180 = scmp.eq.s32.totalorder %s27, 1
      %p181 = por %p179, %p180
      %p183 = scmp.ne.s32.totalorder %s168, %s182
      %p184 = scmp.eq.s32.totalorder %s27, 0
      %p185 = por %p183, %p184
      %s187 = sadd.s32 %s186, 1
      %p190 = scmp.eq.s32.totalorder %s21, 1
      %p191 = scmp.ne.s32.totalorder %s186, %s188
      %p192 = scmp.eq.s32.totalorder %s21, 0
      %p193 = por %p191, %p192
      %p194 = scmp.ne.s32.totalorder %s186, %s188
      %p195 = scmp.eq.s32.totalorder %s26, 1
      %p196 = por %p194, %p195
      %p197 = scmp.ne.s32.totalorder %s188, %s189
      %p198 = scmp.eq.s32.totalorder %s26, 0
      %p199 = por %p197, %p198
      %p200 = scmp.ne.s32.totalorder %s188, %s189
      %p201 = scmp.eq.s32.totalorder %s27, 1
      %p202 = por %p200, %p201
      %p204 = scmp.ne.s32.totalorder %s189, %s203
      %p205 = scmp.eq.s32.totalorder %s27, 0
      %p206 = por %p204, %p205
      %s208 = sadd.s32 %s207, 1
      %p211 = scmp.eq.s32.totalorder %s21, 1
      %p212 = scmp.ne.s32.totalorder %s207, %s209
      %p213 = scmp.eq.s32.totalorder %s21, 0
      %p214 = por %p212, %p213
      %p215 = scmp.ne.s32.totalorder %s207, %s209
      %p216 = scmp.eq.s32.totalorder %s26, 1
      %p217 = por %p215, %p216
      %p218 = scmp.ne.s32.totalorder %s209, %s210
      %p219 = scmp.eq.s32.totalorder %s26, 0
      %p220 = por %p218, %p219
      %p221 = scmp.ne.s32.totalorder %s209, %s210
      %p222 = scmp.eq.s32.totalorder %s27, 1
      %p223 = por %p221, %p222
      %p225 = scmp.ne.s32.totalorder %s210, %s224
      %p226 = scmp.eq.s32.totalorder %s27, 0
      %p227 = por %p225, %p226
      %s229 = sadd.s32 %s228, 1
      %p232 = scmp.eq.s32.totalorder %s21, 1
      %p233 = scmp.ne.s32.totalorder %s228, %s230
      %p234 = scmp.eq.s32.totalorder %s21, 0
      %p235 = por %p233, %p234
      %p236 = scmp.ne.s32.totalorder %s228, %s230
      %p237 = scmp.eq.s32.totalorder %s26, 1
      %p238 = por %p236, %p237
      %p239 = scmp.ne.s32.totalorder %s230, %s231
      %p240 = scmp.eq.s32.totalorder %s26, 0
      %p241 = por %p239, %p240
      %p242 = scmp.ne.s32.totalorder %s230, %s231
      %p243 = scmp.eq.s32.totalorder %s27, 1
      %p244 = por %p242, %p243
      %p246 = scmp.ne.s32.totalorder %s231, %s245
      %p247 = scmp.eq.s32.totalorder %s27, 0
      %p248 = por %p246, %p247
      %s250 = sadd.s32 %s249, 1
      %p253 = scmp.eq.s32.totalorder %s21, 1
      %p254 = scmp.ne.s32.totalorder %s249, %s251
      %p255 = scmp.eq.s32.totalorder %s21, 0
      %p256 = por %p254, %p255
      %p257 = scmp.ne.s32.totalorder %s249, %s251
      %p258 = scmp.eq.s32.totalorder %s26, 1
      %p259 = por %p257, %p258
      %p260 = scmp.ne.s32.totalorder %s251, %s252
      %p261 = scmp.eq.s32.totalorder %s26, 0
      %p262 = por %p260, %p261
      %p263 = scmp.ne.s32.totalorder %s251, %s252
      %p264 = scmp.eq.s32.totalorder %s27, 1
      %p265 = por %p263, %p264
      %p267 = scmp.ne.s32.totalorder %s252, %s266
      %p268 = scmp.eq.s32.totalorder %s27, 0
      %p269 = por %p267, %p268
      %s271 = sadd.s32 %s270, 1
      %p274 = scmp.eq.s32.totalorder %s21, 1
      %p275 = scmp.ne.s32.totalorder %s270, %s272
      %p276 = scmp.eq.s32.totalorder %s21, 0
      %p277 = por %p275, %p276
      %p278 = scmp.ne.s32.totalorder %s270, %s272
      %p279 = scmp.eq.s32.totalorder %s26, 1
      %p280 = por %p278, %p279
      %p281 = scmp.ne.s32.totalorder %s272, %s273
      %p282 = scmp.eq.s32.totalorder %s26, 0
      %p283 = por %p281, %p282
      %p284 = scmp.ne.s32.totalorder %s272, %s273
      %p285 = scmp.eq.s32.totalorder %s27, 1
      %p286 = por %p284, %p285
      %p288 = scmp.ne.s32.totalorder %s273, %s287
      %p289 = scmp.eq.s32.totalorder %s27, 0
      %p290 = por %p288, %p289
      %s292 = sadd.s32 %s291, 1
      %p295 = scmp.eq.s32.totalorder %s21, 1
      %p296 = scmp.ne.s32.totalorder %s291, %s293
      %p297 = scmp.eq.s32.totalorder %s21, 0
      %p298 = por %p296, %p297
      %p299 = scmp.ne.s32.totalorder %s291, %s293
      %p300 = scmp.eq.s32.totalorder %s26, 1
      %p301 = por %p299, %p300
      %p302 = scmp.ne.s32.totalorder %s293, %s294
      %p303 = scmp.eq.s32.totalorder %s26, 0
      %p304 = por %p302, %p303
      %p305 = scmp.ne.s32.totalorder %s293, %s294
      %p306 = scmp.eq.s32.totalorder %s27, 1
      %p307 = por %p305, %p306
      %p309 = scmp.ne.s32.totalorder %s294, %s308
      %p310 = scmp.eq.s32.totalorder %s27, 0
      %p311 = por %p309, %p310
      %s313 = sadd.s32 %s312, 1
      %p316 = scmp.eq.s32.totalorder %s21, 1
      %p317 = scmp.ne.s32.totalorder %s312, %s314
      %p318 = scmp.eq.s32.totalorder %s21, 0
      %p319 = por %p317, %p318
      %p320 = scmp.ne.s32.totalorder %s312, %s314
      %p321 = scmp.eq.s32.totalorder %s26, 1
      %p322 = por %p320, %p321
      %p323 = scmp.ne.s32.totalorder %s314, %s315
      %p324 = scmp.eq.s32.totalorder %s26, 0
      %p325 = por %p323, %p324
      %p326 = scmp.ne.s32.totalorder %s314, %s315
      %p327 = scmp.eq.s32.totalorder %s27, 1
      %p328 = por %p326, %p327
      %p330 = scmp.ne.s32.totalorder %s315, %s329
      %p331 = scmp.eq.s32.totalorder %s27, 0
      %p332 = por %p330, %p331
      %s333 = ssub.s32 %s21, %s28
      %p334 = scmp.eq.s32.totalorder %s333, 0
      %s336 = sadd.s32 %s335, 1
      %s337 = scalar_select %p334, %s335, %s336
      %p340 = pneg %p334
      %p341 = scmp.eq.s32.totalorder %s21, 1
      %p342 = por %p340, %p341
      %p343 = scmp.ne.s32.totalorder %s335, %s338
      %p344 = scmp.eq.s32.totalorder %s21, 0
      %p345 = por %p343, %p344
      %p346 = scmp.ne.s32.totalorder %s335, %s338
      %p347 = scmp.eq.s32.totalorder %s26, 1
      %p348 = por %p346, %p347
      %p349 = scmp.ne.s32.totalorder %s338, %s339
      %p350 = scmp.eq.s32.totalorder %s26, 0
      %p351 = por %p349, %p350
      %p352 = scmp.ne.s32.totalorder %s338, %s339
      %p353 = scmp.eq.s32.totalorder %s27, 1
      %p354 = por %p352, %p353
      %p356 = scmp.ne.s32.totalorder %s339, %s355
      %p357 = scmp.eq.s32.totalorder %s27, 0
      %p358 = por %p356, %p357
      %p359 = scmp.le.s32.totalorder 1, %s21
      %p360 = scmp.lt.s32.totalorder %s21, 3
      %p361 = pnand %p359, %p360
      %p362 = pneg %p361
      // Predicated region
      $region9: #{transformer_xl_forward.3} parent=5 // pred_check
        _
      $region10: #{transformer_xl_forward.3} parent=5 // pred_check_branch
        %364 = sbr.rel (%p361) target = $region12
      $region11: #{transformer_xl_forward.3} parent=5 // pred_region
        %s365 = ssub.s32 %s21, 1
        // Predicated region
        $region13: #{transformer_xl_forward.3} parent=11 // pred_check
          %p366 = pneg %p94
        $region14: #{transformer_xl_forward.3} parent=11 // pred_check_branch
          %368 = sbr.rel (%p366) target = $region16
        $region15: #{transformer_xl_forward.3} parent=11 // pred_region
          _
        $region16: #{transformer_xl_forward.3} parent=11 // pred_fallthru
          _
        // Predicated region
        $region17: #{transformer_xl_forward.3} parent=11 // pred_check
          %p369 = pneg %p115
        $region18: #{transformer_xl_forward.3} parent=11 // pred_check_branch
          %371 = sbr.rel (%p369) target = $region20
        $region19: #{transformer_xl_forward.3} parent=11 // pred_region
          _
        $region20: #{transformer_xl_forward.3} parent=11 // pred_fallthru
          _
        // Predicated region
        $region21: #{transformer_xl_forward.3} parent=11 // pred_check
          %p372 = pneg %p136
        $region22: #{transformer_xl_forward.3} parent=11 // pred_check_branch
          %374 = sbr.rel (%p372) target = $region24
        $region23: #{transformer_xl_forward.3} parent=11 // pred_region
          _
        $region24: #{transformer_xl_forward.3} parent=11 // pred_fallthru
          _
        // Predicated region
        $region25: #{transformer_xl_forward.3} parent=11 // pred_check
          %p375 = pneg %p157
        $region26: #{transformer_xl_forward.3} parent=11 // pred_check_branch
          %377 = sbr.rel (%p375) target = $region28
        $region27: #{transformer_xl_forward.3} parent=11 // pred_region
          _
        $region28: #{transformer_xl_forward.3} parent=11 // pred_fallthru
          _
        // Predicated region
        $region29: #{transformer_xl_forward.3} parent=11 // pred_check
          %p378 = pneg %p178
        $region30: #{transformer_xl_forward.3} parent=11 // pred_check_branch
          %380 = sbr.rel (%p378) target = $region32
        $region31: #{transformer_xl_forward.3} parent=11 // pred_region
          _
        $region32: #{transformer_xl_forward.3} parent=11 // pred_fallthru
          _
        // Predicated region
        $region33: #{transformer_xl_forward.3} parent=11 // pred_check
          %p381 = pneg %p199
        $region34: #{transformer_xl_forward.3} parent=11 // pred_check_branch
          %383 = sbr.rel (%p381) target = $region36
        $region35: #{transformer_xl_forward.3} parent=11 // pred_region
          _
        $region36: #{transformer_xl_forward.3} parent=11 // pred_fallthru
          _
        // Predicated region
        $region37: #{transformer_xl_forward.3} parent=11 // pred_check
          %p384 = pneg %p220
        $region38: #{transformer_xl_forward.3} parent=11 // pred_check_branch
          %386 = sbr.rel (%p384) target = $region40
        $region39: #{transformer_xl_forward.3} parent=11 // pred_region
          _
        $region40: #{transformer_xl_forward.3} parent=11 // pred_fallthru
          _
        // Predicated region
        $region41: #{transformer_xl_forward.3} parent=11 // pred_check
          %p387 = pneg %p241
        $region42: #{transformer_xl_forward.3} parent=11 // pred_check_branch
          %389 = sbr.rel (%p387) target = $region44
        $region43: #{transformer_xl_forward.3} parent=11 // pred_region
          _
        $region44: #{transformer_xl_forward.3} parent=11 // pred_fallthru
          _
        // Predicated region
        $region45: #{transformer_xl_forward.3} parent=11 // pred_check
          %p390 = pneg %p262
        $region46: #{transformer_xl_forward.3} parent=11 // pred_check_branch
          %392 = sbr.rel (%p390) target = $region48
        $region47: #{transformer_xl_forward.3} parent=11 // pred_region
          %s394 = ssub.s32 2048, 2048
          %395 = vsyncadd [#allocation3], %s394
          %s396 = sshll.u32 [#allocation2], 4
          %s397 = int_to_ptr.vmem [resolvable:$true] %s396
          %402 = dma.hbm_to_vmem [thread:$0]  %s10, 2048, %s397, [#allocation3], 128, 128, 8
        $region48: #{transformer_xl_forward.3} parent=11 // pred_fallthru
          _
        // Predicated region
        $region49: #{transformer_xl_forward.3} parent=11 // pred_check
          %p403 = pneg %p283
        $region50: #{transformer_xl_forward.3} parent=11 // pred_check_branch
          %405 = sbr.rel (%p403) target = $region52
        $region51: #{transformer_xl_forward.3} parent=11 // pred_region
          _
        $region52: #{transformer_xl_forward.3} parent=11 // pred_fallthru
          _
        // Predicated region
        $region53: #{transformer_xl_forward.3} parent=11 // pred_check
          %p406 = pneg %p304
        $region54: #{transformer_xl_forward.3} parent=11 // pred_check_branch
          %408 = sbr.rel (%p406) target = $region56
        $region55: #{transformer_xl_forward.3} parent=11 // pred_region
          _
        $region56: #{transformer_xl_forward.3} parent=11 // pred_fallthru
          _
        // Predicated region
        $region57: #{transformer_xl_forward.3} parent=11 // pred_check
          %p409 = pneg %p325
        $region58: #{transformer_xl_forward.3} parent=11 // pred_check_branch
          %411 = sbr.rel (%p409) target = $region60
        $region59: #{transformer_xl_forward.3} parent=11 // pred_region
          _
        $region60: #{transformer_xl_forward.3} parent=11 // pred_fallthru
          _
      $region12: #{transformer_xl_forward.3} parent=5 // pred_fallthru
        _
      %p412 = scmp.lt.s32.totalorder %s21, 2
      // Predicated region
      $region61: #{transformer_xl_forward.3} parent=5 // pred_check
        %p413 = pneg %p412
      $region62: #{transformer_xl_forward.3} parent=5 // pred_check_branch
        %415 = sbr.rel (%p413) target = $region64
      $region63: #{transformer_xl_forward.3} parent=5 // pred_region
        // Predicated region
        $region65: #{transformer_xl_forward.3} parent=63 // pred_check
          %p416 = pneg %p41
        $region66: #{transformer_xl_forward.3} parent=63 // pred_check_branch
          %418 = sbr.rel (%p416) target = $region68
        $region67: #{transformer_xl_forward.3} parent=63 // pred_region
          %p419 = scmp.lt.s32.totalorder %s21, 1
          %s420 = scalar_select %p419, %s21, 1
          %s421 = smul.addr %s420, 2
          %s422 = smul.addr %s421, 8
          %s423 = scalar_lea.vmem %s0, %s422
        $region68: #{transformer_xl_forward.3} parent=63 // pred_fallthru
          _
        // Predicated region
        $region69: #{transformer_xl_forward.3} parent=63 // pred_check
          %p424 = pneg %p67
        $region70: #{transformer_xl_forward.3} parent=63 // pred_check_branch
          %426 = sbr.rel (%p424) target = $region72
        $region71: #{transformer_xl_forward.3} parent=63 // pred_region
          %p427 = scmp.lt.s32.totalorder %s21, 1
          %s428 = scalar_select %p427, %s21, 1
          %s429 = smul.addr %s428, 2
          %s430 = smul.addr %s429, 8
          %s431 = scalar_lea.vmem %s1, %s430
        $region72: #{transformer_xl_forward.3} parent=63 // pred_fallthru
          _
      $region64: #{transformer_xl_forward.3} parent=5 // pred_fallthru
        _
      %p432 = scmp.le.s32.totalorder 1, %s21
      %p433 = scmp.lt.s32.totalorder %s21, 3
      %p434 = pnand %p432, %p433
      %p435 = pneg %p434
      // Predicated region
      $region73: #{transformer_xl_forward.3} parent=5 // pred_check
        _
      $region74: #{transformer_xl_forward.3} parent=5 // pred_check_branch
        %437 = sbr.rel (%p434) target = $region76
      $region75: #{transformer_xl_forward.3} parent=5 // pred_region
        %s438 = ssub.s32 %s21, 1
        // Predicated region
        $region77: #{transformer_xl_forward.3} parent=75 // pred_check
          %p439 = pneg %p262
        $region78: #{transformer_xl_forward.3} parent=75 // pred_check_branch
          %441 = sbr.rel (%p439) target = $region80
        $region79: #{transformer_xl_forward.3} parent=75 // pred_region
          %442 = dma.done [#allocation3], 2048
        $region80: #{transformer_xl_forward.3} parent=75 // pred_fallthru
          _
        %p443 = scmp.lt.s32.totalorder %s26, 1
        %s444 = scalar_select %p443, %s26, 1
        %s445 = smul.addr %s444, 2
        %s446 = smul.addr %s445, 8
        %s447 = scalar_lea.vmem %s0, %s446
        %p448 = pneg %p47
        %p449 = pneg %p44
        %p450 = scmp.lt.s32.totalorder %s26, 1
        %s451 = scalar_select %p450, %s26, 1
        %s452 = smul.addr %s451, 2
        %s453 = smul.addr %s452, 8
        %s454 = scalar_lea.vmem %s1, %s453
        %p455 = pneg %p73
        %p456 = pneg %p70
        %p457 = pneg %p94
        %p458 = pneg %p91
        %p459 = pneg %p115
        %p460 = pneg %p112
        %p461 = pneg %p136
        %p462 = pneg %p133
        %p463 = pneg %p157
        %p464 = pneg %p154
        %p465 = pneg %p178
        %p466 = pneg %p175
        %p467 = pneg %p199
        %p468 = pneg %p196
        %p469 = pneg %p220
        %p470 = pneg %p217
        %p471 = pneg %p241
        %p472 = pneg %p238
        %p473 = pneg %p262
        %p474 = pneg %p259
        %p475 = pneg %p283
        %p476 = pneg %p280
        %p477 = pneg %p304
        %p478 = pneg %p301
        %p479 = pneg %p325
        %p480 = pneg %p322
        %p481 = pneg %p351
        %p482 = pneg %p348
        %p483 = scmp.lt.s32.totalorder %s26, 1
        %s484 = scalar_select %p483, %s26, 1
        %s485 = smul.addr %s484, 2
        %s486 = smul.addr %s485, 8
        %s487 = scalar_lea.vmem %s14, %s486
        %p488 = scmp.lt.s32.totalorder %s26, 1
        %s489 = scalar_select %p488, %s26, 1
        %s490 = smul.addr %s489, 2
        %s491 = smul.addr %s490, 8
        %s492 = scalar_lea.vmem %s0, %s491
        %p493 = scmp.lt.s32.totalorder %s26, 1
        %s494 = scalar_select %p493, %s26, 1
        %s495 = smul.addr %s494, 2
        %s496 = smul.addr %s495, 8
        %s497 = scalar_lea.vmem %s1, %s496
        %p498 = scmp.lt.s32.totalorder %s26, 1
        %s499 = scalar_select %p498, %s26, 1
        %s500 = smul.addr %s499, 2
        %s501 = smul.addr %s500, 8
        %s502 = scalar_lea.vmem %s14, %s501
        %v503 = vld [vmem:[%s492] sm:$0xff]
        %v504 = vld [vmem:[%s492 + $0x8] sm:$0xff]
        %v505 = vld [vmem:[%s497] sm:$0xff]
        %v506 = vld [vmem:[%s497 + $0x8] sm:$0xff]
        %v507 = vld [vmem:[%s2] sm:$0xff]
        %v508 = vld [vmem:[%s2 + $0x8] sm:$0xff]
        %v509 = vld [vmem:[%s2 + $0x10] sm:$0xff]
        %v510 = vld [vmem:[%s2 + $0x18] sm:$0xff]
        %v511 = vld [vmem:[%s2 + $0x20] sm:$0xff]
        %v512 = vld [vmem:[%s2 + $0x28] sm:$0xff]
        %v513 = vld [vmem:[%s2 + $0x30] sm:$0xff]
        %v514 = vld [vmem:[%s2 + $0x38] sm:$0xff]
        %v515 = vld [vmem:[%s2 + $0x40] sm:$0xff]
        %v516 = vld [vmem:[%s2 + $0x48] sm:$0xff]
        %v517 = vld [vmem:[%s2 + $0x50] sm:$0xff]
        %v518 = vld [vmem:[%s2 + $0x58] sm:$0xff]
        %v519 = vld [vmem:[%s2 + $0x60] sm:$0xff]
        %v520 = vld [vmem:[%s2 + $0x68] sm:$0xff]
        %v521 = vld [vmem:[%s2 + $0x70] sm:$0xff]
        %v522 = vld [vmem:[%s2 + $0x78] sm:$0xff]
        %v523 = vld [vmem:[%s2 + $0x80] sm:$0xff]
        %v524 = vld [vmem:[%s2 + $0x88] sm:$0xff]
        %v525 = vld [vmem:[%s2 + $0x90] sm:$0xff]
        %v526 = vld [vmem:[%s2 + $0x98] sm:$0xff]
        %v527 = vld [vmem:[%s2 + $0xa0] sm:$0xff]
        %v528 = vld [vmem:[%s2 + $0xa8] sm:$0xff]
        %v529 = vld [vmem:[%s2 + $0xb0] sm:$0xff]
        %v530 = vld [vmem:[%s2 + $0xb8] sm:$0xff]
        %v531 = vld [vmem:[%s2 + $0xc0] sm:$0xff]
        %v532 = vld [vmem:[%s2 + $0xc8] sm:$0xff]
        %v533 = vld [vmem:[%s2 + $0xd0] sm:$0xff]
        %v534 = vld [vmem:[%s2 + $0xd8] sm:$0xff]
        %v535 = vld [vmem:[%s2 + $0xe0] sm:$0xff]
        %v536 = vld [vmem:[%s2 + $0xe8] sm:$0xff]
        %v537 = vld [vmem:[%s2 + $0xf0] sm:$0xff]
        %v538 = vld [vmem:[%s2 + $0xf8] sm:$0xff]
        %v539 = vld [vmem:[%s2 + $0x100] sm:$0xff]
        %v540 = vld [vmem:[%s2 + $0x108] sm:$0xff]
        %v541 = vld [vmem:[%s2 + $0x110] sm:$0xff]
        %v542 = vld [vmem:[%s2 + $0x118] sm:$0xff]
        %v543 = vld [vmem:[%s2 + $0x120] sm:$0xff]
        %v544 = vld [vmem:[%s2 + $0x128] sm:$0xff]
        %v545 = vld [vmem:[%s2 + $0x130] sm:$0xff]
        %v546 = vld [vmem:[%s2 + $0x138] sm:$0xff]
        %v547 = vld [vmem:[%s2 + $0x140] sm:$0xff]
        %v548 = vld [vmem:[%s2 + $0x148] sm:$0xff]
        %v549 = vld [vmem:[%s2 + $0x150] sm:$0xff]
        %v550 = vld [vmem:[%s2 + $0x158] sm:$0xff]
        %v551 = vld [vmem:[%s2 + $0x160] sm:$0xff]
        %v552 = vld [vmem:[%s2 + $0x168] sm:$0xff]
        %v553 = vld [vmem:[%s2 + $0x170] sm:$0xff]
        %v554 = vld [vmem:[%s2 + $0x178] sm:$0xff]
        %v555 = vld [vmem:[%s3] sm:$0x7]
        %v557 = vlaneseq
        %v558 = vshrl.u32 %v557, 7
        %v559 = vsub.s32 0, %v558
        %v560 = vrot.slane %v555, %v559
        %v561 = vlaneseq
        %v562 = vshrl.u32 %v561, 7
        %v563 = vsub.s32 1, %v562
        %v564 = vrot.slane %v555, %v563
        %v565 = vlaneseq
        %v566 = vshrl.u32 %v565, 7
        %v567 = vsub.s32 2, %v566
        %v568 = vrot.slane %v555, %v567
        %572 = vmatprep.subr.mxu0 %v553
        %573 = vmatpush1.msra.mxu0 %v552
        %574 = vmatprep.subr.mxu0 %v550
        %575 = vmatpush1.msra.mxu0 %v549
        %576 = vmatprep.subr.mxu0 %v547
        %577 = vmatpush1.msra.mxu0 %v546
        %578 = vmatprep.subr.mxu0 %v544
        %579 = vmatpush1.msra.mxu0 %v543
        %580 = vmatprep.subr.mxu0 %v541
        %581 = vmatpush1.msra.mxu0 %v540
        %582 = vmatprep.subr.mxu0 %v538
        %583 = vmatpush1.msra.mxu0 %v537
        %584 = vmatprep.subr.mxu0 %v535
        %585 = vmatpush1.msra.mxu0 %v534
        %586 = vmatprep.subr.mxu0 %v532
        %587 = vmatpush1.msra.mxu0 %v531
        %588 = vmatprep.subr.mxu0 %v529
        %589 = vmatpush1.msra.mxu0 %v528
        %590 = vmatprep.subr.mxu0 %v526
        %591 = vmatpush1.msra.mxu0 %v525
        %592 = vmatprep.subr.mxu0 %v523
        %593 = vmatpush1.msra.mxu0 %v522
        %594 = vmatprep.subr.mxu0 %v520
        %595 = vmatpush1.msra.mxu0 %v519
        %596 = vmatprep.subr.mxu0 %v517
        %597 = vmatpush1.msra.mxu0 %v516
        %598 = vmatprep.subr.mxu0 %v514
        %599 = vmatpush1.msra.mxu0 %v513
        %600 = vmatprep.subr.mxu0 %v511
        %601 = vmatpush1.msra.mxu0 %v510
        %602 = vmatprep.subr.mxu0 %v508
        %603 = vmatpush1.msra.mxu0 %v507
        %604 = vmatprep.subr.mxu0 0.0
        %605 = vmatpush2.msra.mxu0 0.0
        %606 = vmatprep.subr.mxu0 0.0
        %607 = vmatpush2.msra.mxu0 0.0
        %608 = vmatprep.subr.mxu0 0.0
        %609 = vmatpush2.msra.mxu0 0.0
        %610 = vmatprep.subr.mxu0 0.0
        %611 = vmatpush2.msra.mxu0 0.0
        %612 = vmatprep.subr.mxu0 0.0
        %613 = vmatpush2.msra.mxu0 0.0
        %614 = vmatprep.subr.mxu0 0.0
        %615 = vmatpush2.msra.mxu0 0.0
        %616 = vmatprep.subr.mxu0 0.0
        %617 = vmatpush2.msra.mxu0 0.0
        %618 = vmatprep.subr.mxu0 0.0
        %619 = vmatpush2.msra.mxu0 0.0
        %620 = vmatprep.subr.mxu0 0.0
        %621 = vmatpush2.msra.mxu0 0.0
        %622 = vmatprep.subr.mxu0 0.0
        %623 = vmatpush2.msra.mxu0 0.0
        %624 = vmatprep.subr.mxu0 0.0
        %625 = vmatpush2.msra.mxu0 0.0
        %626 = vmatprep.subr.mxu0 0.0
        %627 = vmatpush2.msra.mxu0 0.0
        %628 = vmatprep.subr.mxu0 0.0
        %629 = vmatpush2.msra.mxu0 0.0
        %630 = vmatprep.subr.mxu0 0.0
        %631 = vmatpush2.msra.mxu0 0.0
        %632 = vmatprep.subr.mxu0 0.0
        %633 = vmatpush2.msra.mxu0 0.0
        %634 = vmatprep.subr.mxu0 0.0
        %635 = vmatpush2.msra.mxu0 0.0
        %636 = vmatprep.mubr.f32.mxu0 0.0
        %637 = vmatmul.mubr.f32.gmra.mxu0 %v503
        %v638 = vpop.f32.mrf.mxu0
        %v639 = vadd.f32 %v560, %v638
        %v640 = vpop.f32.mrf.mxu0
        %v641 = vadd.f32 %v564, %v640
        %642 = vmatprep.mubr.f32.mxu0 0.0
        %643 = vmatmul.mubr.f32.gmra.mxu0 %v504
        %v644 = vpop.f32.mrf.mxu0
        %v645 = vadd.f32 %v560, %v644
        %v646 = vpop.f32.mrf.mxu0
        %v647 = vadd.f32 %v564, %v646
        %648 = vdwg.mxu0
        %649 = vmatprep.subr.mxu0 0.0
        %650 = vmatpush1.msra.mxu0 %v554
        %651 = vmatprep.subr.mxu0 0.0
        %652 = vmatpush1.msra.mxu0 %v551
        %653 = vmatprep.subr.mxu0 0.0
        %654 = vmatpush1.msra.mxu0 %v548
        %655 = vmatprep.subr.mxu0 0.0
        %656 = vmatpush1.msra.mxu0 %v545
        %657 = vmatprep.subr.mxu0 0.0
        %658 = vmatpush1.msra.mxu0 %v542
        %659 = vmatprep.subr.mxu0 0.0
        %660 = vmatpush1.msra.mxu0 %v539
        %661 = vmatprep.subr.mxu0 0.0
        %662 = vmatpush1.msra.mxu0 %v536
        %663 = vmatprep.subr.mxu0 0.0
        %664 = vmatpush1.msra.mxu0 %v533
        %665 = vmatprep.subr.mxu0 0.0
        %666 = vmatpush1.msra.mxu0 %v530
        %667 = vmatprep.subr.mxu0 0.0
        %668 = vmatpush1.msra.mxu0 %v527
        %669 = vmatprep.subr.mxu0 0.0
        %670 = vmatpush1.msra.mxu0 %v524
        %671 = vmatprep.subr.mxu0 0.0
        %672 = vmatpush1.msra.mxu0 %v521
        %673 = vmatprep.subr.mxu0 0.0
        %674 = vmatpush1.msra.mxu0 %v518
        %675 = vmatprep.subr.mxu0 0.0
        %676 = vmatpush1.msra.mxu0 %v515
        %677 = vmatprep.subr.mxu0 0.0
        %678 = vmatpush1.msra.mxu0 %v512
        %679 = vmatprep.subr.mxu0 0.0
        %680 = vmatpush1.msra.mxu0 %v509
        %681 = vmatprep.subr.mxu0 0.0
        %682 = vmatpush2.msra.mxu0 0.0
        %683 = vmatprep.subr.mxu0 0.0
        %684 = vmatpush2.msra.mxu0 0.0
        %685 = vmatprep.subr.mxu0 0.0
        %686 = vmatpush2.msra.mxu0 0.0
        %687 = vmatprep.subr.mxu0 0.0
        %688 = vmatpush2.msra.mxu0 0.0
        %689 = vmatprep.subr.mxu0 0.0
        %690 = vmatpush2.msra.mxu0 0.0
        %691 = vmatprep.subr.mxu0 0.0
        %692 = vmatpush2.msra.mxu0 0.0
        %693 = vmatprep.subr.mxu0 0.0
        %694 = vmatpush2.msra.mxu0 0.0
        %695 = vmatprep.subr.mxu0 0.0
        %696 = vmatpush2.msra.mxu0 0.0
        %697 = vmatprep.subr.mxu0 0.0
        %698 = vmatpush2.msra.mxu0 0.0
        %699 = vmatprep.subr.mxu0 0.0
        %700 = vmatpush2.msra.mxu0 0.0
        %701 = vmatprep.subr.mxu0 0.0
        %702 = vmatpush2.msra.mxu0 0.0
        %703 = vmatprep.subr.mxu0 0.0
        %704 = vmatpush2.msra.mxu0 0.0
        %705 = vmatprep.subr.mxu0 0.0
        %706 = vmatpush2.msra.mxu0 0.0
        %707 = vmatprep.subr.mxu0 0.0
        %708 = vmatpush2.msra.mxu0 0.0
        %709 = vmatprep.subr.mxu0 0.0
        %710 = vmatpush2.msra.mxu0 0.0
        %711 = vmatprep.subr.mxu0 0.0
        %712 = vmatpush2.msra.mxu0 0.0
        %713 = vmatprep.mubr.f32.mxu0 0.0
        %714 = vmatmul.mubr.f32.gmra.mxu0 %v503
        %v715 = vpop.f32.mrf.mxu0
        %v716 = vadd.f32 %v568, %v715
        %v717 = vpop.f32.mrf.mxu0
        %718 = vmatprep.mubr.f32.mxu0 0.0
        %719 = vmatmul.mubr.f32.gmra.mxu0 %v504
        %v720 = vpop.f32.mrf.mxu0
        %v721 = vadd.f32 %v568, %v720
        %v722 = vpop.f32.mrf.mxu0
        %723 = vdwg.mxu0
        %v724 = vld [vmem:[%s4] sm:$0xff]
        %v725 = vld [vmem:[%s4 + $0x8] sm:$0xff]
        %v726 = vld [vmem:[%s4 + $0x10] sm:$0xff]
        %v727 = vld [vmem:[%s4 + $0x18] sm:$0xff]
        %v728 = vld [vmem:[%s4 + $0x20] sm:$0xff]
        %v729 = vld [vmem:[%s4 + $0x28] sm:$0xff]
        %v730 = vld [vmem:[%s4 + $0x30] sm:$0xff]
        %v731 = vld [vmem:[%s4 + $0x38] sm:$0xff]
        %v732 = vld [vmem:[%s4 + $0x40] sm:$0xff]
        %v733 = vld [vmem:[%s4 + $0x48] sm:$0xff]
        %v734 = vld [vmem:[%s4 + $0x50] sm:$0xff]
        %v735 = vld [vmem:[%s4 + $0x58] sm:$0xff]
        %v736 = vld [vmem:[%s4 + $0x60] sm:$0xff]
        %v737 = vld [vmem:[%s4 + $0x68] sm:$0xff]
        %v738 = vld [vmem:[%s4 + $0x70] sm:$0xff]
        %v739 = vld [vmem:[%s4 + $0x78] sm:$0xff]
        %v740 = vld [vmem:[%s5] sm:$0x1]
        %v742 = vlaneseq
        %v743 = vshrl.u32 %v742, 7
        %v744 = vsub.s32 0, %v743
        %v745 = vrot.slane %v740, %v744
        %vm747 = vcmask 261120
        %v749 = vsel %vm747, %v639, 0
        %v752 = vsel %vm747, %v645, 0
        %v755 = vsel %vm747, %v641, 0
        %v758 = vsel %vm747, %v647, 0
        %760 = vmatprep.subr.mxu0 0.0
        %761 = vmatpush1.xpose.msra.mxu0 0.0
        %762 = vmatprep.subr.mxu0 0.0
        %763 = vmatpush1.xpose.msra.mxu0 0.0
        %764 = vmatprep.subr.mxu0 0.0
        %765 = vmatpush1.xpose.msra.mxu0 0.0
        %766 = vmatprep.subr.mxu0 0.0
        %767 = vmatpush1.xpose.msra.mxu0 0.0
        %768 = vmatprep.subr.mxu0 0.0
        %769 = vmatpush1.xpose.msra.mxu0 0.0
        %770 = vmatprep.subr.mxu0 0.0
        %771 = vmatpush1.xpose.msra.mxu0 0.0
        %772 = vmatprep.subr.mxu0 0.0
        %773 = vmatpush1.xpose.msra.mxu0 0.0
        %774 = vmatprep.subr.mxu0 0.0
        %775 = vmatpush1.xpose.msra.mxu0 0.0
        %776 = vmatprep.subr.mxu0 0.0
        %777 = vmatpush1.xpose.msra.mxu0 0.0
        %778 = vmatprep.subr.mxu0 0.0
        %779 = vmatpush1.xpose.msra.mxu0 0.0
        %780 = vmatprep.subr.mxu0 0.0
        %781 = vmatpush1.xpose.msra.mxu0 0.0
        %782 = vmatprep.subr.mxu0 0.0
        %783 = vmatpush1.xpose.msra.mxu0 0.0
        %784 = vmatprep.subr.mxu0 0.0
        %785 = vmatpush1.xpose.msra.mxu0 0.0
        %786 = vmatprep.subr.mxu0 0.0
        %787 = vmatpush1.xpose.msra.mxu0 0.0
        %788 = vmatprep.subr.mxu0 0.0
        %789 = vmatpush1.xpose.msra.mxu0 %v758
        %790 = vmatprep.subr.mxu0 0.0
        %791 = vmatpush1.xpose.msra.mxu0 %v755
        %792 = vmatprep.subr.mxu0 0.0
        %793 = vmatpush2.xpose.msra.mxu0 0.0
        %794 = vmatprep.subr.mxu0 0.0
        %795 = vmatpush2.xpose.msra.mxu0 0.0
        %796 = vmatprep.subr.mxu0 0.0
        %797 = vmatpush2.xpose.msra.mxu0 0.0
        %798 = vmatprep.subr.mxu0 0.0
        %799 = vmatpush2.xpose.msra.mxu0 0.0
        %800 = vmatprep.subr.mxu0 0.0
        %801 = vmatpush2.xpose.msra.mxu0 0.0
        %802 = vmatprep.subr.mxu0 0.0
        %803 = vmatpush2.xpose.msra.mxu0 0.0
        %804 = vmatprep.subr.mxu0 0.0
        %805 = vmatpush2.xpose.msra.mxu0 0.0
        %806 = vmatprep.subr.mxu0 0.0
        %807 = vmatpush2.xpose.msra.mxu0 0.0
        %808 = vmatprep.subr.mxu0 0.0
        %809 = vmatpush2.xpose.msra.mxu0 0.0
        %810 = vmatprep.subr.mxu0 0.0
        %811 = vmatpush2.xpose.msra.mxu0 0.0
        %812 = vmatprep.subr.mxu0 0.0
        %813 = vmatpush2.xpose.msra.mxu0 0.0
        %814 = vmatprep.subr.mxu0 0.0
        %815 = vmatpush2.xpose.msra.mxu0 0.0
        %816 = vmatprep.subr.mxu0 0.0
        %817 = vmatpush2.xpose.msra.mxu0 0.0
        %818 = vmatprep.subr.mxu0 0.0
        %819 = vmatpush2.xpose.msra.mxu0 0.0
        %820 = vmatprep.subr.mxu0 0.0
        %821 = vmatpush2.xpose.msra.mxu0 0.0
        %822 = vmatprep.subr.mxu0 0.0
        %823 = vmatpush2.xpose.msra.mxu0 0.0
        %824 = vmatprep.mubr.f32.mxu0 0.0
        %825 = vmatmul.mubr.f32.gmra.mxu0 %v749
        %v826 = vpop.f32.mrf.mxu0
        %v827 = vadd.f32 0.0, %v826
        %v828 = vpop.f32.mrf.mxu0
        %829 = vmatprep.mubr.f32.mxu0 0.0
        %830 = vmatmul.mubr.f32.gmra.mxu0 %v752
        %v831 = vpop.f32.mrf.mxu0
        %v832 = vadd.f32 0.0, %v831
        %v833 = vpop.f32.mrf.mxu0
        %834 = vdwg.mxu0
        %v835 = vmul.f32 %v827, 0.17677669
        %v836 = vmul.f32 %v832, 0.17677669
        %v837 = vadd.f32 %v835, %v505
        %v838 = vadd.f32 %v836, %v506
        %vm839 = vcmask 130048
        %v840 = vsel %vm839, %v837, -inf
        %841 = vmax.xlane.f32.xlu0 %v840
        %v842 = vpop.xlane.xlu0 %841
        %v843 = vsel %vm839, %v838, -inf
        %844 = vmax.xlane.f32.xlu0 %v843
        %v845 = vpop.xlane.xlu0 %844
        %v846 = vsub.f32 %v837, %v842
        %v847 = vsub.f32 %v838, %v845
        %v848 = vmul.f32 %v846, 1.442695
        %v849 = vpow.pop %v848
        %v850 = vmul.f32 %v847, 1.442695
        %v851 = vpow.pop %v850
        %v852 = vsel %vm839, %v849, 0.0
        %853 = vadd.xlane.f32.xlu0 %v852
        %v854 = vpop.xlane.xlu0 %853
        %v855 = vsel %vm839, %v851, 0.0
        %856 = vadd.xlane.f32.xlu0 %v855
        %v857 = vpop.xlane.xlu0 %856
        %v858 = vmax.f32 %v854, 1e-30
        %v859 = vmax.f32 %v857, 1e-30
        %v860 = vrcp.pop %v858
        %v861 = vrcp.pop %v859
        %v862 = vmul.f32 %v849, %v860
        %v863 = vmul.f32 %v851, %v861
        %v865 = vsel %vm839, %v862, 0
        %v868 = vsel %vm839, %v863, 0
        %870 = vmatprep.subr.mxu0 0.0
        %871 = vmatpush1.msra.mxu0 0.0
        %872 = vmatprep.subr.mxu0 0.0
        %873 = vmatpush1.msra.mxu0 0.0
        %874 = vmatprep.subr.mxu0 0.0
        %875 = vmatpush1.msra.mxu0 0.0
        %876 = vmatprep.subr.mxu0 0.0
        %877 = vmatpush1.msra.mxu0 0.0
        %878 = vmatprep.subr.mxu0 0.0
        %879 = vmatpush1.msra.mxu0 0.0
        %880 = vmatprep.subr.mxu0 0.0
        %881 = vmatpush1.msra.mxu0 0.0
        %882 = vmatprep.subr.mxu0 0.0
        %883 = vmatpush1.msra.mxu0 0.0
        %884 = vmatprep.subr.mxu0 0.0
        %885 = vmatpush1.msra.mxu0 0.0
        %886 = vmatprep.subr.mxu0 0.0
        %887 = vmatpush1.msra.mxu0 0.0
        %888 = vmatprep.subr.mxu0 0.0
        %889 = vmatpush1.msra.mxu0 0.0
        %890 = vmatprep.subr.mxu0 0.0
        %891 = vmatpush1.msra.mxu0 0.0
        %892 = vmatprep.subr.mxu0 0.0
        %893 = vmatpush1.msra.mxu0 0.0
        %894 = vmatprep.subr.mxu0 0.0
        %895 = vmatpush1.msra.mxu0 0.0
        %896 = vmatprep.subr.mxu0 0.0
        %897 = vmatpush1.msra.mxu0 0.0
        %898 = vmatprep.subr.mxu0 0.0
        %899 = vmatpush1.msra.mxu0 %v721
        %900 = vmatprep.subr.mxu0 0.0
        %901 = vmatpush1.msra.mxu0 %v716
        %902 = vmatprep.subr.mxu0 0.0
        %903 = vmatpush2.msra.mxu0 0.0
        %904 = vmatprep.subr.mxu0 0.0
        %905 = vmatpush2.msra.mxu0 0.0
        %906 = vmatprep.subr.mxu0 0.0
        %907 = vmatpush2.msra.mxu0 0.0
        %908 = vmatprep.subr.mxu0 0.0
        %909 = vmatpush2.msra.mxu0 0.0
        %910 = vmatprep.subr.mxu0 0.0
        %911 = vmatpush2.msra.mxu0 0.0
        %912 = vmatprep.subr.mxu0 0.0
        %913 = vmatpush2.msra.mxu0 0.0
        %914 = vmatprep.subr.mxu0 0.0
        %915 = vmatpush2.msra.mxu0 0.0
        %916 = vmatprep.subr.mxu0 0.0
        %917 = vmatpush2.msra.mxu0 0.0
        %918 = vmatprep.subr.mxu0 0.0
        %919 = vmatpush2.msra.mxu0 0.0
        %920 = vmatprep.subr.mxu0 0.0
        %921 = vmatpush2.msra.mxu0 0.0
        %922 = vmatprep.subr.mxu0 0.0
        %923 = vmatpush2.msra.mxu0 0.0
        %924 = vmatprep.subr.mxu0 0.0
        %925 = vmatpush2.msra.mxu0 0.0
        %926 = vmatprep.subr.mxu0 0.0
        %927 = vmatpush2.msra.mxu0 0.0
        %928 = vmatprep.subr.mxu0 0.0
        %929 = vmatpush2.msra.mxu0 0.0
        %930 = vmatprep.subr.mxu0 0.0
        %931 = vmatpush2.msra.mxu0 0.0
        %932 = vmatprep.subr.mxu0 0.0
        %933 = vmatpush2.msra.mxu0 0.0
        %934 = vmatprep.mubr.f32.mxu0 0.0
        %935 = vmatmul.mubr.f32.gmra.mxu0 %v865
        %v936 = vpop.f32.mrf.mxu0
        %v937 = vadd.f32 0.0, %v936
        %v938 = vpop.f32.mrf.mxu0
        %939 = vmatprep.mubr.f32.mxu0 0.0
        %940 = vmatmul.mubr.f32.gmra.mxu0 %v868
        %v941 = vpop.f32.mrf.mxu0
        %v942 = vadd.f32 0.0, %v941
        %v943 = vpop.f32.mrf.mxu0
        %944 = vdwg.mxu0
        %v946 = vsel %vm747, %v937, 0
        %v949 = vsel %vm747, %v942, 0
        %951 = vmatprep.subr.mxu0 0.0
        %952 = vmatpush1.msra.mxu0 0.0
        %953 = vmatprep.subr.mxu0 0.0
        %954 = vmatpush1.msra.mxu0 0.0
        %955 = vmatprep.subr.mxu0 0.0
        %956 = vmatpush1.msra.mxu0 0.0
        %957 = vmatprep.subr.mxu0 0.0
        %958 = vmatpush1.msra.mxu0 0.0
        %959 = vmatprep.subr.mxu0 0.0
        %960 = vmatpush1.msra.mxu0 0.0
        %961 = vmatprep.subr.mxu0 0.0
        %962 = vmatpush1.msra.mxu0 0.0
        %963 = vmatprep.subr.mxu0 0.0
        %964 = vmatpush1.msra.mxu0 0.0
        %965 = vmatprep.subr.mxu0 0.0
        %966 = vmatpush1.msra.mxu0 0.0
        %967 = vmatprep.subr.mxu0 0.0
        %968 = vmatpush1.msra.mxu0 0.0
        %969 = vmatprep.subr.mxu0 0.0
        %970 = vmatpush1.msra.mxu0 0.0
        %971 = vmatprep.subr.mxu0 0.0
        %972 = vmatpush1.msra.mxu0 0.0
        %973 = vmatprep.subr.mxu0 0.0
        %974 = vmatpush1.msra.mxu0 0.0
        %975 = vmatprep.subr.mxu0 0.0
        %976 = vmatpush1.msra.mxu0 %v727
        %977 = vmatprep.subr.mxu0 0.0
        %978 = vmatpush1.msra.mxu0 %v726
        %979 = vmatprep.subr.mxu0 0.0
        %980 = vmatpush1.msra.mxu0 %v725
        %981 = vmatprep.subr.mxu0 0.0
        %982 = vmatpush1.msra.mxu0 %v724
        %983 = vmatprep.subr.mxu0 0.0
        %984 = vmatpush2.msra.mxu0 0.0
        %985 = vmatprep.subr.mxu0 0.0
        %986 = vmatpush2.msra.mxu0 0.0
        %987 = vmatprep.subr.mxu0 0.0
        %988 = vmatpush2.msra.mxu0 0.0
        %989 = vmatprep.subr.mxu0 0.0
        %990 = vmatpush2.msra.mxu0 0.0
        %991 = vmatprep.subr.mxu0 0.0
        %992 = vmatpush2.msra.mxu0 0.0
        %993 = vmatprep.subr.mxu0 0.0
        %994 = vmatpush2.msra.mxu0 0.0
        %995 = vmatprep.subr.mxu0 0.0
        %996 = vmatpush2.msra.mxu0 0.0
        %997 = vmatprep.subr.mxu0 0.0
        %998 = vmatpush2.msra.mxu0 0.0
        %999 = vmatprep.subr.mxu0 0.0
        %1000 = vmatpush2.msra.mxu0 0.0
        %1001 = vmatprep.subr.mxu0 0.0
        %1002 = vmatpush2.msra.mxu0 0.0
        %1003 = vmatprep.subr.mxu0 0.0
        %1004 = vmatpush2.msra.mxu0 0.0
        %1005 = vmatprep.subr.mxu0 0.0
        %1006 = vmatpush2.msra.mxu0 0.0
        %1007 = vmatprep.subr.mxu0 0.0
        %1008 = vmatpush2.msra.mxu0 0.0
        %1009 = vmatprep.subr.mxu0 0.0
        %1010 = vmatpush2.msra.mxu0 0.0
        %1011 = vmatprep.subr.mxu0 0.0
        %1012 = vmatpush2.msra.mxu0 0.0
        %1013 = vmatprep.subr.mxu0 0.0
        %1014 = vmatpush2.msra.mxu0 0.0
        %1015 = vmatprep.mubr.f32.mxu0 0.0
        %1016 = vmatmul.mubr.f32.gmra.mxu0 %v946
        %v1017 = vpop.f32.mrf.mxu0
        %v1018 = vadd.f32 0.0, %v1017
        %v1019 = vpop.f32.mrf.mxu0
        %1020 = vmatprep.mubr.f32.mxu0 0.0
        %1021 = vmatmul.mubr.f32.gmra.mxu0 %v949
        %v1022 = vpop.f32.mrf.mxu0
        %v1023 = vadd.f32 0.0, %v1022
        %v1024 = vpop.f32.mrf.mxu0
        %1025 = vdwg.mxu0
        %v1026 = vadd.f32 %v745, %v1018
        %v1027 = vadd.f32 %v745, %v1023
        %1028 = vrot.lane.b32.xlu0 %v639, 96
        %v1029 = vpop.permute.xlu0 %1028
        %1030 = vrot.lane.b32.xlu0 %v645, 96
        %v1031 = vpop.permute.xlu0 %1030
        %1032 = vrot.lane.b32.xlu0 %v641, 96
        %v1033 = vpop.permute.xlu0 %1032
        %1034 = vrot.lane.b32.xlu0 %v647, 96
        %v1035 = vpop.permute.xlu0 %1034
        %v1036 = vsel %vm747, %v1029, 0
        %v1038 = vsel %vm747, %v1031, 0
        %v1040 = vsel %vm747, %v1033, 0
        %v1042 = vsel %vm747, %v1035, 0
        %1044 = vmatprep.subr.mxu0 0.0
        %1045 = vmatpush1.xpose.msra.mxu0 0.0
        %1046 = vmatprep.subr.mxu0 0.0
        %1047 = vmatpush1.xpose.msra.mxu0 0.0
        %1048 = vmatprep.subr.mxu0 0.0
        %1049 = vmatpush1.xpose.msra.mxu0 0.0
        %1050 = vmatprep.subr.mxu0 0.0
        %1051 = vmatpush1.xpose.msra.mxu0 0.0
        %1052 = vmatprep.subr.mxu0 0.0
        %1053 = vmatpush1.xpose.msra.mxu0 0.0
        %1054 = vmatprep.subr.mxu0 0.0
        %1055 = vmatpush1.xpose.msra.mxu0 0.0
        %1056 = vmatprep.subr.mxu0 0.0
        %1057 = vmatpush1.xpose.msra.mxu0 0.0
        %1058 = vmatprep.subr.mxu0 0.0
        %1059 = vmatpush1.xpose.msra.mxu0 0.0
        %1060 = vmatprep.subr.mxu0 0.0
        %1061 = vmatpush1.xpose.msra.mxu0 0.0
        %1062 = vmatprep.subr.mxu0 0.0
        %1063 = vmatpush1.xpose.msra.mxu0 0.0
        %1064 = vmatprep.subr.mxu0 0.0
        %1065 = vmatpush1.xpose.msra.mxu0 0.0
        %1066 = vmatprep.subr.mxu0 0.0
        %1067 = vmatpush1.xpose.msra.mxu0 0.0
        %1068 = vmatprep.subr.mxu0 0.0
        %1069 = vmatpush1.xpose.msra.mxu0 0.0
        %1070 = vmatprep.subr.mxu0 0.0
        %1071 = vmatpush1.xpose.msra.mxu0 0.0
        %1072 = vmatprep.subr.mxu0 0.0
        %1073 = vmatpush1.xpose.msra.mxu0 %v1042
        %1074 = vmatprep.subr.mxu0 0.0
        %1075 = vmatpush1.xpose.msra.mxu0 %v1040
        %1076 = vmatprep.subr.mxu0 0.0
        %1077 = vmatpush2.xpose.msra.mxu0 0.0
        %1078 = vmatprep.subr.mxu0 0.0
        %1079 = vmatpush2.xpose.msra.mxu0 0.0
        %1080 = vmatprep.subr.mxu0 0.0
        %1081 = vmatpush2.xpose.msra.mxu0 0.0
        %1082 = vmatprep.subr.mxu0 0.0
        %1083 = vmatpush2.xpose.msra.mxu0 0.0
        %1084 = vmatprep.subr.mxu0 0.0
        %1085 = vmatpush2.xpose.msra.mxu0 0.0
        %1086 = vmatprep.subr.mxu0 0.0
        %1087 = vmatpush2.xpose.msra.mxu0 0.0
        %1088 = vmatprep.subr.mxu0 0.0
        %1089 = vmatpush2.xpose.msra.mxu0 0.0
        %1090 = vmatprep.subr.mxu0 0.0
        %1091 = vmatpush2.xpose.msra.mxu0 0.0
        %1092 = vmatprep.subr.mxu0 0.0
        %1093 = vmatpush2.xpose.msra.mxu0 0.0
        %1094 = vmatprep.subr.mxu0 0.0
        %1095 = vmatpush2.xpose.msra.mxu0 0.0
        %1096 = vmatprep.subr.mxu0 0.0
        %1097 = vmatpush2.xpose.msra.mxu0 0.0
        %1098 = vmatprep.subr.mxu0 0.0
        %1099 = vmatpush2.xpose.msra.mxu0 0.0
        %1100 = vmatprep.subr.mxu0 0.0
        %1101 = vmatpush2.xpose.msra.mxu0 0.0
        %1102 = vmatprep.subr.mxu0 0.0
        %1103 = vmatpush2.xpose.msra.mxu0 0.0
        %1104 = vmatprep.subr.mxu0 0.0
        %1105 = vmatpush2.xpose.msra.mxu0 0.0
        %1106 = vmatprep.subr.mxu0 0.0
        %1107 = vmatpush2.xpose.msra.mxu0 0.0
        %1108 = vmatprep.mubr.f32.mxu0 0.0
        %1109 = vmatmul.mubr.f32.gmra.mxu0 %v1036
        %v1110 = vpop.f32.mrf.mxu0
        %v1111 = vadd.f32 0.0, %v1110
        %v1112 = vpop.f32.mrf.mxu0
        %1113 = vmatprep.mubr.f32.mxu0 0.0
        %1114 = vmatmul.mubr.f32.gmra.mxu0 %v1038
        %v1115 = vpop.f32.mrf.mxu0
        %v1116 = vadd.f32 0.0, %v1115
        %v1117 = vpop.f32.mrf.mxu0
        %1118 = vdwg.mxu0
        %v1119 = vmul.f32 %v1111, 0.17677669
        %v1120 = vmul.f32 %v1116, 0.17677669
        %v1121 = vadd.f32 %v1119, %v505
        %v1122 = vadd.f32 %v1120, %v506
        %v1123 = vsel %vm839, %v1121, -inf
        %1124 = vmax.xlane.f32.xlu0 %v1123
        %v1125 = vpop.xlane.xlu0 %1124
        %v1126 = vsel %vm839, %v1122, -inf
        %1127 = vmax.xlane.f32.xlu0 %v1126
        %v1128 = vpop.xlane.xlu0 %1127
        %v1129 = vsub.f32 %v1121, %v1125
        %v1130 = vsub.f32 %v1122, %v1128
        %v1131 = vmul.f32 %v1129, 1.442695
        %v1132 = vpow.pop %v1131
        %v1133 = vmul.f32 %v1130, 1.442695
        %v1134 = vpow.pop %v1133
        %v1135 = vsel %vm839, %v1132, 0.0
        %1136 = vadd.xlane.f32.xlu0 %v1135
        %v1137 = vpop.xlane.xlu0 %1136
        %v1138 = vsel %vm839, %v1134, 0.0
        %1139 = vadd.xlane.f32.xlu0 %v1138
        %v1140 = vpop.xlane.xlu0 %1139
        %v1141 = vmax.f32 %v1137, 1e-30
        %v1142 = vmax.f32 %v1140, 1e-30
        %v1143 = vrcp.pop %v1141
        %v1144 = vrcp.pop %v1142
        %v1145 = vmul.f32 %v1132, %v1143
        %v1146 = vmul.f32 %v1134, %v1144
        %1149 = vrot.lane.b32.xlu0 %v716, 96
        %v1150 = vpop.permute.xlu0 %1149
        %1151 = vrot.lane.b32.xlu0 %v721, 96
        %v1152 = vpop.permute.xlu0 %1151
        %v1156 = vsel %vm839, %v1145, 0
        %v1159 = vsel %vm839, %v1146, 0
        %1161 = vmatprep.subr.mxu0 0.0
        %1162 = vmatpush1.msra.mxu0 0.0
        %1163 = vmatprep.subr.mxu0 0.0
        %1164 = vmatpush1.msra.mxu0 0.0
        %1165 = vmatprep.subr.mxu0 0.0
        %1166 = vmatpush1.msra.mxu0 0.0
        %1167 = vmatprep.subr.mxu0 0.0
        %1168 = vmatpush1.msra.mxu0 0.0
        %1169 = vmatprep.subr.mxu0 0.0
        %1170 = vmatpush1.msra.mxu0 0.0
        %1171 = vmatprep.subr.mxu0 0.0
        %1172 = vmatpush1.msra.mxu0 0.0
        %1173 = vmatprep.subr.mxu0 0.0
        %1174 = vmatpush1.msra.mxu0 0.0
        %1175 = vmatprep.subr.mxu0 0.0
        %1176 = vmatpush1.msra.mxu0 0.0
        %1177 = vmatprep.subr.mxu0 0.0
        %1178 = vmatpush1.msra.mxu0 0.0
        %1179 = vmatprep.subr.mxu0 0.0
        %1180 = vmatpush1.msra.mxu0 0.0
        %1181 = vmatprep.subr.mxu0 0.0
        %1182 = vmatpush1.msra.mxu0 0.0
        %1183 = vmatprep.subr.mxu0 0.0
        %1184 = vmatpush1.msra.mxu0 0.0
        %1185 = vmatprep.subr.mxu0 0.0
        %1186 = vmatpush1.msra.mxu0 0.0
        %1187 = vmatprep.subr.mxu0 0.0
        %1188 = vmatpush1.msra.mxu0 0.0
        %1189 = vmatprep.subr.mxu0 0.0
        %1190 = vmatpush1.msra.mxu0 %v1152
        %1191 = vmatprep.subr.mxu0 0.0
        %1192 = vmatpush1.msra.mxu0 %v1150
        %1193 = vmatprep.subr.mxu0 0.0
        %1194 = vmatpush2.msra.mxu0 0.0
        %1195 = vmatprep.subr.mxu0 0.0
        %1196 = vmatpush2.msra.mxu0 0.0
        %1197 = vmatprep.subr.mxu0 0.0
        %1198 = vmatpush2.msra.mxu0 0.0
        %1199 = vmatprep.subr.mxu0 0.0
        %1200 = vmatpush2.msra.mxu0 0.0
        %1201 = vmatprep.subr.mxu0 0.0
        %1202 = vmatpush2.msra.mxu0 0.0
        %1203 = vmatprep.subr.mxu0 0.0
        %1204 = vmatpush2.msra.mxu0 0.0
        %1205 = vmatprep.subr.mxu0 0.0
        %1206 = vmatpush2.msra.mxu0 0.0
        %1207 = vmatprep.subr.mxu0 0.0
        %1208 = vmatpush2.msra.mxu0 0.0
        %1209 = vmatprep.subr.mxu0 0.0
        %1210 = vmatpush2.msra.mxu0 0.0
        %1211 = vmatprep.subr.mxu0 0.0
        %1212 = vmatpush2.msra.mxu0 0.0
        %1213 = vmatprep.subr.mxu0 0.0
        %1214 = vmatpush2.msra.mxu0 0.0
        %1215 = vmatprep.subr.mxu0 0.0
        %1216 = vmatpush2.msra.mxu0 0.0
        %1217 = vmatprep.subr.mxu0 0.0
        %1218 = vmatpush2.msra.mxu0 0.0
        %1219 = vmatprep.subr.mxu0 0.0
        %1220 = vmatpush2.msra.mxu0 0.0
        %1221 = vmatprep.subr.mxu0 0.0
        %1222 = vmatpush2.msra.mxu0 0.0
        %1223 = vmatprep.subr.mxu0 0.0
        %1224 = vmatpush2.msra.mxu0 0.0
        %1225 = vmatprep.mubr.f32.mxu0 0.0
        %1226 = vmatmul.mubr.f32.gmra.mxu0 %v1156
        %v1227 = vpop.f32.mrf.mxu0
        %v1228 = vadd.f32 0.0, %v1227
        %v1229 = vpop.f32.mrf.mxu0
        %1230 = vmatprep.mubr.f32.mxu0 0.0
        %1231 = vmatmul.mubr.f32.gmra.mxu0 %v1159
        %v1232 = vpop.f32.mrf.mxu0
        %v1233 = vadd.f32 0.0, %v1232
        %v1234 = vpop.f32.mrf.mxu0
        %1235 = vdwg.mxu0
        %v1237 = vsel %vm747, %v1228, 0
        %v1240 = vsel %vm747, %v1233, 0
        %1242 = vmatprep.subr.mxu0 0.0
        %1243 = vmatpush1.msra.mxu0 0.0
        %1244 = vmatprep.subr.mxu0 0.0
        %1245 = vmatpush1.msra.mxu0 0.0
        %1246 = vmatprep.subr.mxu0 0.0
        %1247 = vmatpush1.msra.mxu0 0.0
        %1248 = vmatprep.subr.mxu0 0.0
        %1249 = vmatpush1.msra.mxu0 0.0
        %1250 = vmatprep.subr.mxu0 0.0
        %1251 = vmatpush1.msra.mxu0 0.0
        %1252 = vmatprep.subr.mxu0 0.0
        %1253 = vmatpush1.msra.mxu0 0.0
        %1254 = vmatprep.subr.mxu0 0.0
        %1255 = vmatpush1.msra.mxu0 0.0
        %1256 = vmatprep.subr.mxu0 0.0
        %1257 = vmatpush1.msra.mxu0 0.0
        %1258 = vmatprep.subr.mxu0 0.0
        %1259 = vmatpush1.msra.mxu0 0.0
        %1260 = vmatprep.subr.mxu0 0.0
        %1261 = vmatpush1.msra.mxu0 0.0
        %1262 = vmatprep.subr.mxu0 0.0
        %1263 = vmatpush1.msra.mxu0 0.0
        %1264 = vmatprep.subr.mxu0 0.0
        %1265 = vmatpush1.msra.mxu0 0.0
        %1266 = vmatprep.subr.mxu0 0.0
        %1267 = vmatpush1.msra.mxu0 %v731
        %1268 = vmatprep.subr.mxu0 0.0
        %1269 = vmatpush1.msra.mxu0 %v730
        %1270 = vmatprep.subr.mxu0 0.0
        %1271 = vmatpush1.msra.mxu0 %v729
        %1272 = vmatprep.subr.mxu0 0.0
        %1273 = vmatpush1.msra.mxu0 %v728
        %1274 = vmatprep.subr.mxu0 0.0
        %1275 = vmatpush2.msra.mxu0 0.0
        %1276 = vmatprep.subr.mxu0 0.0
        %1277 = vmatpush2.msra.mxu0 0.0
        %1278 = vmatprep.subr.mxu0 0.0
        %1279 = vmatpush2.msra.mxu0 0.0
        %1280 = vmatprep.subr.mxu0 0.0
        %1281 = vmatpush2.msra.mxu0 0.0
        %1282 = vmatprep.subr.mxu0 0.0
        %1283 = vmatpush2.msra.mxu0 0.0
        %1284 = vmatprep.subr.mxu0 0.0
        %1285 = vmatpush2.msra.mxu0 0.0
        %1286 = vmatprep.subr.mxu0 0.0
        %1287 = vmatpush2.msra.mxu0 0.0
        %1288 = vmatprep.subr.mxu0 0.0
        %1289 = vmatpush2.msra.mxu0 0.0
        %1290 = vmatprep.subr.mxu0 0.0
        %1291 = vmatpush2.msra.mxu0 0.0
        %1292 = vmatprep.subr.mxu0 0.0
        %1293 = vmatpush2.msra.mxu0 0.0
        %1294 = vmatprep.subr.mxu0 0.0
        %1295 = vmatpush2.msra.mxu0 0.0
        %1296 = vmatprep.subr.mxu0 0.0
        %1297 = vmatpush2.msra.mxu0 0.0
        %1298 = vmatprep.subr.mxu0 0.0
        %1299 = vmatpush2.msra.mxu0 0.0
        %1300 = vmatprep.subr.mxu0 0.0
        %1301 = vmatpush2.msra.mxu0 0.0
        %1302 = vmatprep.subr.mxu0 0.0
        %1303 = vmatpush2.msra.mxu0 0.0
        %1304 = vmatprep.subr.mxu0 0.0
        %1305 = vmatpush2.msra.mxu0 0.0
        %1306 = vmatprep.mubr.f32.mxu0 0.0
        %1307 = vmatmul.mubr.f32.gmra.mxu0 %v1237
        %v1308 = vpop.f32.mrf.mxu0
        %v1309 = vadd.f32 0.0, %v1308
        %v1310 = vpop.f32.mrf.mxu0
        %1311 = vmatprep.mubr.f32.mxu0 0.0
        %1312 = vmatmul.mubr.f32.gmra.mxu0 %v1240
        %v1313 = vpop.f32.mrf.mxu0
        %v1314 = vadd.f32 0.0, %v1313
        %v1315 = vpop.f32.mrf.mxu0
        %1316 = vdwg.mxu0
        %v1317 = vadd.f32 %v1026, %v1309
        %v1318 = vadd.f32 %v1027, %v1314
        %1319 = vrot.lane.b32.xlu0 %v639, 64
        %v1320 = vpop.permute.xlu0 %1319
        %1321 = vrot.lane.b32.xlu0 %v645, 64
        %v1322 = vpop.permute.xlu0 %1321
        %1323 = vrot.lane.b32.xlu0 %v641, 64
        %v1324 = vpop.permute.xlu0 %1323
        %1325 = vrot.lane.b32.xlu0 %v647, 64
        %v1326 = vpop.permute.xlu0 %1325
        %v1327 = vsel %vm747, %v1320, 0
        %v1329 = vsel %vm747, %v1322, 0
        %v1331 = vsel %vm747, %v1324, 0
        %v1333 = vsel %vm747, %v1326, 0
        %1335 = vmatprep.subr.mxu0 0.0
        %1336 = vmatpush1.xpose.msra.mxu0 0.0
        %1337 = vmatprep.subr.mxu0 0.0
        %1338 = vmatpush1.xpose.msra.mxu0 0.0
        %1339 = vmatprep.subr.mxu0 0.0
        %1340 = vmatpush1.xpose.msra.mxu0 0.0
        %1341 = vmatprep.subr.mxu0 0.0
        %1342 = vmatpush1.xpose.msra.mxu0 0.0
        %1343 = vmatprep.subr.mxu0 0.0
        %1344 = vmatpush1.xpose.msra.mxu0 0.0
        %1345 = vmatprep.subr.mxu0 0.0
        %1346 = vmatpush1.xpose.msra.mxu0 0.0
        %1347 = vmatprep.subr.mxu0 0.0
        %1348 = vmatpush1.xpose.msra.mxu0 0.0
        %1349 = vmatprep.subr.mxu0 0.0
        %1350 = vmatpush1.xpose.msra.mxu0 0.0
        %1351 = vmatprep.subr.mxu0 0.0
        %1352 = vmatpush1.xpose.msra.mxu0 0.0
        %1353 = vmatprep.subr.mxu0 0.0
        %1354 = vmatpush1.xpose.msra.mxu0 0.0
        %1355 = vmatprep.subr.mxu0 0.0
        %1356 = vmatpush1.xpose.msra.mxu0 0.0
        %1357 = vmatprep.subr.mxu0 0.0
        %1358 = vmatpush1.xpose.msra.mxu0 0.0
        %1359 = vmatprep.subr.mxu0 0.0
        %1360 = vmatpush1.xpose.msra.mxu0 0.0
        %1361 = vmatprep.subr.mxu0 0.0
        %1362 = vmatpush1.xpose.msra.mxu0 0.0
        %1363 = vmatprep.subr.mxu0 0.0
        %1364 = vmatpush1.xpose.msra.mxu0 %v1333
        %1365 = vmatprep.subr.mxu0 0.0
        %1366 = vmatpush1.xpose.msra.mxu0 %v1331
        %1367 = vmatprep.subr.mxu0 0.0
        %1368 = vmatpush2.xpose.msra.mxu0 0.0
        %1369 = vmatprep.subr.mxu0 0.0
        %1370 = vmatpush2.xpose.msra.mxu0 0.0
        %1371 = vmatprep.subr.mxu0 0.0
        %1372 = vmatpush2.xpose.msra.mxu0 0.0
        %1373 = vmatprep.subr.mxu0 0.0
        %1374 = vmatpush2.xpose.msra.mxu0 0.0
        %1375 = vmatprep.subr.mxu0 0.0
        %1376 = vmatpush2.xpose.msra.mxu0 0.0
        %1377 = vmatprep.subr.mxu0 0.0
        %1378 = vmatpush2.xpose.msra.mxu0 0.0
        %1379 = vmatprep.subr.mxu0 0.0
        %1380 = vmatpush2.xpose.msra.mxu0 0.0
        %1381 = vmatprep.subr.mxu0 0.0
        %1382 = vmatpush2.xpose.msra.mxu0 0.0
        %1383 = vmatprep.subr.mxu0 0.0
        %1384 = vmatpush2.xpose.msra.mxu0 0.0
        %1385 = vmatprep.subr.mxu0 0.0
        %1386 = vmatpush2.xpose.msra.mxu0 0.0
        %1387 = vmatprep.subr.mxu0 0.0
        %1388 = vmatpush2.xpose.msra.mxu0 0.0
        %1389 = vmatprep.subr.mxu0 0.0
        %1390 = vmatpush2.xpose.msra.mxu0 0.0
        %1391 = vmatprep.subr.mxu0 0.0
        %1392 = vmatpush2.xpose.msra.mxu0 0.0
        %1393 = vmatprep.subr.mxu0 0.0
        %1394 = vmatpush2.xpose.msra.mxu0 0.0
        %1395 = vmatprep.subr.mxu0 0.0
        %1396 = vmatpush2.xpose.msra.mxu0 0.0
        %1397 = vmatprep.subr.mxu0 0.0
        %1398 = vmatpush2.xpose.msra.mxu0 0.0
        %1399 = vmatprep.mubr.f32.mxu0 0.0
        %1400 = vmatmul.mubr.f32.gmra.mxu0 %v1327
        %v1401 = vpop.f32.mrf.mxu0
        %v1402 = vadd.f32 0.0, %v1401
        %v1403 = vpop.f32.mrf.mxu0
        %1404 = vmatprep.mubr.f32.mxu0 0.0
        %1405 = vmatmul.mubr.f32.gmra.mxu0 %v1329
        %v1406 = vpop.f32.mrf.mxu0
        %v1407 = vadd.f32 0.0, %v1406
        %v1408 = vpop.f32.mrf.mxu0
        %1409 = vdwg.mxu0
        %v1410 = vmul.f32 %v1402, 0.17677669
        %v1411 = vmul.f32 %v1407, 0.17677669
        %v1412 = vadd.f32 %v1410, %v505
        %v1413 = vadd.f32 %v1411, %v506
        %v1414 = vsel %vm839, %v1412, -inf
        %1415 = vmax.xlane.f32.xlu0 %v1414
        %v1416 = vpop.xlane.xlu0 %1415
        %v1417 = vsel %vm839, %v1413, -inf
        %1418 = vmax.xlane.f32.xlu0 %v1417
        %v1419 = vpop.xlane.xlu0 %1418
        %v1420 = vsub.f32 %v1412, %v1416
        %v1421 = vsub.f32 %v1413, %v1419
        %v1422 = vmul.f32 %v1420, 1.442695
        %v1423 = vpow.pop %v1422
        %v1424 = vmul.f32 %v1421, 1.442695
        %v1425 = vpow.pop %v1424
        %v1426 = vsel %vm839, %v1423, 0.0
        %1427 = vadd.xlane.f32.xlu0 %v1426
        %v1428 = vpop.xlane.xlu0 %1427
        %v1429 = vsel %vm839, %v1425, 0.0
        %1430 = vadd.xlane.f32.xlu0 %v1429
        %v1431 = vpop.xlane.xlu0 %1430
        %v1432 = vmax.f32 %v1428, 1e-30
        %v1433 = vmax.f32 %v1431, 1e-30
        %v1434 = vrcp.pop %v1432
        %v1435 = vrcp.pop %v1433
        %v1436 = vmul.f32 %v1423, %v1434
        %v1437 = vmul.f32 %v1425, %v1435
        %1438 = vrot.lane.b32.xlu0 %v716, 64
        %v1439 = vpop.permute.xlu0 %1438
        %1440 = vrot.lane.b32.xlu0 %v721, 64
        %v1441 = vpop.permute.xlu0 %1440
        %v1445 = vsel %vm839, %v1436, 0
        %v1448 = vsel %vm839, %v1437, 0
        %1450 = vmatprep.subr.mxu0 0.0
        %1451 = vmatpush1.msra.mxu0 0.0
        %1452 = vmatprep.subr.mxu0 0.0
        %1453 = vmatpush1.msra.mxu0 0.0
        %1454 = vmatprep.subr.mxu0 0.0
        %1455 = vmatpush1.msra.mxu0 0.0
        %1456 = vmatprep.subr.mxu0 0.0
        %1457 = vmatpush1.msra.mxu0 0.0
        %1458 = vmatprep.subr.mxu0 0.0
        %1459 = vmatpush1.msra.mxu0 0.0
        %1460 = vmatprep.subr.mxu0 0.0
        %1461 = vmatpush1.msra.mxu0 0.0
        %1462 = vmatprep.subr.mxu0 0.0
        %1463 = vmatpush1.msra.mxu0 0.0
        %1464 = vmatprep.subr.mxu0 0.0
        %1465 = vmatpush1.msra.mxu0 0.0
        %1466 = vmatprep.subr.mxu0 0.0
        %1467 = vmatpush1.msra.mxu0 0.0
        %1468 = vmatprep.subr.mxu0 0.0
        %1469 = vmatpush1.msra.mxu0 0.0
        %1470 = vmatprep.subr.mxu0 0.0
        %1471 = vmatpush1.msra.mxu0 0.0
        %1472 = vmatprep.subr.mxu0 0.0
        %1473 = vmatpush1.msra.mxu0 0.0
        %1474 = vmatprep.subr.mxu0 0.0
        %1475 = vmatpush1.msra.mxu0 0.0
        %1476 = vmatprep.subr.mxu0 0.0
        %1477 = vmatpush1.msra.mxu0 0.0
        %1478 = vmatprep.subr.mxu0 0.0
        %1479 = vmatpush1.msra.mxu0 %v1441
        %1480 = vmatprep.subr.mxu0 0.0
        %1481 = vmatpush1.msra.mxu0 %v1439
        %1482 = vmatprep.subr.mxu0 0.0
        %1483 = vmatpush2.msra.mxu0 0.0
        %1484 = vmatprep.subr.mxu0 0.0
        %1485 = vmatpush2.msra.mxu0 0.0
        %1486 = vmatprep.subr.mxu0 0.0
        %1487 = vmatpush2.msra.mxu0 0.0
        %1488 = vmatprep.subr.mxu0 0.0
        %1489 = vmatpush2.msra.mxu0 0.0
        %1490 = vmatprep.subr.mxu0 0.0
        %1491 = vmatpush2.msra.mxu0 0.0
        %1492 = vmatprep.subr.mxu0 0.0
        %1493 = vmatpush2.msra.mxu0 0.0
        %1494 = vmatprep.subr.mxu0 0.0
        %1495 = vmatpush2.msra.mxu0 0.0
        %1496 = vmatprep.subr.mxu0 0.0
        %1497 = vmatpush2.msra.mxu0 0.0
        %1498 = vmatprep.subr.mxu0 0.0
        %1499 = vmatpush2.msra.mxu0 0.0
        %1500 = vmatprep.subr.mxu0 0.0
        %1501 = vmatpush2.msra.mxu0 0.0
        %1502 = vmatprep.subr.mxu0 0.0
        %1503 = vmatpush2.msra.mxu0 0.0
        %1504 = vmatprep.subr.mxu0 0.0
        %1505 = vmatpush2.msra.mxu0 0.0
        %1506 = vmatprep.subr.mxu0 0.0
        %1507 = vmatpush2.msra.mxu0 0.0
        %1508 = vmatprep.subr.mxu0 0.0
        %1509 = vmatpush2.msra.mxu0 0.0
        %1510 = vmatprep.subr.mxu0 0.0
        %1511 = vmatpush2.msra.mxu0 0.0
        %1512 = vmatprep.subr.mxu0 0.0
        %1513 = vmatpush2.msra.mxu0 0.0
        %1514 = vmatprep.mubr.f32.mxu0 0.0
        %1515 = vmatmul.mubr.f32.gmra.mxu0 %v1445
        %v1516 = vpop.f32.mrf.mxu0
        %v1517 = vadd.f32 0.0, %v1516
        %v1518 = vpop.f32.mrf.mxu0
        %1519 = vmatprep.mubr.f32.mxu0 0.0
        %1520 = vmatmul.mubr.f32.gmra.mxu0 %v1448
        %v1521 = vpop.f32.mrf.mxu0
        %v1522 = vadd.f32 0.0, %v1521
        %v1523 = vpop.f32.mrf.mxu0
        %1524 = vdwg.mxu0
        %v1526 = vsel %vm747, %v1517, 0
        %v1529 = vsel %vm747, %v1522, 0
        %1531 = vmatprep.subr.mxu0 0.0
        %1532 = vmatpush1.msra.mxu0 0.0
        %1533 = vmatprep.subr.mxu0 0.0
        %1534 = vmatpush1.msra.mxu0 0.0
        %1535 = vmatprep.subr.mxu0 0.0
        %1536 = vmatpush1.msra.mxu0 0.0
        %1537 = vmatprep.subr.mxu0 0.0
        %1538 = vmatpush1.msra.mxu0 0.0
        %1539 = vmatprep.subr.mxu0 0.0
        %1540 = vmatpush1.msra.mxu0 0.0
        %1541 = vmatprep.subr.mxu0 0.0
        %1542 = vmatpush1.msra.mxu0 0.0
        %1543 = vmatprep.subr.mxu0 0.0
        %1544 = vmatpush1.msra.mxu0 0.0
        %1545 = vmatprep.subr.mxu0 0.0
        %1546 = vmatpush1.msra.mxu0 0.0
        %1547 = vmatprep.subr.mxu0 0.0
        %1548 = vmatpush1.msra.mxu0 0.0
        %1549 = vmatprep.subr.mxu0 0.0
        %1550 = vmatpush1.msra.mxu0 0.0
        %1551 = vmatprep.subr.mxu0 0.0
        %1552 = vmatpush1.msra.mxu0 0.0
        %1553 = vmatprep.subr.mxu0 0.0
        %1554 = vmatpush1.msra.mxu0 0.0
        %1555 = vmatprep.subr.mxu0 0.0
        %1556 = vmatpush1.msra.mxu0 %v735
        %1557 = vmatprep.subr.mxu0 0.0
        %1558 = vmatpush1.msra.mxu0 %v734
        %1559 = vmatprep.subr.mxu0 0.0
        %1560 = vmatpush1.msra.mxu0 %v733
        %1561 = vmatprep.subr.mxu0 0.0
        %1562 = vmatpush1.msra.mxu0 %v732
        %1563 = vmatprep.subr.mxu0 0.0
        %1564 = vmatpush2.msra.mxu0 0.0
        %1565 = vmatprep.subr.mxu0 0.0
        %1566 = vmatpush2.msra.mxu0 0.0
        %1567 = vmatprep.subr.mxu0 0.0
        %1568 = vmatpush2.msra.mxu0 0.0
        %1569 = vmatprep.subr.mxu0 0.0
        %1570 = vmatpush2.msra.mxu0 0.0
        %1571 = vmatprep.subr.mxu0 0.0
        %1572 = vmatpush2.msra.mxu0 0.0
        %1573 = vmatprep.subr.mxu0 0.0
        %1574 = vmatpush2.msra.mxu0 0.0
        %1575 = vmatprep.subr.mxu0 0.0
        %1576 = vmatpush2.msra.mxu0 0.0
        %1577 = vmatprep.subr.mxu0 0.0
        %1578 = vmatpush2.msra.mxu0 0.0
        %1579 = vmatprep.subr.mxu0 0.0
        %1580 = vmatpush2.msra.mxu0 0.0
        %1581 = vmatprep.subr.mxu0 0.0
        %1582 = vmatpush2.msra.mxu0 0.0
        %1583 = vmatprep.subr.mxu0 0.0
        %1584 = vmatpush2.msra.mxu0 0.0
        %1585 = vmatprep.subr.mxu0 0.0
        %1586 = vmatpush2.msra.mxu0 0.0
        %1587 = vmatprep.subr.mxu0 0.0
        %1588 = vmatpush2.msra.mxu0 0.0
        %1589 = vmatprep.subr.mxu0 0.0
        %1590 = vmatpush2.msra.mxu0 0.0
        %1591 = vmatprep.subr.mxu0 0.0
        %1592 = vmatpush2.msra.mxu0 0.0
        %1593 = vmatprep.subr.mxu0 0.0
        %1594 = vmatpush2.msra.mxu0 0.0
        %1595 = vmatprep.mubr.f32.mxu0 0.0
        %1596 = vmatmul.mubr.f32.gmra.mxu0 %v1526
        %v1597 = vpop.f32.mrf.mxu0
        %v1598 = vadd.f32 0.0, %v1597
        %v1599 = vpop.f32.mrf.mxu0
        %1600 = vmatprep.mubr.f32.mxu0 0.0
        %1601 = vmatmul.mubr.f32.gmra.mxu0 %v1529
        %v1602 = vpop.f32.mrf.mxu0
        %v1603 = vadd.f32 0.0, %v1602
        %v1604 = vpop.f32.mrf.mxu0
        %1605 = vdwg.mxu0
        %v1606 = vadd.f32 %v1317, %v1598
        %v1607 = vadd.f32 %v1318, %v1603
        %1608 = vrot.lane.b32.xlu0 %v639, 32
        %v1609 = vpop.permute.xlu0 %1608
        %1610 = vrot.lane.b32.xlu0 %v645, 32
        %v1611 = vpop.permute.xlu0 %1610
        %1612 = vrot.lane.b32.xlu0 %v641, 32
        %v1613 = vpop.permute.xlu0 %1612
        %1614 = vrot.lane.b32.xlu0 %v647, 32
        %v1615 = vpop.permute.xlu0 %1614
        %v1616 = vsel %vm747, %v1609, 0
        %v1618 = vsel %vm747, %v1611, 0
        %v1620 = vsel %vm747, %v1613, 0
        %v1622 = vsel %vm747, %v1615, 0
        %1624 = vmatprep.subr.mxu0 0.0
        %1625 = vmatpush1.xpose.msra.mxu0 0.0
        %1626 = vmatprep.subr.mxu0 0.0
        %1627 = vmatpush1.xpose.msra.mxu0 0.0
        %1628 = vmatprep.subr.mxu0 0.0
        %1629 = vmatpush1.xpose.msra.mxu0 0.0
        %1630 = vmatprep.subr.mxu0 0.0
        %1631 = vmatpush1.xpose.msra.mxu0 0.0
        %1632 = vmatprep.subr.mxu0 0.0
        %1633 = vmatpush1.xpose.msra.mxu0 0.0
        %1634 = vmatprep.subr.mxu0 0.0
        %1635 = vmatpush1.xpose.msra.mxu0 0.0
        %1636 = vmatprep.subr.mxu0 0.0
        %1637 = vmatpush1.xpose.msra.mxu0 0.0
        %1638 = vmatprep.subr.mxu0 0.0
        %1639 = vmatpush1.xpose.msra.mxu0 0.0
        %1640 = vmatprep.subr.mxu0 0.0
        %1641 = vmatpush1.xpose.msra.mxu0 0.0
        %1642 = vmatprep.subr.mxu0 0.0
        %1643 = vmatpush1.xpose.msra.mxu0 0.0
        %1644 = vmatprep.subr.mxu0 0.0
        %1645 = vmatpush1.xpose.msra.mxu0 0.0
        %1646 = vmatprep.subr.mxu0 0.0
        %1647 = vmatpush1.xpose.msra.mxu0 0.0
        %1648 = vmatprep.subr.mxu0 0.0
        %1649 = vmatpush1.xpose.msra.mxu0 0.0
        %1650 = vmatprep.subr.mxu0 0.0
        %1651 = vmatpush1.xpose.msra.mxu0 0.0
        %1652 = vmatprep.subr.mxu0 0.0
        %1653 = vmatpush1.xpose.msra.mxu0 %v1622
        %1654 = vmatprep.subr.mxu0 0.0
        %1655 = vmatpush1.xpose.msra.mxu0 %v1620
        %1656 = vmatprep.subr.mxu0 0.0
        %1657 = vmatpush2.xpose.msra.mxu0 0.0
        %1658 = vmatprep.subr.mxu0 0.0
        %1659 = vmatpush2.xpose.msra.mxu0 0.0
        %1660 = vmatprep.subr.mxu0 0.0
        %1661 = vmatpush2.xpose.msra.mxu0 0.0
        %1662 = vmatprep.subr.mxu0 0.0
        %1663 = vmatpush2.xpose.msra.mxu0 0.0
        %1664 = vmatprep.subr.mxu0 0.0
        %1665 = vmatpush2.xpose.msra.mxu0 0.0
        %1666 = vmatprep.subr.mxu0 0.0
        %1667 = vmatpush2.xpose.msra.mxu0 0.0
        %1668 = vmatprep.subr.mxu0 0.0
        %1669 = vmatpush2.xpose.msra.mxu0 0.0
        %1670 = vmatprep.subr.mxu0 0.0
        %1671 = vmatpush2.xpose.msra.mxu0 0.0
        %1672 = vmatprep.subr.mxu0 0.0
        %1673 = vmatpush2.xpose.msra.mxu0 0.0
        %1674 = vmatprep.subr.mxu0 0.0
        %1675 = vmatpush2.xpose.msra.mxu0 0.0
        %1676 = vmatprep.subr.mxu0 0.0
        %1677 = vmatpush2.xpose.msra.mxu0 0.0
        %1678 = vmatprep.subr.mxu0 0.0
        %1679 = vmatpush2.xpose.msra.mxu0 0.0
        %1680 = vmatprep.subr.mxu0 0.0
        %1681 = vmatpush2.xpose.msra.mxu0 0.0
        %1682 = vmatprep.subr.mxu0 0.0
        %1683 = vmatpush2.xpose.msra.mxu0 0.0
        %1684 = vmatprep.subr.mxu0 0.0
        %1685 = vmatpush2.xpose.msra.mxu0 0.0
        %1686 = vmatprep.subr.mxu0 0.0
        %1687 = vmatpush2.xpose.msra.mxu0 0.0
        %1688 = vmatprep.mubr.f32.mxu0 0.0
        %1689 = vmatmul.mubr.f32.gmra.mxu0 %v1616
        %v1690 = vpop.f32.mrf.mxu0
        %v1691 = vadd.f32 0.0, %v1690
        %v1692 = vpop.f32.mrf.mxu0
        %1693 = vmatprep.mubr.f32.mxu0 0.0
        %1694 = vmatmul.mubr.f32.gmra.mxu0 %v1618
        %v1695 = vpop.f32.mrf.mxu0
        %v1696 = vadd.f32 0.0, %v1695
        %v1697 = vpop.f32.mrf.mxu0
        %1698 = vdwg.mxu0
        %v1699 = vmul.f32 %v1691, 0.17677669
        %v1700 = vmul.f32 %v1696, 0.17677669
        %v1701 = vadd.f32 %v1699, %v505
        %v1702 = vadd.f32 %v1700, %v506
        %v1703 = vsel %vm839, %v1701, -inf
        %1704 = vmax.xlane.f32.xlu0 %v1703
        %v1705 = vpop.xlane.xlu0 %1704
        %v1706 = vsel %vm839, %v1702, -inf
        %1707 = vmax.xlane.f32.xlu0 %v1706
        %v1708 = vpop.xlane.xlu0 %1707
        %v1709 = vsub.f32 %v1701, %v1705
        %v1710 = vsub.f32 %v1702, %v1708
        %v1711 = vmul.f32 %v1709, 1.442695
        %v1712 = vpow.pop %v1711
        %v1713 = vmul.f32 %v1710, 1.442695
        %v1714 = vpow.pop %v1713
        %v1715 = vsel %vm839, %v1712, 0.0
        %1716 = vadd.xlane.f32.xlu0 %v1715
        %v1717 = vpop.xlane.xlu0 %1716
        %v1718 = vsel %vm839, %v1714, 0.0
        %1719 = vadd.xlane.f32.xlu0 %v1718
        %v1720 = vpop.xlane.xlu0 %1719
        %v1721 = vmax.f32 %v1717, 1e-30
        %v1722 = vmax.f32 %v1720, 1e-30
        %v1723 = vrcp.pop %v1721
        %v1724 = vrcp.pop %v1722
        %v1725 = vmul.f32 %v1712, %v1723
        %v1726 = vmul.f32 %v1714, %v1724
        %1727 = vrot.lane.b32.xlu0 %v716, 32
        %v1728 = vpop.permute.xlu0 %1727
        %1729 = vrot.lane.b32.xlu0 %v721, 32
        %v1730 = vpop.permute.xlu0 %1729
        %v1734 = vsel %vm839, %v1725, 0
        %v1737 = vsel %vm839, %v1726, 0
        %1739 = vmatprep.subr.mxu0 0.0
        %1740 = vmatpush1.msra.mxu0 0.0
        %1741 = vmatprep.subr.mxu0 0.0
        %1742 = vmatpush1.msra.mxu0 0.0
        %1743 = vmatprep.subr.mxu0 0.0
        %1744 = vmatpush1.msra.mxu0 0.0
        %1745 = vmatprep.subr.mxu0 0.0
        %1746 = vmatpush1.msra.mxu0 0.0
        %1747 = vmatprep.subr.mxu0 0.0
        %1748 = vmatpush1.msra.mxu0 0.0
        %1749 = vmatprep.subr.mxu0 0.0
        %1750 = vmatpush1.msra.mxu0 0.0
        %1751 = vmatprep.subr.mxu0 0.0
        %1752 = vmatpush1.msra.mxu0 0.0
        %1753 = vmatprep.subr.mxu0 0.0
        %1754 = vmatpush1.msra.mxu0 0.0
        %1755 = vmatprep.subr.mxu0 0.0
        %1756 = vmatpush1.msra.mxu0 0.0
        %1757 = vmatprep.subr.mxu0 0.0
        %1758 = vmatpush1.msra.mxu0 0.0
        %1759 = vmatprep.subr.mxu0 0.0
        %1760 = vmatpush1.msra.mxu0 0.0
        %1761 = vmatprep.subr.mxu0 0.0
        %1762 = vmatpush1.msra.mxu0 0.0
        %1763 = vmatprep.subr.mxu0 0.0
        %1764 = vmatpush1.msra.mxu0 0.0
        %1765 = vmatprep.subr.mxu0 0.0
        %1766 = vmatpush1.msra.mxu0 0.0
        %1767 = vmatprep.subr.mxu0 0.0
        %1768 = vmatpush1.msra.mxu0 %v1730
        %1769 = vmatprep.subr.mxu0 0.0
        %1770 = vmatpush1.msra.mxu0 %v1728
        %1771 = vmatprep.subr.mxu0 0.0
        %1772 = vmatpush2.msra.mxu0 0.0
        %1773 = vmatprep.subr.mxu0 0.0
        %1774 = vmatpush2.msra.mxu0 0.0
        %1775 = vmatprep.subr.mxu0 0.0
        %1776 = vmatpush2.msra.mxu0 0.0
        %1777 = vmatprep.subr.mxu0 0.0
        %1778 = vmatpush2.msra.mxu0 0.0
        %1779 = vmatprep.subr.mxu0 0.0
        %1780 = vmatpush2.msra.mxu0 0.0
        %1781 = vmatprep.subr.mxu0 0.0
        %1782 = vmatpush2.msra.mxu0 0.0
        %1783 = vmatprep.subr.mxu0 0.0
        %1784 = vmatpush2.msra.mxu0 0.0
        %1785 = vmatprep.subr.mxu0 0.0
        %1786 = vmatpush2.msra.mxu0 0.0
        %1787 = vmatprep.subr.mxu0 0.0
        %1788 = vmatpush2.msra.mxu0 0.0
        %1789 = vmatprep.subr.mxu0 0.0
        %1790 = vmatpush2.msra.mxu0 0.0
        %1791 = vmatprep.subr.mxu0 0.0
        %1792 = vmatpush2.msra.mxu0 0.0
        %1793 = vmatprep.subr.mxu0 0.0
        %1794 = vmatpush2.msra.mxu0 0.0
        %1795 = vmatprep.subr.mxu0 0.0
        %1796 = vmatpush2.msra.mxu0 0.0
        %1797 = vmatprep.subr.mxu0 0.0
        %1798 = vmatpush2.msra.mxu0 0.0
        %1799 = vmatprep.subr.mxu0 0.0
        %1800 = vmatpush2.msra.mxu0 0.0
        %1801 = vmatprep.subr.mxu0 0.0
        %1802 = vmatpush2.msra.mxu0 0.0
        %1803 = vmatprep.mubr.f32.mxu0 0.0
        %1804 = vmatmul.mubr.f32.gmra.mxu0 %v1734
        %v1805 = vpop.f32.mrf.mxu0
        %v1806 = vadd.f32 0.0, %v1805
        %v1807 = vpop.f32.mrf.mxu0
        %1808 = vmatprep.mubr.f32.mxu0 0.0
        %1809 = vmatmul.mubr.f32.gmra.mxu0 %v1737
        %v1810 = vpop.f32.mrf.mxu0
        %v1811 = vadd.f32 0.0, %v1810
        %v1812 = vpop.f32.mrf.mxu0
        %1813 = vdwg.mxu0
        %v1815 = vsel %vm747, %v1806, 0
        %v1818 = vsel %vm747, %v1811, 0
        %1820 = vmatprep.subr.mxu0 0.0
        %1821 = vmatpush1.msra.mxu0 0.0
        %1822 = vmatprep.subr.mxu0 0.0
        %1823 = vmatpush1.msra.mxu0 0.0
        %1824 = vmatprep.subr.mxu0 0.0
        %1825 = vmatpush1.msra.mxu0 0.0
        %1826 = vmatprep.subr.mxu0 0.0
        %1827 = vmatpush1.msra.mxu0 0.0
        %1828 = vmatprep.subr.mxu0 0.0
        %1829 = vmatpush1.msra.mxu0 0.0
        %1830 = vmatprep.subr.mxu0 0.0
        %1831 = vmatpush1.msra.mxu0 0.0
        %1832 = vmatprep.subr.mxu0 0.0
        %1833 = vmatpush1.msra.mxu0 0.0
        %1834 = vmatprep.subr.mxu0 0.0
        %1835 = vmatpush1.msra.mxu0 0.0
        %1836 = vmatprep.subr.mxu0 0.0
        %1837 = vmatpush1.msra.mxu0 0.0
        %1838 = vmatprep.subr.mxu0 0.0
        %1839 = vmatpush1.msra.mxu0 0.0
        %1840 = vmatprep.subr.mxu0 0.0
        %1841 = vmatpush1.msra.mxu0 0.0
        %1842 = vmatprep.subr.mxu0 0.0
        %1843 = vmatpush1.msra.mxu0 0.0
        %1844 = vmatprep.subr.mxu0 0.0
        %1845 = vmatpush1.msra.mxu0 %v739
        %1846 = vmatprep.subr.mxu0 0.0
        %1847 = vmatpush1.msra.mxu0 %v738
        %1848 = vmatprep.subr.mxu0 0.0
        %1849 = vmatpush1.msra.mxu0 %v737
        %1850 = vmatprep.subr.mxu0 0.0
        %1851 = vmatpush1.msra.mxu0 %v736
        %1852 = vmatprep.subr.mxu0 0.0
        %1853 = vmatpush2.msra.mxu0 0.0
        %1854 = vmatprep.subr.mxu0 0.0
        %1855 = vmatpush2.msra.mxu0 0.0
        %1856 = vmatprep.subr.mxu0 0.0
        %1857 = vmatpush2.msra.mxu0 0.0
        %1858 = vmatprep.subr.mxu0 0.0
        %1859 = vmatpush2.msra.mxu0 0.0
        %1860 = vmatprep.subr.mxu0 0.0
        %1861 = vmatpush2.msra.mxu0 0.0
        %1862 = vmatprep.subr.mxu0 0.0
        %1863 = vmatpush2.msra.mxu0 0.0
        %1864 = vmatprep.subr.mxu0 0.0
        %1865 = vmatpush2.msra.mxu0 0.0
        %1866 = vmatprep.subr.mxu0 0.0
        %1867 = vmatpush2.msra.mxu0 0.0
        %1868 = vmatprep.subr.mxu0 0.0
        %1869 = vmatpush2.msra.mxu0 0.0
        %1870 = vmatprep.subr.mxu0 0.0
        %1871 = vmatpush2.msra.mxu0 0.0
        %1872 = vmatprep.subr.mxu0 0.0
        %1873 = vmatpush2.msra.mxu0 0.0
        %1874 = vmatprep.subr.mxu0 0.0
        %1875 = vmatpush2.msra.mxu0 0.0
        %1876 = vmatprep.subr.mxu0 0.0
        %1877 = vmatpush2.msra.mxu0 0.0
        %1878 = vmatprep.subr.mxu0 0.0
        %1879 = vmatpush2.msra.mxu0 0.0
        %1880 = vmatprep.subr.mxu0 0.0
        %1881 = vmatpush2.msra.mxu0 0.0
        %1882 = vmatprep.subr.mxu0 0.0
        %1883 = vmatpush2.msra.mxu0 0.0
        %1884 = vmatprep.mubr.f32.mxu0 0.0
        %1885 = vmatmul.mubr.f32.gmra.mxu0 %v1815
        %v1886 = vpop.f32.mrf.mxu0
        %v1887 = vadd.f32 0.0, %v1886
        %v1888 = vpop.f32.mrf.mxu0
        %1889 = vmatprep.mubr.f32.mxu0 0.0
        %1890 = vmatmul.mubr.f32.gmra.mxu0 %v1818
        %v1891 = vpop.f32.mrf.mxu0
        %v1892 = vadd.f32 0.0, %v1891
        %v1893 = vpop.f32.mrf.mxu0
        %1894 = vdwg.mxu0
        %v1895 = vadd.f32 %v1606, %v1887
        %v1896 = vadd.f32 %v1607, %v1892
        %v1897 = vadd.f32 %v503, %v1895
        %v1898 = vadd.f32 %v504, %v1896
        %v1899 = vld [vmem:[%s6] sm:$0x1]
        %v1900 = vld [vmem:[%s7] sm:$0x1]
        %1901 = vadd.xlane.f32.xlu0 %v1897
        %v1902 = vpop.xlane.xlu0 %1901
        %1903 = vadd.xlane.f32.xlu0 %v1898
        %v1904 = vpop.xlane.xlu0 %1903
        %v1905 = vrcp.pop 128.0
        %v1906 = vmul.f32 %v1902, %v1905
        %v1907 = vmul.f32 %v1904, %v1905
        %v1908 = vsub.f32 %v1897, %v1906
        %v1909 = vsub.f32 %v1898, %v1907
        %v1910 = vmul.f32 %v1908, %v1908
        %v1911 = vmul.f32 %v1909, %v1909
        %1912 = vadd.xlane.f32.xlu0 %v1910
        %v1913 = vpop.xlane.xlu0 %1912
        %1914 = vadd.xlane.f32.xlu0 %v1911
        %v1915 = vpop.xlane.xlu0 %1914
        %v1916 = vmul.f32 %v1913, %v1905
        %v1917 = vmul.f32 %v1915, %v1905
        %v1918 = vadd.f32 %v1916, 1e-05
        %v1919 = vadd.f32 %v1917, 1e-05
        %v1920 = vrsqrt.pop %v1918
        %v1921 = vrsqrt.pop %v1919
        %v1922 = vmul.f32 %v1908, %v1920
        %v1923 = vmul.f32 %v1909, %v1921
        %v1925 = vlaneseq
        %v1926 = vshrl.u32 %v1925, 7
        %v1927 = vsub.s32 0, %v1926
        %v1928 = vrot.slane %v1899, %v1927
        %v1930 = vmul.f32 %v1922, %v1928
        %v1931 = vmul.f32 %v1923, %v1928
        %v1933 = vlaneseq
        %v1934 = vshrl.u32 %v1933, 7
        %v1935 = vsub.s32 0, %v1934
        %v1936 = vrot.slane %v1900, %v1935
        %v1938 = vadd.f32 %v1930, %v1936
        %v1939 = vadd.f32 %v1931, %v1936
        %v1940 = vld [vmem:[%s8] sm:$0xff]
        %v1941 = vld [vmem:[%s8 + $0x8] sm:$0xff]
        %v1942 = vld [vmem:[%s8 + $0x10] sm:$0xff]
        %v1943 = vld [vmem:[%s8 + $0x18] sm:$0xff]
        %v1944 = vld [vmem:[%s8 + $0x20] sm:$0xff]
        %v1945 = vld [vmem:[%s8 + $0x28] sm:$0xff]
        %v1946 = vld [vmem:[%s8 + $0x30] sm:$0xff]
        %v1947 = vld [vmem:[%s8 + $0x38] sm:$0xff]
        %v1948 = vld [vmem:[%s8 + $0x40] sm:$0xff]
        %v1949 = vld [vmem:[%s8 + $0x48] sm:$0xff]
        %v1950 = vld [vmem:[%s8 + $0x50] sm:$0xff]
        %v1951 = vld [vmem:[%s8 + $0x58] sm:$0xff]
        %v1952 = vld [vmem:[%s8 + $0x60] sm:$0xff]
        %v1953 = vld [vmem:[%s8 + $0x68] sm:$0xff]
        %v1954 = vld [vmem:[%s8 + $0x70] sm:$0xff]
        %v1955 = vld [vmem:[%s8 + $0x78] sm:$0xff]
        %v1956 = vld [vmem:[%s9] sm:$0x1]
        %v1958 = vlaneseq
        %v1959 = vshrl.u32 %v1958, 7
        %v1960 = vsub.s32 0, %v1959
        %v1961 = vrot.slane %v1956, %v1960
        %1963 = vmatprep.subr.mxu0 0.0
        %1964 = vmatpush1.msra.mxu0 %v1955
        %1965 = vmatprep.subr.mxu0 0.0
        %1966 = vmatpush1.msra.mxu0 %v1954
        %1967 = vmatprep.subr.mxu0 0.0
        %1968 = vmatpush1.msra.mxu0 %v1953
        %1969 = vmatprep.subr.mxu0 0.0
        %1970 = vmatpush1.msra.mxu0 %v1952
        %1971 = vmatprep.subr.mxu0 0.0
        %1972 = vmatpush1.msra.mxu0 %v1951
        %1973 = vmatprep.subr.mxu0 0.0
        %1974 = vmatpush1.msra.mxu0 %v1950
        %1975 = vmatprep.subr.mxu0 0.0
        %1976 = vmatpush1.msra.mxu0 %v1949
        %1977 = vmatprep.subr.mxu0 0.0
        %1978 = vmatpush1.msra.mxu0 %v1948
        %1979 = vmatprep.subr.mxu0 0.0
        %1980 = vmatpush1.msra.mxu0 %v1947
        %1981 = vmatprep.subr.mxu0 0.0
        %1982 = vmatpush1.msra.mxu0 %v1946
        %1983 = vmatprep.subr.mxu0 0.0
        %1984 = vmatpush1.msra.mxu0 %v1945
        %1985 = vmatprep.subr.mxu0 0.0
        %1986 = vmatpush1.msra.mxu0 %v1944
        %1987 = vmatprep.subr.mxu0 0.0
        %1988 = vmatpush1.msra.mxu0 %v1943
        %1989 = vmatprep.subr.mxu0 0.0
        %1990 = vmatpush1.msra.mxu0 %v1942
        %1991 = vmatprep.subr.mxu0 0.0
        %1992 = vmatpush1.msra.mxu0 %v1941
        %1993 = vmatprep.subr.mxu0 0.0
        %1994 = vmatpush1.msra.mxu0 %v1940
        %1995 = vmatprep.subr.mxu0 0.0
        %1996 = vmatpush2.msra.mxu0 0.0
        %1997 = vmatprep.subr.mxu0 0.0
        %1998 = vmatpush2.msra.mxu0 0.0
        %1999 = vmatprep.subr.mxu0 0.0
        %2000 = vmatpush2.msra.mxu0 0.0
        %2001 = vmatprep.subr.mxu0 0.0
        %2002 = vmatpush2.msra.mxu0 0.0
        %2003 = vmatprep.subr.mxu0 0.0
        %2004 = vmatpush2.msra.mxu0 0.0
        %2005 = vmatprep.subr.mxu0 0.0
        %2006 = vmatpush2.msra.mxu0 0.0
        %2007 = vmatprep.subr.mxu0 0.0
        %2008 = vmatpush2.msra.mxu0 0.0
        %2009 = vmatprep.subr.mxu0 0.0
        %2010 = vmatpush2.msra.mxu0 0.0
        %2011 = vmatprep.subr.mxu0 0.0
        %2012 = vmatpush2.msra.mxu0 0.0
        %2013 = vmatprep.subr.mxu0 0.0
        %2014 = vmatpush2.msra.mxu0 0.0
        %2015 = vmatprep.subr.mxu0 0.0
        %2016 = vmatpush2.msra.mxu0 0.0
        %2017 = vmatprep.subr.mxu0 0.0
        %2018 = vmatpush2.msra.mxu0 0.0
        %2019 = vmatprep.subr.mxu0 0.0
        %2020 = vmatpush2.msra.mxu0 0.0
        %2021 = vmatprep.subr.mxu0 0.0
        %2022 = vmatpush2.msra.mxu0 0.0
        %2023 = vmatprep.subr.mxu0 0.0
        %2024 = vmatpush2.msra.mxu0 0.0
        %2025 = vmatprep.subr.mxu0 0.0
        %2026 = vmatpush2.msra.mxu0 0.0
        %2027 = vmatprep.mubr.f32.mxu0 0.0
        %2028 = vmatmul.mubr.f32.gmra.mxu0 %v1938
        %v2029 = vpop.f32.mrf.mxu0
        %v2030 = vadd.f32 %v1961, %v2029
        %v2031 = vpop.f32.mrf.mxu0
        %2032 = vmatprep.mubr.f32.mxu0 0.0
        %2033 = vmatmul.mubr.f32.gmra.mxu0 %v1939
        %v2034 = vpop.f32.mrf.mxu0
        %v2035 = vadd.f32 %v1961, %v2034
        %v2036 = vpop.f32.mrf.mxu0
        %2037 = vdwg.mxu0
        %v2038 = vmax.f32 %v2030, 0.0
        %v2039 = vmax.f32 %v2035, 0.0
        %v2040 = vld [vmem:[#allocation2] sm:$0xff]
        %v2041 = vld [vmem:[#allocation2 + $0x8] sm:$0xff]
        %v2042 = vld [vmem:[#allocation2 + $0x10] sm:$0xff]
        %v2043 = vld [vmem:[#allocation2 + $0x18] sm:$0xff]
        %v2044 = vld [vmem:[#allocation2 + $0x20] sm:$0xff]
        %v2045 = vld [vmem:[#allocation2 + $0x28] sm:$0xff]
        %v2046 = vld [vmem:[#allocation2 + $0x30] sm:$0xff]
        %v2047 = vld [vmem:[#allocation2 + $0x38] sm:$0xff]
        %v2048 = vld [vmem:[#allocation2 + $0x40] sm:$0xff]
        %v2049 = vld [vmem:[#allocation2 + $0x48] sm:$0xff]
        %v2050 = vld [vmem:[#allocation2 + $0x50] sm:$0xff]
        %v2051 = vld [vmem:[#allocation2 + $0x58] sm:$0xff]
        %v2052 = vld [vmem:[#allocation2 + $0x60] sm:$0xff]
        %v2053 = vld [vmem:[#allocation2 + $0x68] sm:$0xff]
        %v2054 = vld [vmem:[#allocation2 + $0x70] sm:$0xff]
        %v2055 = vld [vmem:[#allocation2 + $0x78] sm:$0xff]
        %v2056 = vld [vmem:[%s11] sm:$0x1]
        %v2058 = vlaneseq
        %v2059 = vshrl.u32 %v2058, 7
        %v2060 = vsub.s32 0, %v2059
        %v2061 = vrot.slane %v2056, %v2060
        %2063 = vmatprep.subr.mxu0 0.0
        %2064 = vmatpush1.msra.mxu0 %v2055
        %2065 = vmatprep.subr.mxu0 0.0
        %2066 = vmatpush1.msra.mxu0 %v2054
        %2067 = vmatprep.subr.mxu0 0.0
        %2068 = vmatpush1.msra.mxu0 %v2053
        %2069 = vmatprep.subr.mxu0 0.0
        %2070 = vmatpush1.msra.mxu0 %v2052
        %2071 = vmatprep.subr.mxu0 0.0
        %2072 = vmatpush1.msra.mxu0 %v2051
        %2073 = vmatprep.subr.mxu0 0.0
        %2074 = vmatpush1.msra.mxu0 %v2050
        %2075 = vmatprep.subr.mxu0 0.0
        %2076 = vmatpush1.msra.mxu0 %v2049
        %2077 = vmatprep.subr.mxu0 0.0
        %2078 = vmatpush1.msra.mxu0 %v2048
        %2079 = vmatprep.subr.mxu0 0.0
        %2080 = vmatpush1.msra.mxu0 %v2047
        %2081 = vmatprep.subr.mxu0 0.0
        %2082 = vmatpush1.msra.mxu0 %v2046
        %2083 = vmatprep.subr.mxu0 0.0
        %2084 = vmatpush1.msra.mxu0 %v2045
        %2085 = vmatprep.subr.mxu0 0.0
        %2086 = vmatpush1.msra.mxu0 %v2044
        %2087 = vmatprep.subr.mxu0 0.0
        %2088 = vmatpush1.msra.mxu0 %v2043
        %2089 = vmatprep.subr.mxu0 0.0
        %2090 = vmatpush1.msra.mxu0 %v2042
        %2091 = vmatprep.subr.mxu0 0.0
        %2092 = vmatpush1.msra.mxu0 %v2041
        %2093 = vmatprep.subr.mxu0 0.0
        %2094 = vmatpush1.msra.mxu0 %v2040
        %2095 = vmatprep.subr.mxu0 0.0
        %2096 = vmatpush2.msra.mxu0 0.0
        %2097 = vmatprep.subr.mxu0 0.0
        %2098 = vmatpush2.msra.mxu0 0.0
        %2099 = vmatprep.subr.mxu0 0.0
        %2100 = vmatpush2.msra.mxu0 0.0
        %2101 = vmatprep.subr.mxu0 0.0
        %2102 = vmatpush2.msra.mxu0 0.0
        %2103 = vmatprep.subr.mxu0 0.0
        %2104 = vmatpush2.msra.mxu0 0.0
        %2105 = vmatprep.subr.mxu0 0.0
        %2106 = vmatpush2.msra.mxu0 0.0
        %2107 = vmatprep.subr.mxu0 0.0
        %2108 = vmatpush2.msra.mxu0 0.0
        %2109 = vmatprep.subr.mxu0 0.0
        %2110 = vmatpush2.msra.mxu0 0.0
        %2111 = vmatprep.subr.mxu0 0.0
        %2112 = vmatpush2.msra.mxu0 0.0
        %2113 = vmatprep.subr.mxu0 0.0
        %2114 = vmatpush2.msra.mxu0 0.0
        %2115 = vmatprep.subr.mxu0 0.0
        %2116 = vmatpush2.msra.mxu0 0.0
        %2117 = vmatprep.subr.mxu0 0.0
        %2118 = vmatpush2.msra.mxu0 0.0
        %2119 = vmatprep.subr.mxu0 0.0
        %2120 = vmatpush2.msra.mxu0 0.0
        %2121 = vmatprep.subr.mxu0 0.0
        %2122 = vmatpush2.msra.mxu0 0.0
        %2123 = vmatprep.subr.mxu0 0.0
        %2124 = vmatpush2.msra.mxu0 0.0
        %2125 = vmatprep.subr.mxu0 0.0
        %2126 = vmatpush2.msra.mxu0 0.0
        %2127 = vmatprep.mubr.f32.mxu0 0.0
        %2128 = vmatmul.mubr.f32.gmra.mxu0 %v2038
        %v2129 = vpop.f32.mrf.mxu0
        %v2130 = vadd.f32 %v2061, %v2129
        %v2131 = vpop.f32.mrf.mxu0
        %2132 = vmatprep.mubr.f32.mxu0 0.0
        %2133 = vmatmul.mubr.f32.gmra.mxu0 %v2039
        %v2134 = vpop.f32.mrf.mxu0
        %v2135 = vadd.f32 %v2061, %v2134
        %v2136 = vpop.f32.mrf.mxu0
        %2137 = vdwg.mxu0
        %v2138 = vadd.f32 %v1938, %v2130
        %v2139 = vadd.f32 %v1939, %v2135
        %v2140 = vld [vmem:[%s12] sm:$0x1]
        %v2141 = vld [vmem:[%s13] sm:$0x1]
        %2142 = vadd.xlane.f32.xlu0 %v2138
        %v2143 = vpop.xlane.xlu0 %2142
        %2144 = vadd.xlane.f32.xlu0 %v2139
        %v2145 = vpop.xlane.xlu0 %2144
        %v2146 = vmul.f32 %v2143, %v1905
        %v2147 = vmul.f32 %v2145, %v1905
        %v2148 = vsub.f32 %v2138, %v2146
        %v2149 = vsub.f32 %v2139, %v2147
        %v2150 = vmul.f32 %v2148, %v2148
        %v2151 = vmul.f32 %v2149, %v2149
        %2152 = vadd.xlane.f32.xlu0 %v2150
        %v2153 = vpop.xlane.xlu0 %2152
        %2154 = vadd.xlane.f32.xlu0 %v2151
        %v2155 = vpop.xlane.xlu0 %2154
        %v2156 = vmul.f32 %v2153, %v1905
        %v2157 = vmul.f32 %v2155, %v1905
        %v2158 = vadd.f32 %v2156, 1e-05
        %v2159 = vadd.f32 %v2157, 1e-05
        %v2160 = vrsqrt.pop %v2158
        %v2161 = vrsqrt.pop %v2159
        %v2162 = vmul.f32 %v2148, %v2160
        %v2163 = vmul.f32 %v2149, %v2161
        %v2165 = vlaneseq
        %v2166 = vshrl.u32 %v2165, 7
        %v2167 = vsub.s32 0, %v2166
        %v2168 = vrot.slane %v2140, %v2167
        %v2170 = vmul.f32 %v2162, %v2168
        %v2171 = vmul.f32 %v2163, %v2168
        %v2173 = vlaneseq
        %v2174 = vshrl.u32 %v2173, 7
        %v2175 = vsub.s32 0, %v2174
        %v2176 = vrot.slane %v2141, %v2175
        %v2178 = vadd.f32 %v2170, %v2176
        %v2179 = vadd.f32 %v2171, %v2176
        %2180 = vst [vmem:[%s502] sm:$0xff] %v2178
        %2181 = vst [vmem:[%s502 + $0x8] sm:$0xff] %v2179
        %p2182 = scmp.lt.s32.totalorder %s26, 1
        %s2183 = scalar_select %p2182, %s26, 1
        %s2184 = smul.addr %s2183, 2
        %s2185 = smul.addr %s2184, 8
        %s2186 = scalar_lea.vmem %s14, %s2185
        // Predicated region
        $region81: #{transformer_xl_forward.3} parent=75 // pred_check
          %p2187 = pneg %p348
        $region82: #{transformer_xl_forward.3} parent=75 // pred_check_branch
          %2189 = sbr.rel (%p2187) target = $region84
        $region83: #{transformer_xl_forward.3} parent=75 // pred_region
          _
        $region84: #{transformer_xl_forward.3} parent=75 // pred_fallthru
          _
      $region76: #{transformer_xl_forward.3} parent=5 // pred_fallthru
        _
      %p2190 = scmp.le.s32.totalorder 2, %s21
      // Predicated region
      $region85: #{transformer_xl_forward.3} parent=5 // pred_check
        %p2191 = pneg %p2190
      $region86: #{transformer_xl_forward.3} parent=5 // pred_check_branch
        %2193 = sbr.rel (%p2191) target = $region88
      $region87: #{transformer_xl_forward.3} parent=5 // pred_region
        %s2194 = ssub.s32 %s21, 2
        // Predicated region
        $region89: #{transformer_xl_forward.3} parent=87 // pred_check
          %p2195 = pneg %p354
        $region90: #{transformer_xl_forward.3} parent=87 // pred_check_branch
          %2197 = sbr.rel (%p2195) target = $region92
        $region91: #{transformer_xl_forward.3} parent=87 // pred_region
          %p2198 = scmp.lt.s32.totalorder %s27, 1
          %s2199 = scalar_select %p2198, %s27, 1
          %s2200 = smul.addr %s2199, 2
          %s2201 = smul.addr %s2200, 8
          %s2202 = scalar_lea.vmem %s14, %s2201
        $region92: #{transformer_xl_forward.3} parent=87 // pred_fallthru
          _
      $region88: #{transformer_xl_forward.3} parent=5 // pred_fallthru
        _
    $region6: #{transformer_xl_forward.3} parent=1 // loop_footer
      %s25 = sadd.s32 1, %s21
    $region7: #{transformer_xl_forward.3} parent=1 // loop_footer_branch
      %20 = sbr.rel target = $region3
    $region8: #{transformer_xl_forward.3} parent=1 // loop_exit
      _
    %2203 = vsyncpa [#allocation3], 1
    %s2204 = scalar_lea.sflag [#allocation3], 1
    %2205 = vsyncpa %s2204, 1

</llo_original>
